<compile_context>
chip_gen: v5e
topology: v5e:2x2
jax: 0.10.0
libtpu: 0.0.40
codegen_flags: <defaults>
</compile_context>

<pallas_src>
import jax
import jax.numpy as jnp
from jax import lax
from jax.experimental import pallas as pl
from jax.experimental.pallas import tpu as pltpu

HIDDEN_SIZE = 2
INPUT_SIZE = 1
NUM_CLASSES = 1
NUM_LAYERS = 1
SEQ_LENGTH = 30
FC1_OUT = 10  # nn.Linear(hidden_size, 10) -> length of the second sequence

# ---- packed parameter slab layout (rows of a (16, 16) f32 array) ----
R_WIH1 = 0    # 1 row : Wih1^T row          (4H cols)
R_WHH1 = 1    # 2 rows: Whh1^T              (4H cols)
R_B1 = 3      # 1 row : b_ih1 + b_hh1       (4H cols)
R_WFC1 = 4    # 2 rows: Wfc1^T              (10 cols)
R_BFC1 = 6    # 1 row : b_fc1               (10 cols)
R_WIH2 = 7    # 1 row : Wih2^T row          (4H cols)
R_WHH2 = 8    # 2 rows: Whh2^T              (4H cols)
R_B2 = 10     # 1 row : b_ih2 + b_hh2       (4H cols)
R_WFC2 = 11   # 2 rows: Wfc2^T              (1 col)
R_BFC2 = 13   # 1 row : b_fc2               (1 col)
SLAB_ROWS = 16
SLAB_COLS = 16


def lstm_forward_kernel(x_ref, slab_ref, out_ref):
    """x_ref: (BB, T) f32; slab_ref: (16, 16) packed params; out_ref: (BB, 1)."""
    BB, T = x_ref.shape
    H = HIDDEN_SIZE
    G = 4 * H

    slab = slab_ref[...]

    def bcast(r, n):
        # sublane broadcast of one slab row to (BB, n); hoisted (JAX does not
        # CSE broadcast_in_dim, so these must NOT be re-emitted inside loops).
        return jnp.broadcast_to(slab[r:r + 1, 0:n], (BB, n))

    # ---- unpack + hoist all loop-invariant broadcasts (~14 vregs at BB<=8) ----
    wih1_b = bcast(R_WIH1, G)
    b1_b = bcast(R_B1, G)
    whh1_b = [bcast(R_WHH1 + r, G) for r in range(H)]
    wfc1_b = [bcast(R_WFC1 + r, FC1_OUT) for r in range(H)]
    bfc1_b = bcast(R_BFC1, FC1_OUT)
    wih2_b = bcast(R_WIH2, G)
    b2_b = bcast(R_B2, G)
    whh2_b = [bcast(R_WHH2 + r, G) for r in range(H)]
    wfc2_b = [bcast(R_WFC2 + r, NUM_CLASSES) for r in range(H)]
    bfc2_b = bcast(R_BFC2, NUM_CLASSES)

    def run_lstm(n_steps, gx_fn, whh_b):
        """Fully-unrolled LSTM recurrence; returns the final hidden state.

        Serial chain per step (option (a) of the review):
          gates = gx_t + sum_r splat(tanh_c[:,r]) * (o_prev[:,r] * whh_b[r])
        where (o_prev[:,r] * whh_b[r]) is computed as soon as the previous
        step's sigmoid pops, i.e. off the tanh(c) EUP latency, trimming one
        dependent vmul from the 40-step chain.  h is only materialized after
        the final step.
        """
        c = jnp.zeros((BB, H), jnp.float32)
        tanh_c = None
        a = None          # a[r] = o[:, r:r+1] * whh_b[r]   (off-chain)
        o = None
        for t in range(n_steps):                      # fully unrolled
            gates = gx_fn(t)                          # carry-independent
            if t > 0:
                for r in range(H):
                    gates = gates + tanh_c[:, r:r + 1] * a[r]
            # Fused activations: one sigmoid + one tanh over the whole (BB,4H)
            # tile (2 EUP pushes), then static lane slices in i, f, g, o order.
            sig = jax.nn.sigmoid(gates)
            th = jnp.tanh(gates)
            i = sig[:, 0 * H:1 * H]
            f = sig[:, 1 * H:2 * H]
            g = th[:, 2 * H:3 * H]
            o = sig[:, 3 * H:4 * H]
            c = f * c + i * g
            if t + 1 < n_steps:
                # pre-multiply o into the recurrent weight rows while tanh(c)
                # is still in flight on the EUP (off the serial chain)
                a = [o[:, r:r + 1] * whh_b[r] for r in range(H)]
            tanh_c = jnp.tanh(c)
        return o * tanh_c                             # final h, (BB, H)

    # ---- lstm1 over the (BB, T) input (T = 30) ----
    x = x_ref[...]                                    # (BB, T), one vreg

    def gx1(t):
        # x_t splat * Wih1 row + bias: carry-independent, off the serial chain
        return x[:, t:t + 1] * wih1_b + b1_b          # (BB, G)

    h1 = run_lstm(T, gx1, whh1_b)

    # ---- fc1 on the VPU: h1 @ Wfc1^T + b ----
    out1 = bfc1_b
    for r in range(H):
        out1 = out1 + h1[:, r:r + 1] * wfc1_b[r]      # (BB, 10)

    # ---- lstm2 over the length-10 scalar sequence ----
    def gx2(t):
        return out1[:, t:t + 1] * wih2_b + b2_b       # (BB, G), static lane slice

    h2 = run_lstm(FC1_OUT, gx2, whh2_b)

    # ---- fc2 on the VPU: h2 @ Wfc2^T + b ----
    out2 = bfc2_b
    for r in range(H):
        out2 = out2 + h2[:, r:r + 1] * wfc2_b[r]      # (BB, 1)
    out_ref[...] = out2


def _batch_block(B):
    """Batch block: full batch for small B; multiple-of-8 blocks for large B so
    the grid can be sharded across both TensorCores on v7x."""
    if B >= 16 and B % 8 == 0:
        half = B // 2
        return half if half % 8 == 0 else 8
    return B


def lstm_forward(x, slab):
    """x: (B, T, 1) float32, slab: (16, 16) packed params -> (B, 1) float32."""
    B, T, I = x.shape
    assert I == INPUT_SIZE
    # Drop the trailing unit dim (metadata-only reshape, no copy / no transpose):
    # the kernel consumes x as a lane-dense (B, T) tile.
    x2d = x.reshape(B, T)
    bb = _batch_block(B)
    grid = (B // bb,)
    return pl.pallas_call(
        lstm_forward_kernel,
        out_shape=jax.ShapeDtypeStruct((B, NUM_CLASSES), jnp.float32),
        grid=grid,
        in_specs=[pl.BlockSpec((bb, T), lambda i: (i, 0)),
                  pl.BlockSpec((SLAB_ROWS, SLAB_COLS), lambda i: (0, 0))],
        out_specs=pl.BlockSpec((bb, NUM_CLASSES), lambda i: (i, 0)),
        compiler_params=pltpu.CompilerParams(
            dimension_semantics=("parallel",)),
    )(x2d, slab)


def init_params(key):
    """Deterministic init mimicking PyTorch uniform(-1/sqrt(H), 1/sqrt(H))."""
    H, I = HIDDEN_SIZE, INPUT_SIZE
    bound = 1.0 / jnp.sqrt(jnp.float32(H))
    ks = jax.random.split(key, 12)

    def u(k, shape):
        return jax.random.uniform(k, shape, jnp.float32, -bound, bound)

    w_ih1 = u(ks[0], (4 * H, I))
    w_hh1 = u(ks[1], (4 * H, H))
    b_ih1 = u(ks[2], (4 * H,))
    b_hh1 = u(ks[3], (4 * H,))
    w_fc1 = u(ks[4], (FC1_OUT, H))
    b_fc1 = u(ks[5], (FC1_OUT,))
    w_ih2 = u(ks[6], (4 * H, I))
    w_hh2 = u(ks[7], (4 * H, H))
    b_ih2 = u(ks[8], (4 * H,))
    b_hh2 = u(ks[9], (4 * H,))
    w_fc2 = u(ks[10], (NUM_CLASSES, H))
    b_fc2 = u(ks[11], (NUM_CLASSES,))

    return {
        "wih1_t": w_ih1.T, "whh1_t": w_hh1.T,
        "b1": (b_ih1 + b_hh1).reshape(1, 4 * H),
        "wfc1_t": w_fc1.T, "bfc1": b_fc1.reshape(1, FC1_OUT),
        "wih2_t": w_ih2.T, "whh2_t": w_hh2.T,
        "b2": (b_ih2 + b_hh2).reshape(1, 4 * H),
        "wfc2_t": w_fc2.T, "bfc2": b_fc2.reshape(1, NUM_CLASSES),
    }


def pack_params(params):
    """Pack the 10 tiny weight/bias tensors into one (16, 16) f32 slab
    so the kernel needs only 2 input DMAs (x + slab)."""
    H, G = HIDDEN_SIZE, 4 * HIDDEN_SIZE
    slab = jnp.zeros((SLAB_ROWS, SLAB_COLS), jnp.float32)
    slab = slab.at[R_WIH1, 0:G].set(params["wih1_t"][0])
    slab = slab.at[R_WHH1:R_WHH1 + H, 0:G].set(params["whh1_t"])
    slab = slab.at[R_B1, 0:G].set(params["b1"][0])
    slab = slab.at[R_WFC1:R_WFC1 + H, 0:FC1_OUT].set(params["wfc1_t"])
    slab = slab.at[R_BFC1, 0:FC1_OUT].set(params["bfc1"][0])
    slab = slab.at[R_WIH2, 0:G].set(params["wih2_t"][0])
    slab = slab.at[R_WHH2:R_WHH2 + H, 0:G].set(params["whh2_t"])
    slab = slab.at[R_B2, 0:G].set(params["b2"][0])
    slab = slab.at[R_WFC2:R_WFC2 + H, 0:1].set(params["wfc2_t"])
    slab = slab.at[R_BFC2, 0:1].set(params["bfc2"][0])
    return slab


def reference_forward(x, params):
    """Pure-JAX reference reproducing the PyTorch forward semantics."""
    B = x.shape[0]
    H = HIDDEN_SIZE

    def cell(xt, h, c, w_ih_t, w_hh_t, b):
        gates = xt @ w_ih_t + h @ w_hh_t + b                  # (B, 4H)
        i = jax.nn.sigmoid(gates[:, 0 * H:1 * H])
        f = jax.nn.sigmoid(gates[:, 1 * H:2 * H])
        g = jnp.tanh(gates[:, 2 * H:3 * H])
        o = jax.nn.sigmoid(gates[:, 3 * H:4 * H])
        c_new = f * c + i * g
        return o * jnp.tanh(c_new), c_new

    def run_lstm(seq_tbi, w_ih_t, w_hh_t, b):
        h = jnp.zeros((B, H), jnp.float32)
        c = jnp.zeros((B, H), jnp.float32)

        def step(carry, xt):
            h, c = carry
            h, c = cell(xt, h, c, w_ih_t, w_hh_t, b)
            return (h, c), None

        (h, _), _ = lax.scan(step, (h, c), seq_tbi)
        return h

    h1 = run_lstm(jnp.transpose(x, (1, 0, 2)),
                  params["wih1_t"], params["whh1_t"], params["b1"])
    out1 = h1 @ params["wfc1_t"] + params["bfc1"]                  # (B, 10)
    seq2 = jnp.transpose(out1.reshape(B, FC1_OUT, 1), (1, 0, 2))   # (10, B, 1)
    h2 = run_lstm(seq2, params["wih2_t"], params["whh2_t"], params["b2"])
    return h2 @ params["wfc2_t"] + params["bfc2"]                  # (B, 1)


if __name__ == "__main__":
    key = jax.random.PRNGKey(0)
    k_x, k_p = jax.random.split(key)

    batch = 4
    x = jax.random.normal(k_x, (batch, SEQ_LENGTH, INPUT_SIZE), jnp.float32)
    params = init_params(k_p)
    slab = pack_params(params)

    fwd = jax.jit(lstm_forward)
    out = jax.block_until_ready(fwd(x, slab))

    ref = jax.block_until_ready(reference_forward(x, params))
    assert out.shape == (batch, NUM_CLASSES)
    assert jnp.allclose(out, ref, rtol=1e-4, atol=1e-5), (out, ref)

    print("KERNEL_OK")
</pallas_src>

<mosaic_0001>
module attributes {stable_mosaic.version = 11 : i64} {
  func.func @lstm_forward_kernel(%arg0: i32, %arg1: memref<4x30xf32, #tpu.memory_space<vmem>>, %arg2: memref<16x16xf32, #tpu.memory_space<vmem>>, %arg3: memref<4x1xf32, #tpu.memory_space<vmem>>) attributes {dimension_semantics = [#tpu.dimension_semantics<parallel>], iteration_bounds = array<i64: 1>, scalar_prefetch = 0 : i64, scratch_operands = 0 : i64, tpu.core_type = #tpu.core_type<tc>, window_params = [{transform_indices = @transform_0, window_bounds = array<i64: 4, 30>}, {pipeline_mode = #tpu.pipeline_mode<synchronous>, transform_indices = @transform_1, window_bounds = array<i64: 16, 16>}, {transform_indices = @transform_2, window_bounds = array<i64: 4, 1>}]} {
    %c0 = arith.constant 0 : index
    %c0_0 = arith.constant 0 : index
    %0 = vector.load %arg2[%c0, %c0_0] : memref<16x16xf32, #tpu.memory_space<vmem>>, vector<16x16xf32>
    %1 = vector.extract_strided_slice %0 {offsets = [0, 0], sizes = [1, 8], strides = [1, 1]} : vector<16x16xf32> to vector<1x8xf32>
    %2 = vector.shape_cast %1 : vector<1x8xf32> to vector<1x8xf32>
    %3 = vector.broadcast %2 : vector<1x8xf32> to vector<4x8xf32>
    %4 = vector.extract_strided_slice %0 {offsets = [3, 0], sizes = [1, 8], strides = [1, 1]} : vector<16x16xf32> to vector<1x8xf32>
    %5 = vector.shape_cast %4 : vector<1x8xf32> to vector<1x8xf32>
    %6 = vector.broadcast %5 : vector<1x8xf32> to vector<4x8xf32>
    %7 = vector.extract_strided_slice %0 {offsets = [1, 0], sizes = [1, 8], strides = [1, 1]} : vector<16x16xf32> to vector<1x8xf32>
    %8 = vector.shape_cast %7 : vector<1x8xf32> to vector<1x8xf32>
    %9 = vector.broadcast %8 : vector<1x8xf32> to vector<4x8xf32>
    %10 = vector.extract_strided_slice %0 {offsets = [2, 0], sizes = [1, 8], strides = [1, 1]} : vector<16x16xf32> to vector<1x8xf32>
    %11 = vector.shape_cast %10 : vector<1x8xf32> to vector<1x8xf32>
    %12 = vector.broadcast %11 : vector<1x8xf32> to vector<4x8xf32>
    %13 = vector.extract_strided_slice %0 {offsets = [4, 0], sizes = [1, 10], strides = [1, 1]} : vector<16x16xf32> to vector<1x10xf32>
    %14 = vector.shape_cast %13 : vector<1x10xf32> to vector<1x10xf32>
    %15 = vector.broadcast %14 : vector<1x10xf32> to vector<4x10xf32>
    %16 = vector.extract_strided_slice %0 {offsets = [5, 0], sizes = [1, 10], strides = [1, 1]} : vector<16x16xf32> to vector<1x10xf32>
    %17 = vector.shape_cast %16 : vector<1x10xf32> to vector<1x10xf32>
    %18 = vector.broadcast %17 : vector<1x10xf32> to vector<4x10xf32>
    %19 = vector.extract_strided_slice %0 {offsets = [6, 0], sizes = [1, 10], strides = [1, 1]} : vector<16x16xf32> to vector<1x10xf32>
    %20 = vector.shape_cast %19 : vector<1x10xf32> to vector<1x10xf32>
    %21 = vector.broadcast %20 : vector<1x10xf32> to vector<4x10xf32>
    %22 = vector.extract_strided_slice %0 {offsets = [7, 0], sizes = [1, 8], strides = [1, 1]} : vector<16x16xf32> to vector<1x8xf32>
    %23 = vector.shape_cast %22 : vector<1x8xf32> to vector<1x8xf32>
    %24 = vector.broadcast %23 : vector<1x8xf32> to vector<4x8xf32>
    %25 = vector.extract_strided_slice %0 {offsets = [10, 0], sizes = [1, 8], strides = [1, 1]} : vector<16x16xf32> to vector<1x8xf32>
    %26 = vector.shape_cast %25 : vector<1x8xf32> to vector<1x8xf32>
    %27 = vector.broadcast %26 : vector<1x8xf32> to vector<4x8xf32>
    %28 = vector.extract_strided_slice %0 {offsets = [8, 0], sizes = [1, 8], strides = [1, 1]} : vector<16x16xf32> to vector<1x8xf32>
    %29 = vector.shape_cast %28 : vector<1x8xf32> to vector<1x8xf32>
    %30 = vector.broadcast %29 : vector<1x8xf32> to vector<4x8xf32>
    %31 = vector.extract_strided_slice %0 {offsets = [9, 0], sizes = [1, 8], strides = [1, 1]} : vector<16x16xf32> to vector<1x8xf32>
    %32 = vector.shape_cast %31 : vector<1x8xf32> to vector<1x8xf32>
    %33 = vector.broadcast %32 : vector<1x8xf32> to vector<4x8xf32>
    %34 = vector.extract_strided_slice %0 {offsets = [11, 0], sizes = [1, 1], strides = [1, 1]} : vector<16x16xf32> to vector<1x1xf32>
    %35 = vector.shape_cast %34 : vector<1x1xf32> to vector<1x1xf32>
    %36 = vector.broadcast %35 : vector<1x1xf32> to vector<4x1xf32>
    %37 = vector.extract_strided_slice %0 {offsets = [12, 0], sizes = [1, 1], strides = [1, 1]} : vector<16x16xf32> to vector<1x1xf32>
    %38 = vector.shape_cast %37 : vector<1x1xf32> to vector<1x1xf32>
    %39 = vector.broadcast %38 : vector<1x1xf32> to vector<4x1xf32>
    %40 = vector.extract_strided_slice %0 {offsets = [13, 0], sizes = [1, 1], strides = [1, 1]} : vector<16x16xf32> to vector<1x1xf32>
    %41 = vector.shape_cast %40 : vector<1x1xf32> to vector<1x1xf32>
    %42 = vector.broadcast %41 : vector<1x1xf32> to vector<4x1xf32>
    %c0_1 = arith.constant 0 : index
    %c0_2 = arith.constant 0 : index
    %43 = vector.load %arg1[%c0_1, %c0_2] : memref<4x30xf32, #tpu.memory_space<vmem>>, vector<4x30xf32>
    %cst = arith.constant 0.000000e+00 : f32
    %44 = vector.broadcast %cst : f32 to vector<4x2xf32>
    %45 = vector.extract_strided_slice %43 {offsets = [0, 0], sizes = [4, 1], strides = [1, 1]} : vector<4x30xf32> to vector<4x1xf32>
    %46 = vector.broadcast %45 : vector<4x1xf32> to vector<4x8xf32>
    %47 = arith.mulf %46, %3 : vector<4x8xf32>
    %48 = arith.addf %47, %6 : vector<4x8xf32>
    %49 = arith.negf %48 : vector<4x8xf32>
    %50 = math.exp %49 : vector<4x8xf32>
    %cst_3 = arith.constant 1.000000e+00 : f32
    %51 = vector.broadcast %cst_3 : f32 to vector<4x8xf32>
    %52 = arith.addf %51, %50 : vector<4x8xf32>
    %53 = arith.divf %51, %52 : vector<4x8xf32>
    %54 = math.tanh %48 : vector<4x8xf32>
    %55 = vector.extract_strided_slice %53 {offsets = [0, 0], sizes = [4, 2], strides = [1, 1]} : vector<4x8xf32> to vector<4x2xf32>
    %56 = vector.extract_strided_slice %53 {offsets = [0, 2], sizes = [4, 2], strides = [1, 1]} : vector<4x8xf32> to vector<4x2xf32>
    %57 = vector.extract_strided_slice %54 {offsets = [0, 4], sizes = [4, 2], strides = [1, 1]} : vector<4x8xf32> to vector<4x2xf32>
    %58 = vector.extract_strided_slice %53 {offsets = [0, 6], sizes = [4, 2], strides = [1, 1]} : vector<4x8xf32> to vector<4x2xf32>
    %59 = arith.mulf %56, %44 : vector<4x2xf32>
    %60 = arith.mulf %55, %57 : vector<4x2xf32>
    %61 = arith.addf %59, %60 : vector<4x2xf32>
    %62 = vector.extract_strided_slice %58 {offsets = [0, 0], sizes = [4, 1], strides = [1, 1]} : vector<4x2xf32> to vector<4x1xf32>
    %63 = vector.broadcast %62 : vector<4x1xf32> to vector<4x8xf32>
    %64 = arith.mulf %63, %9 : vector<4x8xf32>
    %65 = vector.extract_strided_slice %58 {offsets = [0, 1], sizes = [4, 1], strides = [1, 1]} : vector<4x2xf32> to vector<4x1xf32>
    %66 = vector.broadcast %65 : vector<4x1xf32> to vector<4x8xf32>
    %67 = arith.mulf %66, %12 : vector<4x8xf32>
    %68 = math.tanh %61 : vector<4x2xf32>
    %69 = vector.extract_strided_slice %43 {offsets = [0, 1], sizes = [4, 1], strides = [1, 1]} : vector<4x30xf32> to vector<4x1xf32>
    %70 = vector.broadcast %69 : vector<4x1xf32> to vector<4x8xf32>
    %71 = arith.mulf %70, %3 : vector<4x8xf32>
    %72 = arith.addf %71, %6 : vector<4x8xf32>
    %73 = vector.extract_strided_slice %68 {offsets = [0, 0], sizes = [4, 1], strides = [1, 1]} : vector<4x2xf32> to vector<4x1xf32>
    %74 = vector.broadcast %73 : vector<4x1xf32> to vector<4x8xf32>
    %75 = arith.mulf %74, %64 : vector<4x8xf32>
    %76 = arith.addf %72, %75 : vector<4x8xf32>
    %77 = vector.extract_strided_slice %68 {offsets = [0, 1], sizes = [4, 1], strides = [1, 1]} : vector<4x2xf32> to vector<4x1xf32>
    %78 = vector.broadcast %77 : vector<4x1xf32> to vector<4x8xf32>
    %79 = arith.mulf %78, %67 : vector<4x8xf32>
    %80 = arith.addf %76, %79 : vector<4x8xf32>
    %81 = arith.negf %80 : vector<4x8xf32>
    %82 = math.exp %81 : vector<4x8xf32>
    %cst_4 = arith.constant 1.000000e+00 : f32
    %83 = vector.broadcast %cst_4 : f32 to vector<4x8xf32>
    %84 = arith.addf %83, %82 : vector<4x8xf32>
    %85 = arith.divf %83, %84 : vector<4x8xf32>
    %86 = math.tanh %80 : vector<4x8xf32>
    %87 = vector.extract_strided_slice %85 {offsets = [0, 0], sizes = [4, 2], strides = [1, 1]} : vector<4x8xf32> to vector<4x2xf32>
    %88 = vector.extract_strided_slice %85 {offsets = [0, 2], sizes = [4, 2], strides = [1, 1]} : vector<4x8xf32> to vector<4x2xf32>
    %89 = vector.extract_strided_slice %86 {offsets = [0, 4], sizes = [4, 2], strides = [1, 1]} : vector<4x8xf32> to vector<4x2xf32>
    %90 = vector.extract_strided_slice %85 {offsets = [0, 6], sizes = [4, 2], strides = [1, 1]} : vector<4x8xf32> to vector<4x2xf32>
    %91 = arith.mulf %88, %61 : vector<4x2xf32>
    %92 = arith.mulf %87, %89 : vector<4x2xf32>
    %93 = arith.addf %91, %92 : vector<4x2xf32>
    %94 = vector.extract_strided_slice %90 {offsets = [0, 0], sizes = [4, 1], strides = [1, 1]} : vector<4x2xf32> to vector<4x1xf32>
    %95 = vector.broadcast %94 : vector<4x1xf32> to vector<4x8xf32>
    %96 = arith.mulf %95, %9 : vector<4x8xf32>
    %97 = vector.extract_strided_slice %90 {offsets = [0, 1], sizes = [4, 1], strides = [1, 1]} : vector<4x2xf32> to vector<4x1xf32>
    %98 = vector.broadcast %97 : vector<4x1xf32> to vector<4x8xf32>
    %99 = arith.mulf %98, %12 : vector<4x8xf32>
    %100 = math.tanh %93 : vector<4x2xf32>
    %101 = vector.extract_strided_slice %43 {offsets = [0, 2], sizes = [4, 1], strides = [1, 1]} : vector<4x30xf32> to vector<4x1xf32>
    %102 = vector.broadcast %101 : vector<4x1xf32> to vector<4x8xf32>
    %103 = arith.mulf %102, %3 : vector<4x8xf32>
    %104 = arith.addf %103, %6 : vector<4x8xf32>
    %105 = vector.extract_strided_slice %100 {offsets = [0, 0], sizes = [4, 1], strides = [1, 1]} : vector<4x2xf32> to vector<4x1xf32>
    %106 = vector.broadcast %105 : vector<4x1xf32> to vector<4x8xf32>
    %107 = arith.mulf %106, %96 : vector<4x8xf32>
    %108 = arith.addf %104, %107 : vector<4x8xf32>
    %109 = vector.extract_strided_slice %100 {offsets = [0, 1], sizes = [4, 1], strides = [1, 1]} : vector<4x2xf32> to vector<4x1xf32>
    %110 = vector.broadcast %109 : vector<4x1xf32> to vector<4x8xf32>
    %111 = arith.mulf %110, %99 : vector<4x8xf32>
    %112 = arith.addf %108, %111 : vector<4x8xf32>
    %113 = arith.negf %112 : vector<4x8xf32>
    %114 = math.exp %113 : vector<4x8xf32>
    %cst_5 = arith.constant 1.000000e+00 : f32
    %115 = vector.broadcast %cst_5 : f32 to vector<4x8xf32>
    %116 = arith.addf %115, %114 : vector<4x8xf32>
    %117 = arith.divf %115, %116 : vector<4x8xf32>
    %118 = math.tanh %112 : vector<4x8xf32>
    %119 = vector.extract_strided_slice %117 {offsets = [0, 0], sizes = [4, 2], strides = [1, 1]} : vector<4x8xf32> to vector<4x2xf32>
    %120 = vector.extract_strided_slice %117 {offsets = [0, 2], sizes = [4, 2], strides = [1, 1]} : vector<4x8xf32> to vector<4x2xf32>
    %121 = vector.extract_strided_slice %118 {offsets = [0, 4], sizes = [4, 2], strides = [1, 1]} : vector<4x8xf32> to vector<4x2xf32>
    %122 = vector.extract_strided_slice %117 {offsets = [0, 6], sizes = [4, 2], strides = [1, 1]} : vector<4x8xf32> to vector<4x2xf32>
    %123 = arith.mulf %120, %93 : vector<4x2xf32>
    %124 = arith.mulf %119, %121 : vector<4x2xf32>
    %125 = arith.addf %123, %124 : vector<4x2xf32>
    %126 = vector.extract_strided_slice %122 {offsets = [0, 0], sizes = [4, 1], strides = [1, 1]} : vector<4x2xf32> to vector<4x1xf32>
    %127 = vector.broadcast %126 : vector<4x1xf32> to vector<4x8xf32>
    %128 = arith.mulf %127, %9 : vector<4x8xf32>
    %129 = vector.extract_strided_slice %122 {offsets = [0, 1], sizes = [4, 1], strides = [1, 1]} : vector<4x2xf32> to vector<4x1xf32>
    %130 = vector.broadcast %129 : vector<4x1xf32> to vector<4x8xf32>
    %131 = arith.mulf %130, %12 : vector<4x8xf32>
    %132 = math.tanh %125 : vector<4x2xf32>
    %133 = vector.extract_strided_slice %43 {offsets = [0, 3], sizes = [4, 1], strides = [1, 1]} : vector<4x30xf32> to vector<4x1xf32>
    %134 = vector.broadcast %133 : vector<4x1xf32> to vector<4x8xf32>
    %135 = arith.mulf %134, %3 : vector<4x8xf32>
    %136 = arith.addf %135, %6 : vector<4x8xf32>
    %137 = vector.extract_strided_slice %132 {offsets = [0, 0], sizes = [4, 1], strides = [1, 1]} : vector<4x2xf32> to vector<4x1xf32>
    %138 = vector.broadcast %137 : vector<4x1xf32> to vector<4x8xf32>
    %139 = arith.mulf %138, %128 : vector<4x8xf32>
    %140 = arith.addf %136, %139 : vector<4x8xf32>
    %141 = vector.extract_strided_slice %132 {offsets = [0, 1], sizes = [4, 1], strides = [1, 1]} : vector<4x2xf32> to vector<4x1xf32>
    %142 = vector.broadcast %141 : vector<4x1xf32> to vector<4x8xf32>
    %143 = arith.mulf %142, %131 : vector<4x8xf32>
    %144 = arith.addf %140, %143 : vector<4x8xf32>
    %145 = arith.negf %144 : vector<4x8xf32>
    %146 = math.exp %145 : vector<4x8xf32>
    %cst_6 = arith.constant 1.000000e+00 : f32
    %147 = vector.broadcast %cst_6 : f32 to vector<4x8xf32>
    %148 = arith.addf %147, %146 : vector<4x8xf32>
    %149 = arith.divf %147, %148 : vector<4x8xf32>
    %150 = math.tanh %144 : vector<4x8xf32>
    %151 = vector.extract_strided_slice %149 {offsets = [0, 0], sizes = [4, 2], strides = [1, 1]} : vector<4x8xf32> to vector<4x2xf32>
    %152 = vector.extract_strided_slice %149 {offsets = [0, 2], sizes = [4, 2], strides = [1, 1]} : vector<4x8xf32> to vector<4x2xf32>
    %153 = vector.extract_strided_slice %150 {offsets = [0, 4], sizes = [4, 2], strides = [1, 1]} : vector<4x8xf32> to vector<4x2xf32>
    %154 = vector.extract_strided_slice %149 {offsets = [0, 6], sizes = [4, 2], strides = [1, 1]} : vector<4x8xf32> to vector<4x2xf32>
    %155 = arith.mulf %152, %125 : vector<4x2xf32>
    %156 = arith.mulf %151, %153 : vector<4x2xf32>
    %157 = arith.addf %155, %156 : vector<4x2xf32>
    %158 = vector.extract_strided_slice %154 {offsets = [0, 0], sizes = [4, 1], strides = [1, 1]} : vector<4x2xf32> to vector<4x1xf32>
    %159 = vector.broadcast %158 : vector<4x1xf32> to vector<4x8xf32>
    %160 = arith.mulf %159, %9 : vector<4x8xf32>
    %161 = vector.extract_strided_slice %154 {offsets = [0, 1], sizes = [4, 1], strides = [1, 1]} : vector<4x2xf32> to vector<4x1xf32>
    %162 = vector.broadcast %161 : vector<4x1xf32> to vector<4x8xf32>
    %163 = arith.mulf %162, %12 : vector<4x8xf32>
    %164 = math.tanh %157 : vector<4x2xf32>
    %165 = vector.extract_strided_slice %43 {offsets = [0, 4], sizes = [4, 1], strides = [1, 1]} : vector<4x30xf32> to vector<4x1xf32>
    %166 = vector.broadcast %165 : vector<4x1xf32> to vector<4x8xf32>
    %167 = arith.mulf %166, %3 : vector<4x8xf32>
    %168 = arith.addf %167, %6 : vector<4x8xf32>
    %169 = vector.extract_strided_slice %164 {offsets = [0, 0], sizes = [4, 1], strides = [1, 1]} : vector<4x2xf32> to vector<4x1xf32>
    %170 = vector.broadcast %169 : vector<4x1xf32> to vector<4x8xf32>
    %171 = arith.mulf %170, %160 : vector<4x8xf32>
    %172 = arith.addf %168, %171 : vector<4x8xf32>
    %173 = vector.extract_strided_slice %164 {offsets = [0, 1], sizes = [4, 1], strides = [1, 1]} : vector<4x2xf32> to vector<4x1xf32>
    %174 = vector.broadcast %173 : vector<4x1xf32> to vector<4x8xf32>
    %175 = arith.mulf %174, %163 : vector<4x8xf32>
    %176 = arith.addf %172, %175 : vector<4x8xf32>
    %177 = arith.negf %176 : vector<4x8xf32>
    %178 = math.exp %177 : vector<4x8xf32>
    %cst_7 = arith.constant 1.000000e+00 : f32
    %179 = vector.broadcast %cst_7 : f32 to vector<4x8xf32>
    %180 = arith.addf %179, %178 : vector<4x8xf32>
    %181 = arith.divf %179, %180 : vector<4x8xf32>
    %182 = math.tanh %176 : vector<4x8xf32>
    %183 = vector.extract_strided_slice %181 {offsets = [0, 0], sizes = [4, 2], strides = [1, 1]} : vector<4x8xf32> to vector<4x2xf32>
    %184 = vector.extract_strided_slice %181 {offsets = [0, 2], sizes = [4, 2], strides = [1, 1]} : vector<4x8xf32> to vector<4x2xf32>
    %185 = vector.extract_strided_slice %182 {offsets = [0, 4], sizes = [4, 2], strides = [1, 1]} : vector<4x8xf32> to vector<4x2xf32>
    %186 = vector.extract_strided_slice %181 {offsets = [0, 6], sizes = [4, 2], strides = [1, 1]} : vector<4x8xf32> to vector<4x2xf32>
    %187 = arith.mulf %184, %157 : vector<4x2xf32>
    %188 = arith.mulf %183, %185 : vector<4x2xf32>
    %189 = arith.addf %187, %188 : vector<4x2xf32>
    %190 = vector.extract_strided_slice %186 {offsets = [0, 0], sizes = [4, 1], strides = [1, 1]} : vector<4x2xf32> to vector<4x1xf32>
    %191 = vector.broadcast %190 : vector<4x1xf32> to vector<4x8xf32>
    %192 = arith.mulf %191, %9 : vector<4x8xf32>
    %193 = vector.extract_strided_slice %186 {offsets = [0, 1], sizes = [4, 1], strides = [1, 1]} : vector<4x2xf32> to vector<4x1xf32>
    %194 = vector.broadcast %193 : vector<4x1xf32> to vector<4x8xf32>
    %195 = arith.mulf %194, %12 : vector<4x8xf32>
    %196 = math.tanh %189 : vector<4x2xf32>
    %197 = vector.extract_strided_slice %43 {offsets = [0, 5], sizes = [4, 1], strides = [1, 1]} : vector<4x30xf32> to vector<4x1xf32>
    %198 = vector.broadcast %197 : vector<4x1xf32> to vector<4x8xf32>
    %199 = arith.mulf %198, %3 : vector<4x8xf32>
    %200 = arith.addf %199, %6 : vector<4x8xf32>
    %201 = vector.extract_strided_slice %196 {offsets = [0, 0], sizes = [4, 1], strides = [1, 1]} : vector<4x2xf32> to vector<4x1xf32>
    %202 = vector.broadcast %201 : vector<4x1xf32> to vector<4x8xf32>
    %203 = arith.mulf %202, %192 : vector<4x8xf32>
    %204 = arith.addf %200, %203 : vector<4x8xf32>
    %205 = vector.extract_strided_slice %196 {offsets = [0, 1], sizes = [4, 1], strides = [1, 1]} : vector<4x2xf32> to vector<4x1xf32>
    %206 = vector.broadcast %205 : vector<4x1xf32> to vector<4x8xf32>
    %207 = arith.mulf %206, %195 : vector<4x8xf32>
    %208 = arith.addf %204, %207 : vector<4x8xf32>
    %209 = arith.negf %208 : vector<4x8xf32>
    %210 = math.exp %209 : vector<4x8xf32>
    %cst_8 = arith.constant 1.000000e+00 : f32
    %211 = vector.broadcast %cst_8 : f32 to vector<4x8xf32>
    %212 = arith.addf %211, %210 : vector<4x8xf32>
    %213 = arith.divf %211, %212 : vector<4x8xf32>
    %214 = math.tanh %208 : vector<4x8xf32>
    %215 = vector.extract_strided_slice %213 {offsets = [0, 0], sizes = [4, 2], strides = [1, 1]} : vector<4x8xf32> to vector<4x2xf32>
    %216 = vector.extract_strided_slice %213 {offsets = [0, 2], sizes = [4, 2], strides = [1, 1]} : vector<4x8xf32> to vector<4x2xf32>
    %217 = vector.extract_strided_slice %214 {offsets = [0, 4], sizes = [4, 2], strides = [1, 1]} : vector<4x8xf32> to vector<4x2xf32>
    %218 = vector.extract_strided_slice %213 {offsets = [0, 6], sizes = [4, 2], strides = [1, 1]} : vector<4x8xf32> to vector<4x2xf32>
    %219 = arith.mulf %216, %189 : vector<4x2xf32>
    %220 = arith.mulf %215, %217 : vector<4x2xf32>
    %221 = arith.addf %219, %220 : vector<4x2xf32>
    %222 = vector.extract_strided_slice %218 {offsets = [0, 0], sizes = [4, 1], strides = [1, 1]} : vector<4x2xf32> to vector<4x1xf32>
    %223 = vector.broadcast %222 : vector<4x1xf32> to vector<4x8xf32>
    %224 = arith.mulf %223, %9 : vector<4x8xf32>
    %225 = vector.extract_strided_slice %218 {offsets = [0, 1], sizes = [4, 1], strides = [1, 1]} : vector<4x2xf32> to vector<4x1xf32>
    %226 = vector.broadcast %225 : vector<4x1xf32> to vector<4x8xf32>
    %227 = arith.mulf %226, %12 : vector<4x8xf32>
    %228 = math.tanh %221 : vector<4x2xf32>
    %229 = vector.extract_strided_slice %43 {offsets = [0, 6], sizes = [4, 1], strides = [1, 1]} : vector<4x30xf32> to vector<4x1xf32>
    %230 = vector.broadcast %229 : vector<4x1xf32> to vector<4x8xf32>
    %231 = arith.mulf %230, %3 : vector<4x8xf32>
    %232 = arith.addf %231, %6 : vector<4x8xf32>
    %233 = vector.extract_strided_slice %228 {offsets = [0, 0], sizes = [4, 1], strides = [1, 1]} : vector<4x2xf32> to vector<4x1xf32>
    %234 = vector.broadcast %233 : vector<4x1xf32> to vector<4x8xf32>
    %235 = arith.mulf %234, %224 : vector<4x8xf32>
    %236 = arith.addf %232, %235 : vector<4x8xf32>
    %237 = vector.extract_strided_slice %228 {offsets = [0, 1], sizes = [4, 1], strides = [1, 1]} : vector<4x2xf32> to vector<4x1xf32>
    %238 = vector.broadcast %237 : vector<4x1xf32> to vector<4x8xf32>
    %239 = arith.mulf %238, %227 : vector<4x8xf32>
    %240 = arith.addf %236, %239 : vector<4x8xf32>
    %241 = arith.negf %240 : vector<4x8xf32>
    %242 = math.exp %241 : vector<4x8xf32>
    %cst_9 = arith.constant 1.000000e+00 : f32
    %243 = vector.broadcast %cst_9 : f32 to vector<4x8xf32>
    %244 = arith.addf %243, %242 : vector<4x8xf32>
    %245 = arith.divf %243, %244 : vector<4x8xf32>
    %246 = math.tanh %240 : vector<4x8xf32>
    %247 = vector.extract_strided_slice %245 {offsets = [0, 0], sizes = [4, 2], strides = [1, 1]} : vector<4x8xf32> to vector<4x2xf32>
    %248 = vector.extract_strided_slice %245 {offsets = [0, 2], sizes = [4, 2], strides = [1, 1]} : vector<4x8xf32> to vector<4x2xf32>
    %249 = vector.extract_strided_slice %246 {offsets = [0, 4], sizes = [4, 2], strides = [1, 1]} : vector<4x8xf32> to vector<4x2xf32>
    %250 = vector.extract_strided_slice %245 {offsets = [0, 6], sizes = [4, 2], strides = [1, 1]} : vector<4x8xf32> to vector<4x2xf32>
    %251 = arith.mulf %248, %221 : vector<4x2xf32>
    %252 = arith.mulf %247, %249 : vector<4x2xf32>
    %253 = arith.addf %251, %252 : vector<4x2xf32>
    %254 = vector.extract_strided_slice %250 {offsets = [0, 0], sizes = [4, 1], strides = [1, 1]} : vector<4x2xf32> to vector<4x1xf32>
    %255 = vector.broadcast %254 : vector<4x1xf32> to vector<4x8xf32>
    %256 = arith.mulf %255, %9 : vector<4x8xf32>
    %257 = vector.extract_strided_slice %250 {offsets = [0, 1], sizes = [4, 1], strides = [1, 1]} : vector<4x2xf32> to vector<4x1xf32>
    %258 = vector.broadcast %257 : vector<4x1xf32> to vector<4x8xf32>
    %259 = arith.mulf %258, %12 : vector<4x8xf32>
    %260 = math.tanh %253 : vector<4x2xf32>
    %261 = vector.extract_strided_slice %43 {offsets = [0, 7], sizes = [4, 1], strides = [1, 1]} : vector<4x30xf32> to vector<4x1xf32>
    %262 = vector.broadcast %261 : vector<4x1xf32> to vector<4x8xf32>
    %263 = arith.mulf %262, %3 : vector<4x8xf32>
    %264 = arith.addf %263, %6 : vector<4x8xf32>
    %265 = vector.extract_strided_slice %260 {offsets = [0, 0], sizes = [4, 1], strides = [1, 1]} : vector<4x2xf32> to vector<4x1xf32>
    %266 = vector.broadcast %265 : vector<4x1xf32> to vector<4x8xf32>
    %267 = arith.mulf %266, %256 : vector<4x8xf32>
    %268 = arith.addf %264, %267 : vector<4x8xf32>
    %269 = vector.extract_strided_slice %260 {offsets = [0, 1], sizes = [4, 1], strides = [1, 1]} : vector<4x2xf32> to vector<4x1xf32>
    %270 = vector.broadcast %269 : vector<4x1xf32> to vector<4x8xf32>
    %271 = arith.mulf %270, %259 : vector<4x8xf32>
    %272 = arith.addf %268, %271 : vector<4x8xf32>
    %273 = arith.negf %272 : vector<4x8xf32>
    %274 = math.exp %273 : vector<4x8xf32>
    %cst_10 = arith.constant 1.000000e+00 : f32
    %275 = vector.broadcast %cst_10 : f32 to vector<4x8xf32>
    %276 = arith.addf %275, %274 : vector<4x8xf32>
    %277 = arith.divf %275, %276 : vector<4x8xf32>
    %278 = math.tanh %272 : vector<4x8xf32>
    %279 = vector.extract_strided_slice %277 {offsets = [0, 0], sizes = [4, 2], strides = [1, 1]} : vector<4x8xf32> to vector<4x2xf32>
    %280 = vector.extract_strided_slice %277 {offsets = [0, 2], sizes = [4, 2], strides = [1, 1]} : vector<4x8xf32> to vector<4x2xf32>
    %281 = vector.extract_strided_slice %278 {offsets = [0, 4], sizes = [4, 2], strides = [1, 1]} : vector<4x8xf32> to vector<4x2xf32>
    %282 = vector.extract_strided_slice %277 {offsets = [0, 6], sizes = [4, 2], strides = [1, 1]} : vector<4x8xf32> to vector<4x2xf32>
    %283 = arith.mulf %280, %253 : vector<4x2xf32>
    %284 = arith.mulf %279, %281 : vector<4x2xf32>
    %285 = arith.addf %283, %284 : vector<4x2xf32>
    %286 = vector.extract_strided_slice %282 {offsets = [0, 0], sizes = [4, 1], strides = [1, 1]} : vector<4x2xf32> to vector<4x1xf32>
    %287 = vector.broadcast %286 : vector<4x1xf32> to vector<4x8xf32>
    %288 = arith.mulf %287, %9 : vector<4x8xf32>
    %289 = vector.extract_strided_slice %282 {offsets = [0, 1], sizes = [4, 1], strides = [1, 1]} : vector<4x2xf32> to vector<4x1xf32>
    %290 = vector.broadcast %289 : vector<4x1xf32> to vector<4x8xf32>
    %291 = arith.mulf %290, %12 : vector<4x8xf32>
    %292 = math.tanh %285 : vector<4x2xf32>
    %293 = vector.extract_strided_slice %43 {offsets = [0, 8], sizes = [4, 1], strides = [1, 1]} : vector<4x30xf32> to vector<4x1xf32>
    %294 = vector.broadcast %293 : vector<4x1xf32> to vector<4x8xf32>
    %295 = arith.mulf %294, %3 : vector<4x8xf32>
    %296 = arith.addf %295, %6 : vector<4x8xf32>
    %297 = vector.extract_strided_slice %292 {offsets = [0, 0], sizes = [4, 1], strides = [1, 1]} : vector<4x2xf32> to vector<4x1xf32>
    %298 = vector.broadcast %297 : vector<4x1xf32> to vector<4x8xf32>
    %299 = arith.mulf %298, %288 : vector<4x8xf32>
    %300 = arith.addf %296, %299 : vector<4x8xf32>
    %301 = vector.extract_strided_slice %292 {offsets = [0, 1], sizes = [4, 1], strides = [1, 1]} : vector<4x2xf32> to vector<4x1xf32>
    %302 = vector.broadcast %301 : vector<4x1xf32> to vector<4x8xf32>
    %303 = arith.mulf %302, %291 : vector<4x8xf32>
    %304 = arith.addf %300, %303 : vector<4x8xf32>
    %305 = arith.negf %304 : vector<4x8xf32>
    %306 = math.exp %305 : vector<4x8xf32>
    %cst_11 = arith.constant 1.000000e+00 : f32
    %307 = vector.broadcast %cst_11 : f32 to vector<4x8xf32>
    %308 = arith.addf %307, %306 : vector<4x8xf32>
    %309 = arith.divf %307, %308 : vector<4x8xf32>
    %310 = math.tanh %304 : vector<4x8xf32>
    %311 = vector.extract_strided_slice %309 {offsets = [0, 0], sizes = [4, 2], strides = [1, 1]} : vector<4x8xf32> to vector<4x2xf32>
    %312 = vector.extract_strided_slice %309 {offsets = [0, 2], sizes = [4, 2], strides = [1, 1]} : vector<4x8xf32> to vector<4x2xf32>
    %313 = vector.extract_strided_slice %310 {offsets = [0, 4], sizes = [4, 2], strides = [1, 1]} : vector<4x8xf32> to vector<4x2xf32>
    %314 = vector.extract_strided_slice %309 {offsets = [0, 6], sizes = [4, 2], strides = [1, 1]} : vector<4x8xf32> to vector<4x2xf32>
    %315 = arith.mulf %312, %285 : vector<4x2xf32>
    %316 = arith.mulf %311, %313 : vector<4x2xf32>
    %317 = arith.addf %315, %316 : vector<4x2xf32>
    %318 = vector.extract_strided_slice %314 {offsets = [0, 0], sizes = [4, 1], strides = [1, 1]} : vector<4x2xf32> to vector<4x1xf32>
    %319 = vector.broadcast %318 : vector<4x1xf32> to vector<4x8xf32>
    %320 = arith.mulf %319, %9 : vector<4x8xf32>
    %321 = vector.extract_strided_slice %314 {offsets = [0, 1], sizes = [4, 1], strides = [1, 1]} : vector<4x2xf32> to vector<4x1xf32>
    %322 = vector.broadcast %321 : vector<4x1xf32> to vector<4x8xf32>
    %323 = arith.mulf %322, %12 : vector<4x8xf32>
    %324 = math.tanh %317 : vector<4x2xf32>
    %325 = vector.extract_strided_slice %43 {offsets = [0, 9], sizes = [4, 1], strides = [1, 1]} : vector<4x30xf32> to vector<4x1xf32>
    %326 = vector.broadcast %325 : vector<4x1xf32> to vector<4x8xf32>
    %327 = arith.mulf %326, %3 : vector<4x8xf32>
    %328 = arith.addf %327, %6 : vector<4x8xf32>
    %329 = vector.extract_strided_slice %324 {offsets = [0, 0], sizes = [4, 1], strides = [1, 1]} : vector<4x2xf32> to vector<4x1xf32>
    %330 = vector.broadcast %329 : vector<4x1xf32> to vector<4x8xf32>
    %331 = arith.mulf %330, %320 : vector<4x8xf32>
    %332 = arith.addf %328, %331 : vector<4x8xf32>
    %333 = vector.extract_strided_slice %324 {offsets = [0, 1], sizes = [4, 1], strides = [1, 1]} : vector<4x2xf32> to vector<4x1xf32>
    %334 = vector.broadcast %333 : vector<4x1xf32> to vector<4x8xf32>
    %335 = arith.mulf %334, %323 : vector<4x8xf32>
    %336 = arith.addf %332, %335 : vector<4x8xf32>
    %337 = arith.negf %336 : vector<4x8xf32>
    %338 = math.exp %337 : vector<4x8xf32>
    %cst_12 = arith.constant 1.000000e+00 : f32
    %339 = vector.broadcast %cst_12 : f32 to vector<4x8xf32>
    %340 = arith.addf %339, %338 : vector<4x8xf32>
    %341 = arith.divf %339, %340 : vector<4x8xf32>
    %342 = math.tanh %336 : vector<4x8xf32>
    %343 = vector.extract_strided_slice %341 {offsets = [0, 0], sizes = [4, 2], strides = [1, 1]} : vector<4x8xf32> to vector<4x2xf32>
    %344 = vector.extract_strided_slice %341 {offsets = [0, 2], sizes = [4, 2], strides = [1, 1]} : vector<4x8xf32> to vector<4x2xf32>
    %345 = vector.extract_strided_slice %342 {offsets = [0, 4], sizes = [4, 2], strides = [1, 1]} : vector<4x8xf32> to vector<4x2xf32>
    %346 = vector.extract_strided_slice %341 {offsets = [0, 6], sizes = [4, 2], strides = [1, 1]} : vector<4x8xf32> to vector<4x2xf32>
    %347 = arith.mulf %344, %317 : vector<4x2xf32>
    %348 = arith.mulf %343, %345 : vector<4x2xf32>
    %349 = arith.addf %347, %348 : vector<4x2xf32>
    %350 = vector.extract_strided_slice %346 {offsets = [0, 0], sizes = [4, 1], strides = [1, 1]} : vector<4x2xf32> to vector<4x1xf32>
    %351 = vector.broadcast %350 : vector<4x1xf32> to vector<4x8xf32>
    %352 = arith.mulf %351, %9 : vector<4x8xf32>
    %353 = vector.extract_strided_slice %346 {offsets = [0, 1], sizes = [4, 1], strides = [1, 1]} : vector<4x2xf32> to vector<4x1xf32>
    %354 = vector.broadcast %353 : vector<4x1xf32> to vector<4x8xf32>
    %355 = arith.mulf %354, %12 : vector<4x8xf32>
    %356 = math.tanh %349 : vector<4x2xf32>
    %357 = vector.extract_strided_slice %43 {offsets = [0, 10], sizes = [4, 1], strides = [1, 1]} : vector<4x30xf32> to vector<4x1xf32>
    %358 = vector.broadcast %357 : vector<4x1xf32> to vector<4x8xf32>
    %359 = arith.mulf %358, %3 : vector<4x8xf32>
    %360 = arith.addf %359, %6 : vector<4x8xf32>
    %361 = vector.extract_strided_slice %356 {offsets = [0, 0], sizes = [4, 1], strides = [1, 1]} : vector<4x2xf32> to vector<4x1xf32>
    %362 = vector.broadcast %361 : vector<4x1xf32> to vector<4x8xf32>
    %363 = arith.mulf %362, %352 : vector<4x8xf32>
    %364 = arith.addf %360, %363 : vector<4x8xf32>
    %365 = vector.extract_strided_slice %356 {offsets = [0, 1], sizes = [4, 1], strides = [1, 1]} : vector<4x2xf32> to vector<4x1xf32>
    %366 = vector.broadcast %365 : vector<4x1xf32> to vector<4x8xf32>
    %367 = arith.mulf %366, %355 : vector<4x8xf32>
    %368 = arith.addf %364, %367 : vector<4x8xf32>
    %369 = arith.negf %368 : vector<4x8xf32>
    %370 = math.exp %369 : vector<4x8xf32>
    %cst_13 = arith.constant 1.000000e+00 : f32
    %371 = vector.broadcast %cst_13 : f32 to vector<4x8xf32>
    %372 = arith.addf %371, %370 : vector<4x8xf32>
    %373 = arith.divf %371, %372 : vector<4x8xf32>
    %374 = math.tanh %368 : vector<4x8xf32>
    %375 = vector.extract_strided_slice %373 {offsets = [0, 0], sizes = [4, 2], strides = [1, 1]} : vector<4x8xf32> to vector<4x2xf32>
    %376 = vector.extract_strided_slice %373 {offsets = [0, 2], sizes = [4, 2], strides = [1, 1]} : vector<4x8xf32> to vector<4x2xf32>
    %377 = vector.extract_strided_slice %374 {offsets = [0, 4], sizes = [4, 2], strides = [1, 1]} : vector<4x8xf32> to vector<4x2xf32>
    %378 = vector.extract_strided_slice %373 {offsets = [0, 6], sizes = [4, 2], strides = [1, 1]} : vector<4x8xf32> to vector<4x2xf32>
    %379 = arith.mulf %376, %349 : vector<4x2xf32>
    %380 = arith.mulf %375, %377 : vector<4x2xf32>
    %381 = arith.addf %379, %380 : vector<4x2xf32>
    %382 = vector.extract_strided_slice %378 {offsets = [0, 0], sizes = [4, 1], strides = [1, 1]} : vector<4x2xf32> to vector<4x1xf32>
    %383 = vector.broadcast %382 : vector<4x1xf32> to vector<4x8xf32>
    %384 = arith.mulf %383, %9 : vector<4x8xf32>
    %385 = vector.extract_strided_slice %378 {offsets = [0, 1], sizes = [4, 1], strides = [1, 1]} : vector<4x2xf32> to vector<4x1xf32>
    %386 = vector.broadcast %385 : vector<4x1xf32> to vector<4x8xf32>
    %387 = arith.mulf %386, %12 : vector<4x8xf32>
    %388 = math.tanh %381 : vector<4x2xf32>
    %389 = vector.extract_strided_slice %43 {offsets = [0, 11], sizes = [4, 1], strides = [1, 1]} : vector<4x30xf32> to vector<4x1xf32>
    %390 = vector.broadcast %389 : vector<4x1xf32> to vector<4x8xf32>
    %391 = arith.mulf %390, %3 : vector<4x8xf32>
    %392 = arith.addf %391, %6 : vector<4x8xf32>
    %393 = vector.extract_strided_slice %388 {offsets = [0, 0], sizes = [4, 1], strides = [1, 1]} : vector<4x2xf32> to vector<4x1xf32>
    %394 = vector.broadcast %393 : vector<4x1xf32> to vector<4x8xf32>
    %395 = arith.mulf %394, %384 : vector<4x8xf32>
    %396 = arith.addf %392, %395 : vector<4x8xf32>
    %397 = vector.extract_strided_slice %388 {offsets = [0, 1], sizes = [4, 1], strides = [1, 1]} : vector<4x2xf32> to vector<4x1xf32>
    %398 = vector.broadcast %397 : vector<4x1xf32> to vector<4x8xf32>
    %399 = arith.mulf %398, %387 : vector<4x8xf32>
    %400 = arith.addf %396, %399 : vector<4x8xf32>
    %401 = arith.negf %400 : vector<4x8xf32>
    %402 = math.exp %401 : vector<4x8xf32>
    %cst_14 = arith.constant 1.000000e+00 : f32
    %403 = vector.broadcast %cst_14 : f32 to vector<4x8xf32>
    %404 = arith.addf %403, %402 : vector<4x8xf32>
    %405 = arith.divf %403, %404 : vector<4x8xf32>
    %406 = math.tanh %400 : vector<4x8xf32>
    %407 = vector.extract_strided_slice %405 {offsets = [0, 0], sizes = [4, 2], strides = [1, 1]} : vector<4x8xf32> to vector<4x2xf32>
    %408 = vector.extract_strided_slice %405 {offsets = [0, 2], sizes = [4, 2], strides = [1, 1]} : vector<4x8xf32> to vector<4x2xf32>
    %409 = vector.extract_strided_slice %406 {offsets = [0, 4], sizes = [4, 2], strides = [1, 1]} : vector<4x8xf32> to vector<4x2xf32>
    %410 = vector.extract_strided_slice %405 {offsets = [0, 6], sizes = [4, 2], strides = [1, 1]} : vector<4x8xf32> to vector<4x2xf32>
    %411 = arith.mulf %408, %381 : vector<4x2xf32>
    %412 = arith.mulf %407, %409 : vector<4x2xf32>
    %413 = arith.addf %411, %412 : vector<4x2xf32>
    %414 = vector.extract_strided_slice %410 {offsets = [0, 0], sizes = [4, 1], strides = [1, 1]} : vector<4x2xf32> to vector<4x1xf32>
    %415 = vector.broadcast %414 : vector<4x1xf32> to vector<4x8xf32>
    %416 = arith.mulf %415, %9 : vector<4x8xf32>
    %417 = vector.extract_strided_slice %410 {offsets = [0, 1], sizes = [4, 1], strides = [1, 1]} : vector<4x2xf32> to vector<4x1xf32>
    %418 = vector.broadcast %417 : vector<4x1xf32> to vector<4x8xf32>
    %419 = arith.mulf %418, %12 : vector<4x8xf32>
    %420 = math.tanh %413 : vector<4x2xf32>
    %421 = vector.extract_strided_slice %43 {offsets = [0, 12], sizes = [4, 1], strides = [1, 1]} : vector<4x30xf32> to vector<4x1xf32>
    %422 = vector.broadcast %421 : vector<4x1xf32> to vector<4x8xf32>
    %423 = arith.mulf %422, %3 : vector<4x8xf32>
    %424 = arith.addf %423, %6 : vector<4x8xf32>
    %425 = vector.extract_strided_slice %420 {offsets = [0, 0], sizes = [4, 1], strides = [1, 1]} : vector<4x2xf32> to vector<4x1xf32>
    %426 = vector.broadcast %425 : vector<4x1xf32> to vector<4x8xf32>
    %427 = arith.mulf %426, %416 : vector<4x8xf32>
    %428 = arith.addf %424, %427 : vector<4x8xf32>
    %429 = vector.extract_strided_slice %420 {offsets = [0, 1], sizes = [4, 1], strides = [1, 1]} : vector<4x2xf32> to vector<4x1xf32>
    %430 = vector.broadcast %429 : vector<4x1xf32> to vector<4x8xf32>
    %431 = arith.mulf %430, %419 : vector<4x8xf32>
    %432 = arith.addf %428, %431 : vector<4x8xf32>
    %433 = arith.negf %432 : vector<4x8xf32>
    %434 = math.exp %433 : vector<4x8xf32>
    %cst_15 = arith.constant 1.000000e+00 : f32
    %435 = vector.broadcast %cst_15 : f32 to vector<4x8xf32>
    %436 = arith.addf %435, %434 : vector<4x8xf32>
    %437 = arith.divf %435, %436 : vector<4x8xf32>
    %438 = math.tanh %432 : vector<4x8xf32>
    %439 = vector.extract_strided_slice %437 {offsets = [0, 0], sizes = [4, 2], strides = [1, 1]} : vector<4x8xf32> to vector<4x2xf32>
    %440 = vector.extract_strided_slice %437 {offsets = [0, 2], sizes = [4, 2], strides = [1, 1]} : vector<4x8xf32> to vector<4x2xf32>
    %441 = vector.extract_strided_slice %438 {offsets = [0, 4], sizes = [4, 2], strides = [1, 1]} : vector<4x8xf32> to vector<4x2xf32>
    %442 = vector.extract_strided_slice %437 {offsets = [0, 6], sizes = [4, 2], strides = [1, 1]} : vector<4x8xf32> to vector<4x2xf32>
    %443 = arith.mulf %440, %413 : vector<4x2xf32>
    %444 = arith.mulf %439, %441 : vector<4x2xf32>
    %445 = arith.addf %443, %444 : vector<4x2xf32>
    %446 = vector.extract_strided_slice %442 {offsets = [0, 0], sizes = [4, 1], strides = [1, 1]} : vector<4x2xf32> to vector<4x1xf32>
    %447 = vector.broadcast %446 : vector<4x1xf32> to vector<4x8xf32>
    %448 = arith.mulf %447, %9 : vector<4x8xf32>
    %449 = vector.extract_strided_slice %442 {offsets = [0, 1], sizes = [4, 1], strides = [1, 1]} : vector<4x2xf32> to vector<4x1xf32>
    %450 = vector.broadcast %449 : vector<4x1xf32> to vector<4x8xf32>
    %451 = arith.mulf %450, %12 : vector<4x8xf32>
    %452 = math.tanh %445 : vector<4x2xf32>
    %453 = vector.extract_strided_slice %43 {offsets = [0, 13], sizes = [4, 1], strides = [1, 1]} : vector<4x30xf32> to vector<4x1xf32>
    %454 = vector.broadcast %453 : vector<4x1xf32> to vector<4x8xf32>
    %455 = arith.mulf %454, %3 : vector<4x8xf32>
    %456 = arith.addf %455, %6 : vector<4x8xf32>
    %457 = vector.extract_strided_slice %452 {offsets = [0, 0], sizes = [4, 1], strides = [1, 1]} : vector<4x2xf32> to vector<4x1xf32>
    %458 = vector.broadcast %457 : vector<4x1xf32> to vector<4x8xf32>
    %459 = arith.mulf %458, %448 : vector<4x8xf32>
    %460 = arith.addf %456, %459 : vector<4x8xf32>
    %461 = vector.extract_strided_slice %452 {offsets = [0, 1], sizes = [4, 1], strides = [1, 1]} : vector<4x2xf32> to vector<4x1xf32>
    %462 = vector.broadcast %461 : vector<4x1xf32> to vector<4x8xf32>
    %463 = arith.mulf %462, %451 : vector<4x8xf32>
    %464 = arith.addf %460, %463 : vector<4x8xf32>
    %465 = arith.negf %464 : vector<4x8xf32>
    %466 = math.exp %465 : vector<4x8xf32>
    %cst_16 = arith.constant 1.000000e+00 : f32
    %467 = vector.broadcast %cst_16 : f32 to vector<4x8xf32>
    %468 = arith.addf %467, %466 : vector<4x8xf32>
    %469 = arith.divf %467, %468 : vector<4x8xf32>
    %470 = math.tanh %464 : vector<4x8xf32>
    %471 = vector.extract_strided_slice %469 {offsets = [0, 0], sizes = [4, 2], strides = [1, 1]} : vector<4x8xf32> to vector<4x2xf32>
    %472 = vector.extract_strided_slice %469 {offsets = [0, 2], sizes = [4, 2], strides = [1, 1]} : vector<4x8xf32> to vector<4x2xf32>
    %473 = vector.extract_strided_slice %470 {offsets = [0, 4], sizes = [4, 2], strides = [1, 1]} : vector<4x8xf32> to vector<4x2xf32>
    %474 = vector.extract_strided_slice %469 {offsets = [0, 6], sizes = [4, 2], strides = [1, 1]} : vector<4x8xf32> to vector<4x2xf32>
    %475 = arith.mulf %472, %445 : vector<4x2xf32>
    %476 = arith.mulf %471, %473 : vector<4x2xf32>
    %477 = arith.addf %475, %476 : vector<4x2xf32>
    %478 = vector.extract_strided_slice %474 {offsets = [0, 0], sizes = [4, 1], strides = [1, 1]} : vector<4x2xf32> to vector<4x1xf32>
    %479 = vector.broadcast %478 : vector<4x1xf32> to vector<4x8xf32>
    %480 = arith.mulf %479, %9 : vector<4x8xf32>
    %481 = vector.extract_strided_slice %474 {offsets = [0, 1], sizes = [4, 1], strides = [1, 1]} : vector<4x2xf32> to vector<4x1xf32>
    %482 = vector.broadcast %481 : vector<4x1xf32> to vector<4x8xf32>
    %483 = arith.mulf %482, %12 : vector<4x8xf32>
    %484 = math.tanh %477 : vector<4x2xf32>
    %485 = vector.extract_strided_slice %43 {offsets = [0, 14], sizes = [4, 1], strides = [1, 1]} : vector<4x30xf32> to vector<4x1xf32>
    %486 = vector.broadcast %485 : vector<4x1xf32> to vector<4x8xf32>
    %487 = arith.mulf %486, %3 : vector<4x8xf32>
    %488 = arith.addf %487, %6 : vector<4x8xf32>
    %489 = vector.extract_strided_slice %484 {offsets = [0, 0], sizes = [4, 1], strides = [1, 1]} : vector<4x2xf32> to vector<4x1xf32>
    %490 = vector.broadcast %489 : vector<4x1xf32> to vector<4x8xf32>
    %491 = arith.mulf %490, %480 : vector<4x8xf32>
    %492 = arith.addf %488, %491 : vector<4x8xf32>
    %493 = vector.extract_strided_slice %484 {offsets = [0, 1], sizes = [4, 1], strides = [1, 1]} : vector<4x2xf32> to vector<4x1xf32>
    %494 = vector.broadcast %493 : vector<4x1xf32> to vector<4x8xf32>
    %495 = arith.mulf %494, %483 : vector<4x8xf32>
    %496 = arith.addf %492, %495 : vector<4x8xf32>
    %497 = arith.negf %496 : vector<4x8xf32>
    %498 = math.exp %497 : vector<4x8xf32>
    %cst_17 = arith.constant 1.000000e+00 : f32
    %499 = vector.broadcast %cst_17 : f32 to vector<4x8xf32>
    %500 = arith.addf %499, %498 : vector<4x8xf32>
    %501 = arith.divf %499, %500 : vector<4x8xf32>
    %502 = math.tanh %496 : vector<4x8xf32>
    %503 = vector.extract_strided_slice %501 {offsets = [0, 0], sizes = [4, 2], strides = [1, 1]} : vector<4x8xf32> to vector<4x2xf32>
    %504 = vector.extract_strided_slice %501 {offsets = [0, 2], sizes = [4, 2], strides = [1, 1]} : vector<4x8xf32> to vector<4x2xf32>
    %505 = vector.extract_strided_slice %502 {offsets = [0, 4], sizes = [4, 2], strides = [1, 1]} : vector<4x8xf32> to vector<4x2xf32>
    %506 = vector.extract_strided_slice %501 {offsets = [0, 6], sizes = [4, 2], strides = [1, 1]} : vector<4x8xf32> to vector<4x2xf32>
    %507 = arith.mulf %504, %477 : vector<4x2xf32>
    %508 = arith.mulf %503, %505 : vector<4x2xf32>
    %509 = arith.addf %507, %508 : vector<4x2xf32>
    %510 = vector.extract_strided_slice %506 {offsets = [0, 0], sizes = [4, 1], strides = [1, 1]} : vector<4x2xf32> to vector<4x1xf32>
    %511 = vector.broadcast %510 : vector<4x1xf32> to vector<4x8xf32>
    %512 = arith.mulf %511, %9 : vector<4x8xf32>
    %513 = vector.extract_strided_slice %506 {offsets = [0, 1], sizes = [4, 1], strides = [1, 1]} : vector<4x2xf32> to vector<4x1xf32>
    %514 = vector.broadcast %513 : vector<4x1xf32> to vector<4x8xf32>
    %515 = arith.mulf %514, %12 : vector<4x8xf32>
    %516 = math.tanh %509 : vector<4x2xf32>
    %517 = vector.extract_strided_slice %43 {offsets = [0, 15], sizes = [4, 1], strides = [1, 1]} : vector<4x30xf32> to vector<4x1xf32>
    %518 = vector.broadcast %517 : vector<4x1xf32> to vector<4x8xf32>
    %519 = arith.mulf %518, %3 : vector<4x8xf32>
    %520 = arith.addf %519, %6 : vector<4x8xf32>
    %521 = vector.extract_strided_slice %516 {offsets = [0, 0], sizes = [4, 1], strides = [1, 1]} : vector<4x2xf32> to vector<4x1xf32>
    %522 = vector.broadcast %521 : vector<4x1xf32> to vector<4x8xf32>
    %523 = arith.mulf %522, %512 : vector<4x8xf32>
    %524 = arith.addf %520, %523 : vector<4x8xf32>
    %525 = vector.extract_strided_slice %516 {offsets = [0, 1], sizes = [4, 1], strides = [1, 1]} : vector<4x2xf32> to vector<4x1xf32>
    %526 = vector.broadcast %525 : vector<4x1xf32> to vector<4x8xf32>
    %527 = arith.mulf %526, %515 : vector<4x8xf32>
    %528 = arith.addf %524, %527 : vector<4x8xf32>
    %529 = arith.negf %528 : vector<4x8xf32>
    %530 = math.exp %529 : vector<4x8xf32>
    %cst_18 = arith.constant 1.000000e+00 : f32
    %531 = vector.broadcast %cst_18 : f32 to vector<4x8xf32>
    %532 = arith.addf %531, %530 : vector<4x8xf32>
    %533 = arith.divf %531, %532 : vector<4x8xf32>
    %534 = math.tanh %528 : vector<4x8xf32>
    %535 = vector.extract_strided_slice %533 {offsets = [0, 0], sizes = [4, 2], strides = [1, 1]} : vector<4x8xf32> to vector<4x2xf32>
    %536 = vector.extract_strided_slice %533 {offsets = [0, 2], sizes = [4, 2], strides = [1, 1]} : vector<4x8xf32> to vector<4x2xf32>
    %537 = vector.extract_strided_slice %534 {offsets = [0, 4], sizes = [4, 2], strides = [1, 1]} : vector<4x8xf32> to vector<4x2xf32>
    %538 = vector.extract_strided_slice %533 {offsets = [0, 6], sizes = [4, 2], strides = [1, 1]} : vector<4x8xf32> to vector<4x2xf32>
    %539 = arith.mulf %536, %509 : vector<4x2xf32>
    %540 = arith.mulf %535, %537 : vector<4x2xf32>
    %541 = arith.addf %539, %540 : vector<4x2xf32>
    %542 = vector.extract_strided_slice %538 {offsets = [0, 0], sizes = [4, 1], strides = [1, 1]} : vector<4x2xf32> to vector<4x1xf32>
    %543 = vector.broadcast %542 : vector<4x1xf32> to vector<4x8xf32>
    %544 = arith.mulf %543, %9 : vector<4x8xf32>
    %545 = vector.extract_strided_slice %538 {offsets = [0, 1], sizes = [4, 1], strides = [1, 1]} : vector<4x2xf32> to vector<4x1xf32>
    %546 = vector.broadcast %545 : vector<4x1xf32> to vector<4x8xf32>
    %547 = arith.mulf %546, %12 : vector<4x8xf32>
    %548 = math.tanh %541 : vector<4x2xf32>
    %549 = vector.extract_strided_slice %43 {offsets = [0, 16], sizes = [4, 1], strides = [1, 1]} : vector<4x30xf32> to vector<4x1xf32>
    %550 = vector.broadcast %549 : vector<4x1xf32> to vector<4x8xf32>
    %551 = arith.mulf %550, %3 : vector<4x8xf32>
    %552 = arith.addf %551, %6 : vector<4x8xf32>
    %553 = vector.extract_strided_slice %548 {offsets = [0, 0], sizes = [4, 1], strides = [1, 1]} : vector<4x2xf32> to vector<4x1xf32>
    %554 = vector.broadcast %553 : vector<4x1xf32> to vector<4x8xf32>
    %555 = arith.mulf %554, %544 : vector<4x8xf32>
    %556 = arith.addf %552, %555 : vector<4x8xf32>
    %557 = vector.extract_strided_slice %548 {offsets = [0, 1], sizes = [4, 1], strides = [1, 1]} : vector<4x2xf32> to vector<4x1xf32>
    %558 = vector.broadcast %557 : vector<4x1xf32> to vector<4x8xf32>
    %559 = arith.mulf %558, %547 : vector<4x8xf32>
    %560 = arith.addf %556, %559 : vector<4x8xf32>
    %561 = arith.negf %560 : vector<4x8xf32>
    %562 = math.exp %561 : vector<4x8xf32>
    %cst_19 = arith.constant 1.000000e+00 : f32
    %563 = vector.broadcast %cst_19 : f32 to vector<4x8xf32>
    %564 = arith.addf %563, %562 : vector<4x8xf32>
    %565 = arith.divf %563, %564 : vector<4x8xf32>
    %566 = math.tanh %560 : vector<4x8xf32>
    %567 = vector.extract_strided_slice %565 {offsets = [0, 0], sizes = [4, 2], strides = [1, 1]} : vector<4x8xf32> to vector<4x2xf32>
    %568 = vector.extract_strided_slice %565 {offsets = [0, 2], sizes = [4, 2], strides = [1, 1]} : vector<4x8xf32> to vector<4x2xf32>
    %569 = vector.extract_strided_slice %566 {offsets = [0, 4], sizes = [4, 2], strides = [1, 1]} : vector<4x8xf32> to vector<4x2xf32>
    %570 = vector.extract_strided_slice %565 {offsets = [0, 6], sizes = [4, 2], strides = [1, 1]} : vector<4x8xf32> to vector<4x2xf32>
    %571 = arith.mulf %568, %541 : vector<4x2xf32>
    %572 = arith.mulf %567, %569 : vector<4x2xf32>
    %573 = arith.addf %571, %572 : vector<4x2xf32>
    %574 = vector.extract_strided_slice %570 {offsets = [0, 0], sizes = [4, 1], strides = [1, 1]} : vector<4x2xf32> to vector<4x1xf32>
    %575 = vector.broadcast %574 : vector<4x1xf32> to vector<4x8xf32>
    %576 = arith.mulf %575, %9 : vector<4x8xf32>
    %577 = vector.extract_strided_slice %570 {offsets = [0, 1], sizes = [4, 1], strides = [1, 1]} : vector<4x2xf32> to vector<4x1xf32>
    %578 = vector.broadcast %577 : vector<4x1xf32> to vector<4x8xf32>
    %579 = arith.mulf %578, %12 : vector<4x8xf32>
    %580 = math.tanh %573 : vector<4x2xf32>
    %581 = vector.extract_strided_slice %43 {offsets = [0, 17], sizes = [4, 1], strides = [1, 1]} : vector<4x30xf32> to vector<4x1xf32>
    %582 = vector.broadcast %581 : vector<4x1xf32> to vector<4x8xf32>
    %583 = arith.mulf %582, %3 : vector<4x8xf32>
    %584 = arith.addf %583, %6 : vector<4x8xf32>
    %585 = vector.extract_strided_slice %580 {offsets = [0, 0], sizes = [4, 1], strides = [1, 1]} : vector<4x2xf32> to vector<4x1xf32>
    %586 = vector.broadcast %585 : vector<4x1xf32> to vector<4x8xf32>
    %587 = arith.mulf %586, %576 : vector<4x8xf32>
    %588 = arith.addf %584, %587 : vector<4x8xf32>
    %589 = vector.extract_strided_slice %580 {offsets = [0, 1], sizes = [4, 1], strides = [1, 1]} : vector<4x2xf32> to vector<4x1xf32>
    %590 = vector.broadcast %589 : vector<4x1xf32> to vector<4x8xf32>
    %591 = arith.mulf %590, %579 : vector<4x8xf32>
    %592 = arith.addf %588, %591 : vector<4x8xf32>
    %593 = arith.negf %592 : vector<4x8xf32>
    %594 = math.exp %593 : vector<4x8xf32>
    %cst_20 = arith.constant 1.000000e+00 : f32
    %595 = vector.broadcast %cst_20 : f32 to vector<4x8xf32>
    %596 = arith.addf %595, %594 : vector<4x8xf32>
    %597 = arith.divf %595, %596 : vector<4x8xf32>
    %598 = math.tanh %592 : vector<4x8xf32>
    %599 = vector.extract_strided_slice %597 {offsets = [0, 0], sizes = [4, 2], strides = [1, 1]} : vector<4x8xf32> to vector<4x2xf32>
    %600 = vector.extract_strided_slice %597 {offsets = [0, 2], sizes = [4, 2], strides = [1, 1]} : vector<4x8xf32> to vector<4x2xf32>
    %601 = vector.extract_strided_slice %598 {offsets = [0, 4], sizes = [4, 2], strides = [1, 1]} : vector<4x8xf32> to vector<4x2xf32>
    %602 = vector.extract_strided_slice %597 {offsets = [0, 6], sizes = [4, 2], strides = [1, 1]} : vector<4x8xf32> to vector<4x2xf32>
    %603 = arith.mulf %600, %573 : vector<4x2xf32>
    %604 = arith.mulf %599, %601 : vector<4x2xf32>
    %605 = arith.addf %603, %604 : vector<4x2xf32>
    %606 = vector.extract_strided_slice %602 {offsets = [0, 0], sizes = [4, 1], strides = [1, 1]} : vector<4x2xf32> to vector<4x1xf32>
    %607 = vector.broadcast %606 : vector<4x1xf32> to vector<4x8xf32>
    %608 = arith.mulf %607, %9 : vector<4x8xf32>
    %609 = vector.extract_strided_slice %602 {offsets = [0, 1], sizes = [4, 1], strides = [1, 1]} : vector<4x2xf32> to vector<4x1xf32>
    %610 = vector.broadcast %609 : vector<4x1xf32> to vector<4x8xf32>
    %611 = arith.mulf %610, %12 : vector<4x8xf32>
    %612 = math.tanh %605 : vector<4x2xf32>
    %613 = vector.extract_strided_slice %43 {offsets = [0, 18], sizes = [4, 1], strides = [1, 1]} : vector<4x30xf32> to vector<4x1xf32>
    %614 = vector.broadcast %613 : vector<4x1xf32> to vector<4x8xf32>
    %615 = arith.mulf %614, %3 : vector<4x8xf32>
    %616 = arith.addf %615, %6 : vector<4x8xf32>
    %617 = vector.extract_strided_slice %612 {offsets = [0, 0], sizes = [4, 1], strides = [1, 1]} : vector<4x2xf32> to vector<4x1xf32>
    %618 = vector.broadcast %617 : vector<4x1xf32> to vector<4x8xf32>
    %619 = arith.mulf %618, %608 : vector<4x8xf32>
    %620 = arith.addf %616, %619 : vector<4x8xf32>
    %621 = vector.extract_strided_slice %612 {offsets = [0, 1], sizes = [4, 1], strides = [1, 1]} : vector<4x2xf32> to vector<4x1xf32>
    %622 = vector.broadcast %621 : vector<4x1xf32> to vector<4x8xf32>
    %623 = arith.mulf %622, %611 : vector<4x8xf32>
    %624 = arith.addf %620, %623 : vector<4x8xf32>
    %625 = arith.negf %624 : vector<4x8xf32>
    %626 = math.exp %625 : vector<4x8xf32>
    %cst_21 = arith.constant 1.000000e+00 : f32
    %627 = vector.broadcast %cst_21 : f32 to vector<4x8xf32>
    %628 = arith.addf %627, %626 : vector<4x8xf32>
    %629 = arith.divf %627, %628 : vector<4x8xf32>
    %630 = math.tanh %624 : vector<4x8xf32>
    %631 = vector.extract_strided_slice %629 {offsets = [0, 0], sizes = [4, 2], strides = [1, 1]} : vector<4x8xf32> to vector<4x2xf32>
    %632 = vector.extract_strided_slice %629 {offsets = [0, 2], sizes = [4, 2], strides = [1, 1]} : vector<4x8xf32> to vector<4x2xf32>
    %633 = vector.extract_strided_slice %630 {offsets = [0, 4], sizes = [4, 2], strides = [1, 1]} : vector<4x8xf32> to vector<4x2xf32>
    %634 = vector.extract_strided_slice %629 {offsets = [0, 6], sizes = [4, 2], strides = [1, 1]} : vector<4x8xf32> to vector<4x2xf32>
    %635 = arith.mulf %632, %605 : vector<4x2xf32>
    %636 = arith.mulf %631, %633 : vector<4x2xf32>
    %637 = arith.addf %635, %636 : vector<4x2xf32>
    %638 = vector.extract_strided_slice %634 {offsets = [0, 0], sizes = [4, 1], strides = [1, 1]} : vector<4x2xf32> to vector<4x1xf32>
    %639 = vector.broadcast %638 : vector<4x1xf32> to vector<4x8xf32>
    %640 = arith.mulf %639, %9 : vector<4x8xf32>
    %641 = vector.extract_strided_slice %634 {offsets = [0, 1], sizes = [4, 1], strides = [1, 1]} : vector<4x2xf32> to vector<4x1xf32>
    %642 = vector.broadcast %641 : vector<4x1xf32> to vector<4x8xf32>
    %643 = arith.mulf %642, %12 : vector<4x8xf32>
    %644 = math.tanh %637 : vector<4x2xf32>
    %645 = vector.extract_strided_slice %43 {offsets = [0, 19], sizes = [4, 1], strides = [1, 1]} : vector<4x30xf32> to vector<4x1xf32>
    %646 = vector.broadcast %645 : vector<4x1xf32> to vector<4x8xf32>
    %647 = arith.mulf %646, %3 : vector<4x8xf32>
    %648 = arith.addf %647, %6 : vector<4x8xf32>
    %649 = vector.extract_strided_slice %644 {offsets = [0, 0], sizes = [4, 1], strides = [1, 1]} : vector<4x2xf32> to vector<4x1xf32>
    %650 = vector.broadcast %649 : vector<4x1xf32> to vector<4x8xf32>
    %651 = arith.mulf %650, %640 : vector<4x8xf32>
    %652 = arith.addf %648, %651 : vector<4x8xf32>
    %653 = vector.extract_strided_slice %644 {offsets = [0, 1], sizes = [4, 1], strides = [1, 1]} : vector<4x2xf32> to vector<4x1xf32>
    %654 = vector.broadcast %653 : vector<4x1xf32> to vector<4x8xf32>
    %655 = arith.mulf %654, %643 : vector<4x8xf32>
    %656 = arith.addf %652, %655 : vector<4x8xf32>
    %657 = arith.negf %656 : vector<4x8xf32>
    %658 = math.exp %657 : vector<4x8xf32>
    %cst_22 = arith.constant 1.000000e+00 : f32
    %659 = vector.broadcast %cst_22 : f32 to vector<4x8xf32>
    %660 = arith.addf %659, %658 : vector<4x8xf32>
    %661 = arith.divf %659, %660 : vector<4x8xf32>
    %662 = math.tanh %656 : vector<4x8xf32>
    %663 = vector.extract_strided_slice %661 {offsets = [0, 0], sizes = [4, 2], strides = [1, 1]} : vector<4x8xf32> to vector<4x2xf32>
    %664 = vector.extract_strided_slice %661 {offsets = [0, 2], sizes = [4, 2], strides = [1, 1]} : vector<4x8xf32> to vector<4x2xf32>
    %665 = vector.extract_strided_slice %662 {offsets = [0, 4], sizes = [4, 2], strides = [1, 1]} : vector<4x8xf32> to vector<4x2xf32>
    %666 = vector.extract_strided_slice %661 {offsets = [0, 6], sizes = [4, 2], strides = [1, 1]} : vector<4x8xf32> to vector<4x2xf32>
    %667 = arith.mulf %664, %637 : vector<4x2xf32>
    %668 = arith.mulf %663, %665 : vector<4x2xf32>
    %669 = arith.addf %667, %668 : vector<4x2xf32>
    %670 = vector.extract_strided_slice %666 {offsets = [0, 0], sizes = [4, 1], strides = [1, 1]} : vector<4x2xf32> to vector<4x1xf32>
    %671 = vector.broadcast %670 : vector<4x1xf32> to vector<4x8xf32>
    %672 = arith.mulf %671, %9 : vector<4x8xf32>
    %673 = vector.extract_strided_slice %666 {offsets = [0, 1], sizes = [4, 1], strides = [1, 1]} : vector<4x2xf32> to vector<4x1xf32>
    %674 = vector.broadcast %673 : vector<4x1xf32> to vector<4x8xf32>
    %675 = arith.mulf %674, %12 : vector<4x8xf32>
    %676 = math.tanh %669 : vector<4x2xf32>
    %677 = vector.extract_strided_slice %43 {offsets = [0, 20], sizes = [4, 1], strides = [1, 1]} : vector<4x30xf32> to vector<4x1xf32>
    %678 = vector.broadcast %677 : vector<4x1xf32> to vector<4x8xf32>
    %679 = arith.mulf %678, %3 : vector<4x8xf32>
    %680 = arith.addf %679, %6 : vector<4x8xf32>
    %681 = vector.extract_strided_slice %676 {offsets = [0, 0], sizes = [4, 1], strides = [1, 1]} : vector<4x2xf32> to vector<4x1xf32>
    %682 = vector.broadcast %681 : vector<4x1xf32> to vector<4x8xf32>
    %683 = arith.mulf %682, %672 : vector<4x8xf32>
    %684 = arith.addf %680, %683 : vector<4x8xf32>
    %685 = vector.extract_strided_slice %676 {offsets = [0, 1], sizes = [4, 1], strides = [1, 1]} : vector<4x2xf32> to vector<4x1xf32>
    %686 = vector.broadcast %685 : vector<4x1xf32> to vector<4x8xf32>
    %687 = arith.mulf %686, %675 : vector<4x8xf32>
    %688 = arith.addf %684, %687 : vector<4x8xf32>
    %689 = arith.negf %688 : vector<4x8xf32>
    %690 = math.exp %689 : vector<4x8xf32>
    %cst_23 = arith.constant 1.000000e+00 : f32
    %691 = vector.broadcast %cst_23 : f32 to vector<4x8xf32>
    %692 = arith.addf %691, %690 : vector<4x8xf32>
    %693 = arith.divf %691, %692 : vector<4x8xf32>
    %694 = math.tanh %688 : vector<4x8xf32>
    %695 = vector.extract_strided_slice %693 {offsets = [0, 0], sizes = [4, 2], strides = [1, 1]} : vector<4x8xf32> to vector<4x2xf32>
    %696 = vector.extract_strided_slice %693 {offsets = [0, 2], sizes = [4, 2], strides = [1, 1]} : vector<4x8xf32> to vector<4x2xf32>
    %697 = vector.extract_strided_slice %694 {offsets = [0, 4], sizes = [4, 2], strides = [1, 1]} : vector<4x8xf32> to vector<4x2xf32>
    %698 = vector.extract_strided_slice %693 {offsets = [0, 6], sizes = [4, 2], strides = [1, 1]} : vector<4x8xf32> to vector<4x2xf32>
    %699 = arith.mulf %696, %669 : vector<4x2xf32>
    %700 = arith.mulf %695, %697 : vector<4x2xf32>
    %701 = arith.addf %699, %700 : vector<4x2xf32>
    %702 = vector.extract_strided_slice %698 {offsets = [0, 0], sizes = [4, 1], strides = [1, 1]} : vector<4x2xf32> to vector<4x1xf32>
    %703 = vector.broadcast %702 : vector<4x1xf32> to vector<4x8xf32>
    %704 = arith.mulf %703, %9 : vector<4x8xf32>
    %705 = vector.extract_strided_slice %698 {offsets = [0, 1], sizes = [4, 1], strides = [1, 1]} : vector<4x2xf32> to vector<4x1xf32>
    %706 = vector.broadcast %705 : vector<4x1xf32> to vector<4x8xf32>
    %707 = arith.mulf %706, %12 : vector<4x8xf32>
    %708 = math.tanh %701 : vector<4x2xf32>
    %709 = vector.extract_strided_slice %43 {offsets = [0, 21], sizes = [4, 1], strides = [1, 1]} : vector<4x30xf32> to vector<4x1xf32>
    %710 = vector.broadcast %709 : vector<4x1xf32> to vector<4x8xf32>
    %711 = arith.mulf %710, %3 : vector<4x8xf32>
    %712 = arith.addf %711, %6 : vector<4x8xf32>
    %713 = vector.extract_strided_slice %708 {offsets = [0, 0], sizes = [4, 1], strides = [1, 1]} : vector<4x2xf32> to vector<4x1xf32>
    %714 = vector.broadcast %713 : vector<4x1xf32> to vector<4x8xf32>
    %715 = arith.mulf %714, %704 : vector<4x8xf32>
    %716 = arith.addf %712, %715 : vector<4x8xf32>
    %717 = vector.extract_strided_slice %708 {offsets = [0, 1], sizes = [4, 1], strides = [1, 1]} : vector<4x2xf32> to vector<4x1xf32>
    %718 = vector.broadcast %717 : vector<4x1xf32> to vector<4x8xf32>
    %719 = arith.mulf %718, %707 : vector<4x8xf32>
    %720 = arith.addf %716, %719 : vector<4x8xf32>
    %721 = arith.negf %720 : vector<4x8xf32>
    %722 = math.exp %721 : vector<4x8xf32>
    %cst_24 = arith.constant 1.000000e+00 : f32
    %723 = vector.broadcast %cst_24 : f32 to vector<4x8xf32>
    %724 = arith.addf %723, %722 : vector<4x8xf32>
    %725 = arith.divf %723, %724 : vector<4x8xf32>
    %726 = math.tanh %720 : vector<4x8xf32>
    %727 = vector.extract_strided_slice %725 {offsets = [0, 0], sizes = [4, 2], strides = [1, 1]} : vector<4x8xf32> to vector<4x2xf32>
    %728 = vector.extract_strided_slice %725 {offsets = [0, 2], sizes = [4, 2], strides = [1, 1]} : vector<4x8xf32> to vector<4x2xf32>
    %729 = vector.extract_strided_slice %726 {offsets = [0, 4], sizes = [4, 2], strides = [1, 1]} : vector<4x8xf32> to vector<4x2xf32>
    %730 = vector.extract_strided_slice %725 {offsets = [0, 6], sizes = [4, 2], strides = [1, 1]} : vector<4x8xf32> to vector<4x2xf32>
    %731 = arith.mulf %728, %701 : vector<4x2xf32>
    %732 = arith.mulf %727, %729 : vector<4x2xf32>
    %733 = arith.addf %731, %732 : vector<4x2xf32>
    %734 = vector.extract_strided_slice %730 {offsets = [0, 0], sizes = [4, 1], strides = [1, 1]} : vector<4x2xf32> to vector<4x1xf32>
    %735 = vector.broadcast %734 : vector<4x1xf32> to vector<4x8xf32>
    %736 = arith.mulf %735, %9 : vector<4x8xf32>
    %737 = vector.extract_strided_slice %730 {offsets = [0, 1], sizes = [4, 1], strides = [1, 1]} : vector<4x2xf32> to vector<4x1xf32>
    %738 = vector.broadcast %737 : vector<4x1xf32> to vector<4x8xf32>
    %739 = arith.mulf %738, %12 : vector<4x8xf32>
    %740 = math.tanh %733 : vector<4x2xf32>
    %741 = vector.extract_strided_slice %43 {offsets = [0, 22], sizes = [4, 1], strides = [1, 1]} : vector<4x30xf32> to vector<4x1xf32>
    %742 = vector.broadcast %741 : vector<4x1xf32> to vector<4x8xf32>
    %743 = arith.mulf %742, %3 : vector<4x8xf32>
    %744 = arith.addf %743, %6 : vector<4x8xf32>
    %745 = vector.extract_strided_slice %740 {offsets = [0, 0], sizes = [4, 1], strides = [1, 1]} : vector<4x2xf32> to vector<4x1xf32>
    %746 = vector.broadcast %745 : vector<4x1xf32> to vector<4x8xf32>
    %747 = arith.mulf %746, %736 : vector<4x8xf32>
    %748 = arith.addf %744, %747 : vector<4x8xf32>
    %749 = vector.extract_strided_slice %740 {offsets = [0, 1], sizes = [4, 1], strides = [1, 1]} : vector<4x2xf32> to vector<4x1xf32>
    %750 = vector.broadcast %749 : vector<4x1xf32> to vector<4x8xf32>
    %751 = arith.mulf %750, %739 : vector<4x8xf32>
    %752 = arith.addf %748, %751 : vector<4x8xf32>
    %753 = arith.negf %752 : vector<4x8xf32>
    %754 = math.exp %753 : vector<4x8xf32>
    %cst_25 = arith.constant 1.000000e+00 : f32
    %755 = vector.broadcast %cst_25 : f32 to vector<4x8xf32>
    %756 = arith.addf %755, %754 : vector<4x8xf32>
    %757 = arith.divf %755, %756 : vector<4x8xf32>
    %758 = math.tanh %752 : vector<4x8xf32>
    %759 = vector.extract_strided_slice %757 {offsets = [0, 0], sizes = [4, 2], strides = [1, 1]} : vector<4x8xf32> to vector<4x2xf32>
    %760 = vector.extract_strided_slice %757 {offsets = [0, 2], sizes = [4, 2], strides = [1, 1]} : vector<4x8xf32> to vector<4x2xf32>
    %761 = vector.extract_strided_slice %758 {offsets = [0, 4], sizes = [4, 2], strides = [1, 1]} : vector<4x8xf32> to vector<4x2xf32>
    %762 = vector.extract_strided_slice %757 {offsets = [0, 6], sizes = [4, 2], strides = [1, 1]} : vector<4x8xf32> to vector<4x2xf32>
    %763 = arith.mulf %760, %733 : vector<4x2xf32>
    %764 = arith.mulf %759, %761 : vector<4x2xf32>
    %765 = arith.addf %763, %764 : vector<4x2xf32>
    %766 = vector.extract_strided_slice %762 {offsets = [0, 0], sizes = [4, 1], strides = [1, 1]} : vector<4x2xf32> to vector<4x1xf32>
    %767 = vector.broadcast %766 : vector<4x1xf32> to vector<4x8xf32>
    %768 = arith.mulf %767, %9 : vector<4x8xf32>
    %769 = vector.extract_strided_slice %762 {offsets = [0, 1], sizes = [4, 1], strides = [1, 1]} : vector<4x2xf32> to vector<4x1xf32>
    %770 = vector.broadcast %769 : vector<4x1xf32> to vector<4x8xf32>
    %771 = arith.mulf %770, %12 : vector<4x8xf32>
    %772 = math.tanh %765 : vector<4x2xf32>
    %773 = vector.extract_strided_slice %43 {offsets = [0, 23], sizes = [4, 1], strides = [1, 1]} : vector<4x30xf32> to vector<4x1xf32>
    %774 = vector.broadcast %773 : vector<4x1xf32> to vector<4x8xf32>
    %775 = arith.mulf %774, %3 : vector<4x8xf32>
    %776 = arith.addf %775, %6 : vector<4x8xf32>
    %777 = vector.extract_strided_slice %772 {offsets = [0, 0], sizes = [4, 1], strides = [1, 1]} : vector<4x2xf32> to vector<4x1xf32>
    %778 = vector.broadcast %777 : vector<4x1xf32> to vector<4x8xf32>
    %779 = arith.mulf %778, %768 : vector<4x8xf32>
    %780 = arith.addf %776, %779 : vector<4x8xf32>
    %781 = vector.extract_strided_slice %772 {offsets = [0, 1], sizes = [4, 1], strides = [1, 1]} : vector<4x2xf32> to vector<4x1xf32>
    %782 = vector.broadcast %781 : vector<4x1xf32> to vector<4x8xf32>
    %783 = arith.mulf %782, %771 : vector<4x8xf32>
    %784 = arith.addf %780, %783 : vector<4x8xf32>
    %785 = arith.negf %784 : vector<4x8xf32>
    %786 = math.exp %785 : vector<4x8xf32>
    %cst_26 = arith.constant 1.000000e+00 : f32
    %787 = vector.broadcast %cst_26 : f32 to vector<4x8xf32>
    %788 = arith.addf %787, %786 : vector<4x8xf32>
    %789 = arith.divf %787, %788 : vector<4x8xf32>
    %790 = math.tanh %784 : vector<4x8xf32>
    %791 = vector.extract_strided_slice %789 {offsets = [0, 0], sizes = [4, 2], strides = [1, 1]} : vector<4x8xf32> to vector<4x2xf32>
    %792 = vector.extract_strided_slice %789 {offsets = [0, 2], sizes = [4, 2], strides = [1, 1]} : vector<4x8xf32> to vector<4x2xf32>
    %793 = vector.extract_strided_slice %790 {offsets = [0, 4], sizes = [4, 2], strides = [1, 1]} : vector<4x8xf32> to vector<4x2xf32>
    %794 = vector.extract_strided_slice %789 {offsets = [0, 6], sizes = [4, 2], strides = [1, 1]} : vector<4x8xf32> to vector<4x2xf32>
    %795 = arith.mulf %792, %765 : vector<4x2xf32>
    %796 = arith.mulf %791, %793 : vector<4x2xf32>
    %797 = arith.addf %795, %796 : vector<4x2xf32>
    %798 = vector.extract_strided_slice %794 {offsets = [0, 0], sizes = [4, 1], strides = [1, 1]} : vector<4x2xf32> to vector<4x1xf32>
    %799 = vector.broadcast %798 : vector<4x1xf32> to vector<4x8xf32>
    %800 = arith.mulf %799, %9 : vector<4x8xf32>
    %801 = vector.extract_strided_slice %794 {offsets = [0, 1], sizes = [4, 1], strides = [1, 1]} : vector<4x2xf32> to vector<4x1xf32>
    %802 = vector.broadcast %801 : vector<4x1xf32> to vector<4x8xf32>
    %803 = arith.mulf %802, %12 : vector<4x8xf32>
    %804 = math.tanh %797 : vector<4x2xf32>
    %805 = vector.extract_strided_slice %43 {offsets = [0, 24], sizes = [4, 1], strides = [1, 1]} : vector<4x30xf32> to vector<4x1xf32>
    %806 = vector.broadcast %805 : vector<4x1xf32> to vector<4x8xf32>
    %807 = arith.mulf %806, %3 : vector<4x8xf32>
    %808 = arith.addf %807, %6 : vector<4x8xf32>
    %809 = vector.extract_strided_slice %804 {offsets = [0, 0], sizes = [4, 1], strides = [1, 1]} : vector<4x2xf32> to vector<4x1xf32>
    %810 = vector.broadcast %809 : vector<4x1xf32> to vector<4x8xf32>
    %811 = arith.mulf %810, %800 : vector<4x8xf32>
    %812 = arith.addf %808, %811 : vector<4x8xf32>
    %813 = vector.extract_strided_slice %804 {offsets = [0, 1], sizes = [4, 1], strides = [1, 1]} : vector<4x2xf32> to vector<4x1xf32>
    %814 = vector.broadcast %813 : vector<4x1xf32> to vector<4x8xf32>
    %815 = arith.mulf %814, %803 : vector<4x8xf32>
    %816 = arith.addf %812, %815 : vector<4x8xf32>
    %817 = arith.negf %816 : vector<4x8xf32>
    %818 = math.exp %817 : vector<4x8xf32>
    %cst_27 = arith.constant 1.000000e+00 : f32
    %819 = vector.broadcast %cst_27 : f32 to vector<4x8xf32>
    %820 = arith.addf %819, %818 : vector<4x8xf32>
    %821 = arith.divf %819, %820 : vector<4x8xf32>
    %822 = math.tanh %816 : vector<4x8xf32>
    %823 = vector.extract_strided_slice %821 {offsets = [0, 0], sizes = [4, 2], strides = [1, 1]} : vector<4x8xf32> to vector<4x2xf32>
    %824 = vector.extract_strided_slice %821 {offsets = [0, 2], sizes = [4, 2], strides = [1, 1]} : vector<4x8xf32> to vector<4x2xf32>
    %825 = vector.extract_strided_slice %822 {offsets = [0, 4], sizes = [4, 2], strides = [1, 1]} : vector<4x8xf32> to vector<4x2xf32>
    %826 = vector.extract_strided_slice %821 {offsets = [0, 6], sizes = [4, 2], strides = [1, 1]} : vector<4x8xf32> to vector<4x2xf32>
    %827 = arith.mulf %824, %797 : vector<4x2xf32>
    %828 = arith.mulf %823, %825 : vector<4x2xf32>
    %829 = arith.addf %827, %828 : vector<4x2xf32>
    %830 = vector.extract_strided_slice %826 {offsets = [0, 0], sizes = [4, 1], strides = [1, 1]} : vector<4x2xf32> to vector<4x1xf32>
    %831 = vector.broadcast %830 : vector<4x1xf32> to vector<4x8xf32>
    %832 = arith.mulf %831, %9 : vector<4x8xf32>
    %833 = vector.extract_strided_slice %826 {offsets = [0, 1], sizes = [4, 1], strides = [1, 1]} : vector<4x2xf32> to vector<4x1xf32>
    %834 = vector.broadcast %833 : vector<4x1xf32> to vector<4x8xf32>
    %835 = arith.mulf %834, %12 : vector<4x8xf32>
    %836 = math.tanh %829 : vector<4x2xf32>
    %837 = vector.extract_strided_slice %43 {offsets = [0, 25], sizes = [4, 1], strides = [1, 1]} : vector<4x30xf32> to vector<4x1xf32>
    %838 = vector.broadcast %837 : vector<4x1xf32> to vector<4x8xf32>
    %839 = arith.mulf %838, %3 : vector<4x8xf32>
    %840 = arith.addf %839, %6 : vector<4x8xf32>
    %841 = vector.extract_strided_slice %836 {offsets = [0, 0], sizes = [4, 1], strides = [1, 1]} : vector<4x2xf32> to vector<4x1xf32>
    %842 = vector.broadcast %841 : vector<4x1xf32> to vector<4x8xf32>
    %843 = arith.mulf %842, %832 : vector<4x8xf32>
    %844 = arith.addf %840, %843 : vector<4x8xf32>
    %845 = vector.extract_strided_slice %836 {offsets = [0, 1], sizes = [4, 1], strides = [1, 1]} : vector<4x2xf32> to vector<4x1xf32>
    %846 = vector.broadcast %845 : vector<4x1xf32> to vector<4x8xf32>
    %847 = arith.mulf %846, %835 : vector<4x8xf32>
    %848 = arith.addf %844, %847 : vector<4x8xf32>
    %849 = arith.negf %848 : vector<4x8xf32>
    %850 = math.exp %849 : vector<4x8xf32>
    %cst_28 = arith.constant 1.000000e+00 : f32
    %851 = vector.broadcast %cst_28 : f32 to vector<4x8xf32>
    %852 = arith.addf %851, %850 : vector<4x8xf32>
    %853 = arith.divf %851, %852 : vector<4x8xf32>
    %854 = math.tanh %848 : vector<4x8xf32>
    %855 = vector.extract_strided_slice %853 {offsets = [0, 0], sizes = [4, 2], strides = [1, 1]} : vector<4x8xf32> to vector<4x2xf32>
    %856 = vector.extract_strided_slice %853 {offsets = [0, 2], sizes = [4, 2], strides = [1, 1]} : vector<4x8xf32> to vector<4x2xf32>
    %857 = vector.extract_strided_slice %854 {offsets = [0, 4], sizes = [4, 2], strides = [1, 1]} : vector<4x8xf32> to vector<4x2xf32>
    %858 = vector.extract_strided_slice %853 {offsets = [0, 6], sizes = [4, 2], strides = [1, 1]} : vector<4x8xf32> to vector<4x2xf32>
    %859 = arith.mulf %856, %829 : vector<4x2xf32>
    %860 = arith.mulf %855, %857 : vector<4x2xf32>
    %861 = arith.addf %859, %860 : vector<4x2xf32>
    %862 = vector.extract_strided_slice %858 {offsets = [0, 0], sizes = [4, 1], strides = [1, 1]} : vector<4x2xf32> to vector<4x1xf32>
    %863 = vector.broadcast %862 : vector<4x1xf32> to vector<4x8xf32>
    %864 = arith.mulf %863, %9 : vector<4x8xf32>
    %865 = vector.extract_strided_slice %858 {offsets = [0, 1], sizes = [4, 1], strides = [1, 1]} : vector<4x2xf32> to vector<4x1xf32>
    %866 = vector.broadcast %865 : vector<4x1xf32> to vector<4x8xf32>
    %867 = arith.mulf %866, %12 : vector<4x8xf32>
    %868 = math.tanh %861 : vector<4x2xf32>
    %869 = vector.extract_strided_slice %43 {offsets = [0, 26], sizes = [4, 1], strides = [1, 1]} : vector<4x30xf32> to vector<4x1xf32>
    %870 = vector.broadcast %869 : vector<4x1xf32> to vector<4x8xf32>
    %871 = arith.mulf %870, %3 : vector<4x8xf32>
    %872 = arith.addf %871, %6 : vector<4x8xf32>
    %873 = vector.extract_strided_slice %868 {offsets = [0, 0], sizes = [4, 1], strides = [1, 1]} : vector<4x2xf32> to vector<4x1xf32>
    %874 = vector.broadcast %873 : vector<4x1xf32> to vector<4x8xf32>
    %875 = arith.mulf %874, %864 : vector<4x8xf32>
    %876 = arith.addf %872, %875 : vector<4x8xf32>
    %877 = vector.extract_strided_slice %868 {offsets = [0, 1], sizes = [4, 1], strides = [1, 1]} : vector<4x2xf32> to vector<4x1xf32>
    %878 = vector.broadcast %877 : vector<4x1xf32> to vector<4x8xf32>
    %879 = arith.mulf %878, %867 : vector<4x8xf32>
    %880 = arith.addf %876, %879 : vector<4x8xf32>
    %881 = arith.negf %880 : vector<4x8xf32>
    %882 = math.exp %881 : vector<4x8xf32>
    %cst_29 = arith.constant 1.000000e+00 : f32
    %883 = vector.broadcast %cst_29 : f32 to vector<4x8xf32>
    %884 = arith.addf %883, %882 : vector<4x8xf32>
    %885 = arith.divf %883, %884 : vector<4x8xf32>
    %886 = math.tanh %880 : vector<4x8xf32>
    %887 = vector.extract_strided_slice %885 {offsets = [0, 0], sizes = [4, 2], strides = [1, 1]} : vector<4x8xf32> to vector<4x2xf32>
    %888 = vector.extract_strided_slice %885 {offsets = [0, 2], sizes = [4, 2], strides = [1, 1]} : vector<4x8xf32> to vector<4x2xf32>
    %889 = vector.extract_strided_slice %886 {offsets = [0, 4], sizes = [4, 2], strides = [1, 1]} : vector<4x8xf32> to vector<4x2xf32>
    %890 = vector.extract_strided_slice %885 {offsets = [0, 6], sizes = [4, 2], strides = [1, 1]} : vector<4x8xf32> to vector<4x2xf32>
    %891 = arith.mulf %888, %861 : vector<4x2xf32>
    %892 = arith.mulf %887, %889 : vector<4x2xf32>
    %893 = arith.addf %891, %892 : vector<4x2xf32>
    %894 = vector.extract_strided_slice %890 {offsets = [0, 0], sizes = [4, 1], strides = [1, 1]} : vector<4x2xf32> to vector<4x1xf32>
    %895 = vector.broadcast %894 : vector<4x1xf32> to vector<4x8xf32>
    %896 = arith.mulf %895, %9 : vector<4x8xf32>
    %897 = vector.extract_strided_slice %890 {offsets = [0, 1], sizes = [4, 1], strides = [1, 1]} : vector<4x2xf32> to vector<4x1xf32>
    %898 = vector.broadcast %897 : vector<4x1xf32> to vector<4x8xf32>
    %899 = arith.mulf %898, %12 : vector<4x8xf32>
    %900 = math.tanh %893 : vector<4x2xf32>
    %901 = vector.extract_strided_slice %43 {offsets = [0, 27], sizes = [4, 1], strides = [1, 1]} : vector<4x30xf32> to vector<4x1xf32>
    %902 = vector.broadcast %901 : vector<4x1xf32> to vector<4x8xf32>
    %903 = arith.mulf %902, %3 : vector<4x8xf32>
    %904 = arith.addf %903, %6 : vector<4x8xf32>
    %905 = vector.extract_strided_slice %900 {offsets = [0, 0], sizes = [4, 1], strides = [1, 1]} : vector<4x2xf32> to vector<4x1xf32>
    %906 = vector.broadcast %905 : vector<4x1xf32> to vector<4x8xf32>
    %907 = arith.mulf %906, %896 : vector<4x8xf32>
    %908 = arith.addf %904, %907 : vector<4x8xf32>
    %909 = vector.extract_strided_slice %900 {offsets = [0, 1], sizes = [4, 1], strides = [1, 1]} : vector<4x2xf32> to vector<4x1xf32>
    %910 = vector.broadcast %909 : vector<4x1xf32> to vector<4x8xf32>
    %911 = arith.mulf %910, %899 : vector<4x8xf32>
    %912 = arith.addf %908, %911 : vector<4x8xf32>
    %913 = arith.negf %912 : vector<4x8xf32>
    %914 = math.exp %913 : vector<4x8xf32>
    %cst_30 = arith.constant 1.000000e+00 : f32
    %915 = vector.broadcast %cst_30 : f32 to vector<4x8xf32>
    %916 = arith.addf %915, %914 : vector<4x8xf32>
    %917 = arith.divf %915, %916 : vector<4x8xf32>
    %918 = math.tanh %912 : vector<4x8xf32>
    %919 = vector.extract_strided_slice %917 {offsets = [0, 0], sizes = [4, 2], strides = [1, 1]} : vector<4x8xf32> to vector<4x2xf32>
    %920 = vector.extract_strided_slice %917 {offsets = [0, 2], sizes = [4, 2], strides = [1, 1]} : vector<4x8xf32> to vector<4x2xf32>
    %921 = vector.extract_strided_slice %918 {offsets = [0, 4], sizes = [4, 2], strides = [1, 1]} : vector<4x8xf32> to vector<4x2xf32>
    %922 = vector.extract_strided_slice %917 {offsets = [0, 6], sizes = [4, 2], strides = [1, 1]} : vector<4x8xf32> to vector<4x2xf32>
    %923 = arith.mulf %920, %893 : vector<4x2xf32>
    %924 = arith.mulf %919, %921 : vector<4x2xf32>
    %925 = arith.addf %923, %924 : vector<4x2xf32>
    %926 = vector.extract_strided_slice %922 {offsets = [0, 0], sizes = [4, 1], strides = [1, 1]} : vector<4x2xf32> to vector<4x1xf32>
    %927 = vector.broadcast %926 : vector<4x1xf32> to vector<4x8xf32>
    %928 = arith.mulf %927, %9 : vector<4x8xf32>
    %929 = vector.extract_strided_slice %922 {offsets = [0, 1], sizes = [4, 1], strides = [1, 1]} : vector<4x2xf32> to vector<4x1xf32>
    %930 = vector.broadcast %929 : vector<4x1xf32> to vector<4x8xf32>
    %931 = arith.mulf %930, %12 : vector<4x8xf32>
    %932 = math.tanh %925 : vector<4x2xf32>
    %933 = vector.extract_strided_slice %43 {offsets = [0, 28], sizes = [4, 1], strides = [1, 1]} : vector<4x30xf32> to vector<4x1xf32>
    %934 = vector.broadcast %933 : vector<4x1xf32> to vector<4x8xf32>
    %935 = arith.mulf %934, %3 : vector<4x8xf32>
    %936 = arith.addf %935, %6 : vector<4x8xf32>
    %937 = vector.extract_strided_slice %932 {offsets = [0, 0], sizes = [4, 1], strides = [1, 1]} : vector<4x2xf32> to vector<4x1xf32>
    %938 = vector.broadcast %937 : vector<4x1xf32> to vector<4x8xf32>
    %939 = arith.mulf %938, %928 : vector<4x8xf32>
    %940 = arith.addf %936, %939 : vector<4x8xf32>
    %941 = vector.extract_strided_slice %932 {offsets = [0, 1], sizes = [4, 1], strides = [1, 1]} : vector<4x2xf32> to vector<4x1xf32>
    %942 = vector.broadcast %941 : vector<4x1xf32> to vector<4x8xf32>
    %943 = arith.mulf %942, %931 : vector<4x8xf32>
    %944 = arith.addf %940, %943 : vector<4x8xf32>
    %945 = arith.negf %944 : vector<4x8xf32>
    %946 = math.exp %945 : vector<4x8xf32>
    %cst_31 = arith.constant 1.000000e+00 : f32
    %947 = vector.broadcast %cst_31 : f32 to vector<4x8xf32>
    %948 = arith.addf %947, %946 : vector<4x8xf32>
    %949 = arith.divf %947, %948 : vector<4x8xf32>
    %950 = math.tanh %944 : vector<4x8xf32>
    %951 = vector.extract_strided_slice %949 {offsets = [0, 0], sizes = [4, 2], strides = [1, 1]} : vector<4x8xf32> to vector<4x2xf32>
    %952 = vector.extract_strided_slice %949 {offsets = [0, 2], sizes = [4, 2], strides = [1, 1]} : vector<4x8xf32> to vector<4x2xf32>
    %953 = vector.extract_strided_slice %950 {offsets = [0, 4], sizes = [4, 2], strides = [1, 1]} : vector<4x8xf32> to vector<4x2xf32>
    %954 = vector.extract_strided_slice %949 {offsets = [0, 6], sizes = [4, 2], strides = [1, 1]} : vector<4x8xf32> to vector<4x2xf32>
    %955 = arith.mulf %952, %925 : vector<4x2xf32>
    %956 = arith.mulf %951, %953 : vector<4x2xf32>
    %957 = arith.addf %955, %956 : vector<4x2xf32>
    %958 = vector.extract_strided_slice %954 {offsets = [0, 0], sizes = [4, 1], strides = [1, 1]} : vector<4x2xf32> to vector<4x1xf32>
    %959 = vector.broadcast %958 : vector<4x1xf32> to vector<4x8xf32>
    %960 = arith.mulf %959, %9 : vector<4x8xf32>
    %961 = vector.extract_strided_slice %954 {offsets = [0, 1], sizes = [4, 1], strides = [1, 1]} : vector<4x2xf32> to vector<4x1xf32>
    %962 = vector.broadcast %961 : vector<4x1xf32> to vector<4x8xf32>
    %963 = arith.mulf %962, %12 : vector<4x8xf32>
    %964 = math.tanh %957 : vector<4x2xf32>
    %965 = vector.extract_strided_slice %43 {offsets = [0, 29], sizes = [4, 1], strides = [1, 1]} : vector<4x30xf32> to vector<4x1xf32>
    %966 = vector.broadcast %965 : vector<4x1xf32> to vector<4x8xf32>
    %967 = arith.mulf %966, %3 : vector<4x8xf32>
    %968 = arith.addf %967, %6 : vector<4x8xf32>
    %969 = vector.extract_strided_slice %964 {offsets = [0, 0], sizes = [4, 1], strides = [1, 1]} : vector<4x2xf32> to vector<4x1xf32>
    %970 = vector.broadcast %969 : vector<4x1xf32> to vector<4x8xf32>
    %971 = arith.mulf %970, %960 : vector<4x8xf32>
    %972 = arith.addf %968, %971 : vector<4x8xf32>
    %973 = vector.extract_strided_slice %964 {offsets = [0, 1], sizes = [4, 1], strides = [1, 1]} : vector<4x2xf32> to vector<4x1xf32>
    %974 = vector.broadcast %973 : vector<4x1xf32> to vector<4x8xf32>
    %975 = arith.mulf %974, %963 : vector<4x8xf32>
    %976 = arith.addf %972, %975 : vector<4x8xf32>
    %977 = arith.negf %976 : vector<4x8xf32>
    %978 = math.exp %977 : vector<4x8xf32>
    %cst_32 = arith.constant 1.000000e+00 : f32
    %979 = vector.broadcast %cst_32 : f32 to vector<4x8xf32>
    %980 = arith.addf %979, %978 : vector<4x8xf32>
    %981 = arith.divf %979, %980 : vector<4x8xf32>
    %982 = math.tanh %976 : vector<4x8xf32>
    %983 = vector.extract_strided_slice %981 {offsets = [0, 0], sizes = [4, 2], strides = [1, 1]} : vector<4x8xf32> to vector<4x2xf32>
    %984 = vector.extract_strided_slice %981 {offsets = [0, 2], sizes = [4, 2], strides = [1, 1]} : vector<4x8xf32> to vector<4x2xf32>
    %985 = vector.extract_strided_slice %982 {offsets = [0, 4], sizes = [4, 2], strides = [1, 1]} : vector<4x8xf32> to vector<4x2xf32>
    %986 = vector.extract_strided_slice %981 {offsets = [0, 6], sizes = [4, 2], strides = [1, 1]} : vector<4x8xf32> to vector<4x2xf32>
    %987 = arith.mulf %984, %957 : vector<4x2xf32>
    %988 = arith.mulf %983, %985 : vector<4x2xf32>
    %989 = arith.addf %987, %988 : vector<4x2xf32>
    %990 = math.tanh %989 : vector<4x2xf32>
    %991 = arith.mulf %986, %990 : vector<4x2xf32>
    %992 = vector.extract_strided_slice %991 {offsets = [0, 0], sizes = [4, 1], strides = [1, 1]} : vector<4x2xf32> to vector<4x1xf32>
    %993 = vector.broadcast %992 : vector<4x1xf32> to vector<4x10xf32>
    %994 = arith.mulf %993, %15 : vector<4x10xf32>
    %995 = arith.addf %21, %994 : vector<4x10xf32>
    %996 = vector.extract_strided_slice %991 {offsets = [0, 1], sizes = [4, 1], strides = [1, 1]} : vector<4x2xf32> to vector<4x1xf32>
    %997 = vector.broadcast %996 : vector<4x1xf32> to vector<4x10xf32>
    %998 = arith.mulf %997, %18 : vector<4x10xf32>
    %999 = arith.addf %995, %998 : vector<4x10xf32>
    %cst_33 = arith.constant 0.000000e+00 : f32
    %1000 = vector.broadcast %cst_33 : f32 to vector<4x2xf32>
    %1001 = vector.extract_strided_slice %999 {offsets = [0, 0], sizes = [4, 1], strides = [1, 1]} : vector<4x10xf32> to vector<4x1xf32>
    %1002 = vector.broadcast %1001 : vector<4x1xf32> to vector<4x8xf32>
    %1003 = arith.mulf %1002, %24 : vector<4x8xf32>
    %1004 = arith.addf %1003, %27 : vector<4x8xf32>
    %1005 = arith.negf %1004 : vector<4x8xf32>
    %1006 = math.exp %1005 : vector<4x8xf32>
    %cst_34 = arith.constant 1.000000e+00 : f32
    %1007 = vector.broadcast %cst_34 : f32 to vector<4x8xf32>
    %1008 = arith.addf %1007, %1006 : vector<4x8xf32>
    %1009 = arith.divf %1007, %1008 : vector<4x8xf32>
    %1010 = math.tanh %1004 : vector<4x8xf32>
    %1011 = vector.extract_strided_slice %1009 {offsets = [0, 0], sizes = [4, 2], strides = [1, 1]} : vector<4x8xf32> to vector<4x2xf32>
    %1012 = vector.extract_strided_slice %1009 {offsets = [0, 2], sizes = [4, 2], strides = [1, 1]} : vector<4x8xf32> to vector<4x2xf32>
    %1013 = vector.extract_strided_slice %1010 {offsets = [0, 4], sizes = [4, 2], strides = [1, 1]} : vector<4x8xf32> to vector<4x2xf32>
    %1014 = vector.extract_strided_slice %1009 {offsets = [0, 6], sizes = [4, 2], strides = [1, 1]} : vector<4x8xf32> to vector<4x2xf32>
    %1015 = arith.mulf %1012, %1000 : vector<4x2xf32>
    %1016 = arith.mulf %1011, %1013 : vector<4x2xf32>
    %1017 = arith.addf %1015, %1016 : vector<4x2xf32>
    %1018 = vector.extract_strided_slice %1014 {offsets = [0, 0], sizes = [4, 1], strides = [1, 1]} : vector<4x2xf32> to vector<4x1xf32>
    %1019 = vector.broadcast %1018 : vector<4x1xf32> to vector<4x8xf32>
    %1020 = arith.mulf %1019, %30 : vector<4x8xf32>
    %1021 = vector.extract_strided_slice %1014 {offsets = [0, 1], sizes = [4, 1], strides = [1, 1]} : vector<4x2xf32> to vector<4x1xf32>
    %1022 = vector.broadcast %1021 : vector<4x1xf32> to vector<4x8xf32>
    %1023 = arith.mulf %1022, %33 : vector<4x8xf32>
    %1024 = math.tanh %1017 : vector<4x2xf32>
    %1025 = vector.extract_strided_slice %999 {offsets = [0, 1], sizes = [4, 1], strides = [1, 1]} : vector<4x10xf32> to vector<4x1xf32>
    %1026 = vector.broadcast %1025 : vector<4x1xf32> to vector<4x8xf32>
    %1027 = arith.mulf %1026, %24 : vector<4x8xf32>
    %1028 = arith.addf %1027, %27 : vector<4x8xf32>
    %1029 = vector.extract_strided_slice %1024 {offsets = [0, 0], sizes = [4, 1], strides = [1, 1]} : vector<4x2xf32> to vector<4x1xf32>
    %1030 = vector.broadcast %1029 : vector<4x1xf32> to vector<4x8xf32>
    %1031 = arith.mulf %1030, %1020 : vector<4x8xf32>
    %1032 = arith.addf %1028, %1031 : vector<4x8xf32>
    %1033 = vector.extract_strided_slice %1024 {offsets = [0, 1], sizes = [4, 1], strides = [1, 1]} : vector<4x2xf32> to vector<4x1xf32>
    %1034 = vector.broadcast %1033 : vector<4x1xf32> to vector<4x8xf32>
    %1035 = arith.mulf %1034, %1023 : vector<4x8xf32>
    %1036 = arith.addf %1032, %1035 : vector<4x8xf32>
    %1037 = arith.negf %1036 : vector<4x8xf32>
    %1038 = math.exp %1037 : vector<4x8xf32>
    %cst_35 = arith.constant 1.000000e+00 : f32
    %1039 = vector.broadcast %cst_35 : f32 to vector<4x8xf32>
    %1040 = arith.addf %1039, %1038 : vector<4x8xf32>
    %1041 = arith.divf %1039, %1040 : vector<4x8xf32>
    %1042 = math.tanh %1036 : vector<4x8xf32>
    %1043 = vector.extract_strided_slice %1041 {offsets = [0, 0], sizes = [4, 2], strides = [1, 1]} : vector<4x8xf32> to vector<4x2xf32>
    %1044 = vector.extract_strided_slice %1041 {offsets = [0, 2], sizes = [4, 2], strides = [1, 1]} : vector<4x8xf32> to vector<4x2xf32>
    %1045 = vector.extract_strided_slice %1042 {offsets = [0, 4], sizes = [4, 2], strides = [1, 1]} : vector<4x8xf32> to vector<4x2xf32>
    %1046 = vector.extract_strided_slice %1041 {offsets = [0, 6], sizes = [4, 2], strides = [1, 1]} : vector<4x8xf32> to vector<4x2xf32>
    %1047 = arith.mulf %1044, %1017 : vector<4x2xf32>
    %1048 = arith.mulf %1043, %1045 : vector<4x2xf32>
    %1049 = arith.addf %1047, %1048 : vector<4x2xf32>
    %1050 = vector.extract_strided_slice %1046 {offsets = [0, 0], sizes = [4, 1], strides = [1, 1]} : vector<4x2xf32> to vector<4x1xf32>
    %1051 = vector.broadcast %1050 : vector<4x1xf32> to vector<4x8xf32>
    %1052 = arith.mulf %1051, %30 : vector<4x8xf32>
    %1053 = vector.extract_strided_slice %1046 {offsets = [0, 1], sizes = [4, 1], strides = [1, 1]} : vector<4x2xf32> to vector<4x1xf32>
    %1054 = vector.broadcast %1053 : vector<4x1xf32> to vector<4x8xf32>
    %1055 = arith.mulf %1054, %33 : vector<4x8xf32>
    %1056 = math.tanh %1049 : vector<4x2xf32>
    %1057 = vector.extract_strided_slice %999 {offsets = [0, 2], sizes = [4, 1], strides = [1, 1]} : vector<4x10xf32> to vector<4x1xf32>
    %1058 = vector.broadcast %1057 : vector<4x1xf32> to vector<4x8xf32>
    %1059 = arith.mulf %1058, %24 : vector<4x8xf32>
    %1060 = arith.addf %1059, %27 : vector<4x8xf32>
    %1061 = vector.extract_strided_slice %1056 {offsets = [0, 0], sizes = [4, 1], strides = [1, 1]} : vector<4x2xf32> to vector<4x1xf32>
    %1062 = vector.broadcast %1061 : vector<4x1xf32> to vector<4x8xf32>
    %1063 = arith.mulf %1062, %1052 : vector<4x8xf32>
    %1064 = arith.addf %1060, %1063 : vector<4x8xf32>
    %1065 = vector.extract_strided_slice %1056 {offsets = [0, 1], sizes = [4, 1], strides = [1, 1]} : vector<4x2xf32> to vector<4x1xf32>
    %1066 = vector.broadcast %1065 : vector<4x1xf32> to vector<4x8xf32>
    %1067 = arith.mulf %1066, %1055 : vector<4x8xf32>
    %1068 = arith.addf %1064, %1067 : vector<4x8xf32>
    %1069 = arith.negf %1068 : vector<4x8xf32>
    %1070 = math.exp %1069 : vector<4x8xf32>
    %cst_36 = arith.constant 1.000000e+00 : f32
    %1071 = vector.broadcast %cst_36 : f32 to vector<4x8xf32>
    %1072 = arith.addf %1071, %1070 : vector<4x8xf32>
    %1073 = arith.divf %1071, %1072 : vector<4x8xf32>
    %1074 = math.tanh %1068 : vector<4x8xf32>
    %1075 = vector.extract_strided_slice %1073 {offsets = [0, 0], sizes = [4, 2], strides = [1, 1]} : vector<4x8xf32> to vector<4x2xf32>
    %1076 = vector.extract_strided_slice %1073 {offsets = [0, 2], sizes = [4, 2], strides = [1, 1]} : vector<4x8xf32> to vector<4x2xf32>
    %1077 = vector.extract_strided_slice %1074 {offsets = [0, 4], sizes = [4, 2], strides = [1, 1]} : vector<4x8xf32> to vector<4x2xf32>
    %1078 = vector.extract_strided_slice %1073 {offsets = [0, 6], sizes = [4, 2], strides = [1, 1]} : vector<4x8xf32> to vector<4x2xf32>
    %1079 = arith.mulf %1076, %1049 : vector<4x2xf32>
    %1080 = arith.mulf %1075, %1077 : vector<4x2xf32>
    %1081 = arith.addf %1079, %1080 : vector<4x2xf32>
    %1082 = vector.extract_strided_slice %1078 {offsets = [0, 0], sizes = [4, 1], strides = [1, 1]} : vector<4x2xf32> to vector<4x1xf32>
    %1083 = vector.broadcast %1082 : vector<4x1xf32> to vector<4x8xf32>
    %1084 = arith.mulf %1083, %30 : vector<4x8xf32>
    %1085 = vector.extract_strided_slice %1078 {offsets = [0, 1], sizes = [4, 1], strides = [1, 1]} : vector<4x2xf32> to vector<4x1xf32>
    %1086 = vector.broadcast %1085 : vector<4x1xf32> to vector<4x8xf32>
    %1087 = arith.mulf %1086, %33 : vector<4x8xf32>
    %1088 = math.tanh %1081 : vector<4x2xf32>
    %1089 = vector.extract_strided_slice %999 {offsets = [0, 3], sizes = [4, 1], strides = [1, 1]} : vector<4x10xf32> to vector<4x1xf32>
    %1090 = vector.broadcast %1089 : vector<4x1xf32> to vector<4x8xf32>
    %1091 = arith.mulf %1090, %24 : vector<4x8xf32>
    %1092 = arith.addf %1091, %27 : vector<4x8xf32>
    %1093 = vector.extract_strided_slice %1088 {offsets = [0, 0], sizes = [4, 1], strides = [1, 1]} : vector<4x2xf32> to vector<4x1xf32>
    %1094 = vector.broadcast %1093 : vector<4x1xf32> to vector<4x8xf32>
    %1095 = arith.mulf %1094, %1084 : vector<4x8xf32>
    %1096 = arith.addf %1092, %1095 : vector<4x8xf32>
    %1097 = vector.extract_strided_slice %1088 {offsets = [0, 1], sizes = [4, 1], strides = [1, 1]} : vector<4x2xf32> to vector<4x1xf32>
    %1098 = vector.broadcast %1097 : vector<4x1xf32> to vector<4x8xf32>
    %1099 = arith.mulf %1098, %1087 : vector<4x8xf32>
    %1100 = arith.addf %1096, %1099 : vector<4x8xf32>
    %1101 = arith.negf %1100 : vector<4x8xf32>
    %1102 = math.exp %1101 : vector<4x8xf32>
    %cst_37 = arith.constant 1.000000e+00 : f32
    %1103 = vector.broadcast %cst_37 : f32 to vector<4x8xf32>
    %1104 = arith.addf %1103, %1102 : vector<4x8xf32>
    %1105 = arith.divf %1103, %1104 : vector<4x8xf32>
    %1106 = math.tanh %1100 : vector<4x8xf32>
    %1107 = vector.extract_strided_slice %1105 {offsets = [0, 0], sizes = [4, 2], strides = [1, 1]} : vector<4x8xf32> to vector<4x2xf32>
    %1108 = vector.extract_strided_slice %1105 {offsets = [0, 2], sizes = [4, 2], strides = [1, 1]} : vector<4x8xf32> to vector<4x2xf32>
    %1109 = vector.extract_strided_slice %1106 {offsets = [0, 4], sizes = [4, 2], strides = [1, 1]} : vector<4x8xf32> to vector<4x2xf32>
    %1110 = vector.extract_strided_slice %1105 {offsets = [0, 6], sizes = [4, 2], strides = [1, 1]} : vector<4x8xf32> to vector<4x2xf32>
    %1111 = arith.mulf %1108, %1081 : vector<4x2xf32>
    %1112 = arith.mulf %1107, %1109 : vector<4x2xf32>
    %1113 = arith.addf %1111, %1112 : vector<4x2xf32>
    %1114 = vector.extract_strided_slice %1110 {offsets = [0, 0], sizes = [4, 1], strides = [1, 1]} : vector<4x2xf32> to vector<4x1xf32>
    %1115 = vector.broadcast %1114 : vector<4x1xf32> to vector<4x8xf32>
    %1116 = arith.mulf %1115, %30 : vector<4x8xf32>
    %1117 = vector.extract_strided_slice %1110 {offsets = [0, 1], sizes = [4, 1], strides = [1, 1]} : vector<4x2xf32> to vector<4x1xf32>
    %1118 = vector.broadcast %1117 : vector<4x1xf32> to vector<4x8xf32>
    %1119 = arith.mulf %1118, %33 : vector<4x8xf32>
    %1120 = math.tanh %1113 : vector<4x2xf32>
    %1121 = vector.extract_strided_slice %999 {offsets = [0, 4], sizes = [4, 1], strides = [1, 1]} : vector<4x10xf32> to vector<4x1xf32>
    %1122 = vector.broadcast %1121 : vector<4x1xf32> to vector<4x8xf32>
    %1123 = arith.mulf %1122, %24 : vector<4x8xf32>
    %1124 = arith.addf %1123, %27 : vector<4x8xf32>
    %1125 = vector.extract_strided_slice %1120 {offsets = [0, 0], sizes = [4, 1], strides = [1, 1]} : vector<4x2xf32> to vector<4x1xf32>
    %1126 = vector.broadcast %1125 : vector<4x1xf32> to vector<4x8xf32>
    %1127 = arith.mulf %1126, %1116 : vector<4x8xf32>
    %1128 = arith.addf %1124, %1127 : vector<4x8xf32>
    %1129 = vector.extract_strided_slice %1120 {offsets = [0, 1], sizes = [4, 1], strides = [1, 1]} : vector<4x2xf32> to vector<4x1xf32>
    %1130 = vector.broadcast %1129 : vector<4x1xf32> to vector<4x8xf32>
    %1131 = arith.mulf %1130, %1119 : vector<4x8xf32>
    %1132 = arith.addf %1128, %1131 : vector<4x8xf32>
    %1133 = arith.negf %1132 : vector<4x8xf32>
    %1134 = math.exp %1133 : vector<4x8xf32>
    %cst_38 = arith.constant 1.000000e+00 : f32
    %1135 = vector.broadcast %cst_38 : f32 to vector<4x8xf32>
    %1136 = arith.addf %1135, %1134 : vector<4x8xf32>
    %1137 = arith.divf %1135, %1136 : vector<4x8xf32>
    %1138 = math.tanh %1132 : vector<4x8xf32>
    %1139 = vector.extract_strided_slice %1137 {offsets = [0, 0], sizes = [4, 2], strides = [1, 1]} : vector<4x8xf32> to vector<4x2xf32>
    %1140 = vector.extract_strided_slice %1137 {offsets = [0, 2], sizes = [4, 2], strides = [1, 1]} : vector<4x8xf32> to vector<4x2xf32>
    %1141 = vector.extract_strided_slice %1138 {offsets = [0, 4], sizes = [4, 2], strides = [1, 1]} : vector<4x8xf32> to vector<4x2xf32>
    %1142 = vector.extract_strided_slice %1137 {offsets = [0, 6], sizes = [4, 2], strides = [1, 1]} : vector<4x8xf32> to vector<4x2xf32>
    %1143 = arith.mulf %1140, %1113 : vector<4x2xf32>
    %1144 = arith.mulf %1139, %1141 : vector<4x2xf32>
    %1145 = arith.addf %1143, %1144 : vector<4x2xf32>
    %1146 = vector.extract_strided_slice %1142 {offsets = [0, 0], sizes = [4, 1], strides = [1, 1]} : vector<4x2xf32> to vector<4x1xf32>
    %1147 = vector.broadcast %1146 : vector<4x1xf32> to vector<4x8xf32>
    %1148 = arith.mulf %1147, %30 : vector<4x8xf32>
    %1149 = vector.extract_strided_slice %1142 {offsets = [0, 1], sizes = [4, 1], strides = [1, 1]} : vector<4x2xf32> to vector<4x1xf32>
    %1150 = vector.broadcast %1149 : vector<4x1xf32> to vector<4x8xf32>
    %1151 = arith.mulf %1150, %33 : vector<4x8xf32>
    %1152 = math.tanh %1145 : vector<4x2xf32>
    %1153 = vector.extract_strided_slice %999 {offsets = [0, 5], sizes = [4, 1], strides = [1, 1]} : vector<4x10xf32> to vector<4x1xf32>
    %1154 = vector.broadcast %1153 : vector<4x1xf32> to vector<4x8xf32>
    %1155 = arith.mulf %1154, %24 : vector<4x8xf32>
    %1156 = arith.addf %1155, %27 : vector<4x8xf32>
    %1157 = vector.extract_strided_slice %1152 {offsets = [0, 0], sizes = [4, 1], strides = [1, 1]} : vector<4x2xf32> to vector<4x1xf32>
    %1158 = vector.broadcast %1157 : vector<4x1xf32> to vector<4x8xf32>
    %1159 = arith.mulf %1158, %1148 : vector<4x8xf32>
    %1160 = arith.addf %1156, %1159 : vector<4x8xf32>
    %1161 = vector.extract_strided_slice %1152 {offsets = [0, 1], sizes = [4, 1], strides = [1, 1]} : vector<4x2xf32> to vector<4x1xf32>
    %1162 = vector.broadcast %1161 : vector<4x1xf32> to vector<4x8xf32>
    %1163 = arith.mulf %1162, %1151 : vector<4x8xf32>
    %1164 = arith.addf %1160, %1163 : vector<4x8xf32>
    %1165 = arith.negf %1164 : vector<4x8xf32>
    %1166 = math.exp %1165 : vector<4x8xf32>
    %cst_39 = arith.constant 1.000000e+00 : f32
    %1167 = vector.broadcast %cst_39 : f32 to vector<4x8xf32>
    %1168 = arith.addf %1167, %1166 : vector<4x8xf32>
    %1169 = arith.divf %1167, %1168 : vector<4x8xf32>
    %1170 = math.tanh %1164 : vector<4x8xf32>
    %1171 = vector.extract_strided_slice %1169 {offsets = [0, 0], sizes = [4, 2], strides = [1, 1]} : vector<4x8xf32> to vector<4x2xf32>
    %1172 = vector.extract_strided_slice %1169 {offsets = [0, 2], sizes = [4, 2], strides = [1, 1]} : vector<4x8xf32> to vector<4x2xf32>
    %1173 = vector.extract_strided_slice %1170 {offsets = [0, 4], sizes = [4, 2], strides = [1, 1]} : vector<4x8xf32> to vector<4x2xf32>
    %1174 = vector.extract_strided_slice %1169 {offsets = [0, 6], sizes = [4, 2], strides = [1, 1]} : vector<4x8xf32> to vector<4x2xf32>
    %1175 = arith.mulf %1172, %1145 : vector<4x2xf32>
    %1176 = arith.mulf %1171, %1173 : vector<4x2xf32>
    %1177 = arith.addf %1175, %1176 : vector<4x2xf32>
    %1178 = vector.extract_strided_slice %1174 {offsets = [0, 0], sizes = [4, 1], strides = [1, 1]} : vector<4x2xf32> to vector<4x1xf32>
    %1179 = vector.broadcast %1178 : vector<4x1xf32> to vector<4x8xf32>
    %1180 = arith.mulf %1179, %30 : vector<4x8xf32>
    %1181 = vector.extract_strided_slice %1174 {offsets = [0, 1], sizes = [4, 1], strides = [1, 1]} : vector<4x2xf32> to vector<4x1xf32>
    %1182 = vector.broadcast %1181 : vector<4x1xf32> to vector<4x8xf32>
    %1183 = arith.mulf %1182, %33 : vector<4x8xf32>
    %1184 = math.tanh %1177 : vector<4x2xf32>
    %1185 = vector.extract_strided_slice %999 {offsets = [0, 6], sizes = [4, 1], strides = [1, 1]} : vector<4x10xf32> to vector<4x1xf32>
    %1186 = vector.broadcast %1185 : vector<4x1xf32> to vector<4x8xf32>
    %1187 = arith.mulf %1186, %24 : vector<4x8xf32>
    %1188 = arith.addf %1187, %27 : vector<4x8xf32>
    %1189 = vector.extract_strided_slice %1184 {offsets = [0, 0], sizes = [4, 1], strides = [1, 1]} : vector<4x2xf32> to vector<4x1xf32>
    %1190 = vector.broadcast %1189 : vector<4x1xf32> to vector<4x8xf32>
    %1191 = arith.mulf %1190, %1180 : vector<4x8xf32>
    %1192 = arith.addf %1188, %1191 : vector<4x8xf32>
    %1193 = vector.extract_strided_slice %1184 {offsets = [0, 1], sizes = [4, 1], strides = [1, 1]} : vector<4x2xf32> to vector<4x1xf32>
    %1194 = vector.broadcast %1193 : vector<4x1xf32> to vector<4x8xf32>
    %1195 = arith.mulf %1194, %1183 : vector<4x8xf32>
    %1196 = arith.addf %1192, %1195 : vector<4x8xf32>
    %1197 = arith.negf %1196 : vector<4x8xf32>
    %1198 = math.exp %1197 : vector<4x8xf32>
    %cst_40 = arith.constant 1.000000e+00 : f32
    %1199 = vector.broadcast %cst_40 : f32 to vector<4x8xf32>
    %1200 = arith.addf %1199, %1198 : vector<4x8xf32>
    %1201 = arith.divf %1199, %1200 : vector<4x8xf32>
    %1202 = math.tanh %1196 : vector<4x8xf32>
    %1203 = vector.extract_strided_slice %1201 {offsets = [0, 0], sizes = [4, 2], strides = [1, 1]} : vector<4x8xf32> to vector<4x2xf32>
    %1204 = vector.extract_strided_slice %1201 {offsets = [0, 2], sizes = [4, 2], strides = [1, 1]} : vector<4x8xf32> to vector<4x2xf32>
    %1205 = vector.extract_strided_slice %1202 {offsets = [0, 4], sizes = [4, 2], strides = [1, 1]} : vector<4x8xf32> to vector<4x2xf32>
    %1206 = vector.extract_strided_slice %1201 {offsets = [0, 6], sizes = [4, 2], strides = [1, 1]} : vector<4x8xf32> to vector<4x2xf32>
    %1207 = arith.mulf %1204, %1177 : vector<4x2xf32>
    %1208 = arith.mulf %1203, %1205 : vector<4x2xf32>
    %1209 = arith.addf %1207, %1208 : vector<4x2xf32>
    %1210 = vector.extract_strided_slice %1206 {offsets = [0, 0], sizes = [4, 1], strides = [1, 1]} : vector<4x2xf32> to vector<4x1xf32>
    %1211 = vector.broadcast %1210 : vector<4x1xf32> to vector<4x8xf32>
    %1212 = arith.mulf %1211, %30 : vector<4x8xf32>
    %1213 = vector.extract_strided_slice %1206 {offsets = [0, 1], sizes = [4, 1], strides = [1, 1]} : vector<4x2xf32> to vector<4x1xf32>
    %1214 = vector.broadcast %1213 : vector<4x1xf32> to vector<4x8xf32>
    %1215 = arith.mulf %1214, %33 : vector<4x8xf32>
    %1216 = math.tanh %1209 : vector<4x2xf32>
    %1217 = vector.extract_strided_slice %999 {offsets = [0, 7], sizes = [4, 1], strides = [1, 1]} : vector<4x10xf32> to vector<4x1xf32>
    %1218 = vector.broadcast %1217 : vector<4x1xf32> to vector<4x8xf32>
    %1219 = arith.mulf %1218, %24 : vector<4x8xf32>
    %1220 = arith.addf %1219, %27 : vector<4x8xf32>
    %1221 = vector.extract_strided_slice %1216 {offsets = [0, 0], sizes = [4, 1], strides = [1, 1]} : vector<4x2xf32> to vector<4x1xf32>
    %1222 = vector.broadcast %1221 : vector<4x1xf32> to vector<4x8xf32>
    %1223 = arith.mulf %1222, %1212 : vector<4x8xf32>
    %1224 = arith.addf %1220, %1223 : vector<4x8xf32>
    %1225 = vector.extract_strided_slice %1216 {offsets = [0, 1], sizes = [4, 1], strides = [1, 1]} : vector<4x2xf32> to vector<4x1xf32>
    %1226 = vector.broadcast %1225 : vector<4x1xf32> to vector<4x8xf32>
    %1227 = arith.mulf %1226, %1215 : vector<4x8xf32>
    %1228 = arith.addf %1224, %1227 : vector<4x8xf32>
    %1229 = arith.negf %1228 : vector<4x8xf32>
    %1230 = math.exp %1229 : vector<4x8xf32>
    %cst_41 = arith.constant 1.000000e+00 : f32
    %1231 = vector.broadcast %cst_41 : f32 to vector<4x8xf32>
    %1232 = arith.addf %1231, %1230 : vector<4x8xf32>
    %1233 = arith.divf %1231, %1232 : vector<4x8xf32>
    %1234 = math.tanh %1228 : vector<4x8xf32>
    %1235 = vector.extract_strided_slice %1233 {offsets = [0, 0], sizes = [4, 2], strides = [1, 1]} : vector<4x8xf32> to vector<4x2xf32>
    %1236 = vector.extract_strided_slice %1233 {offsets = [0, 2], sizes = [4, 2], strides = [1, 1]} : vector<4x8xf32> to vector<4x2xf32>
    %1237 = vector.extract_strided_slice %1234 {offsets = [0, 4], sizes = [4, 2], strides = [1, 1]} : vector<4x8xf32> to vector<4x2xf32>
    %1238 = vector.extract_strided_slice %1233 {offsets = [0, 6], sizes = [4, 2], strides = [1, 1]} : vector<4x8xf32> to vector<4x2xf32>
    %1239 = arith.mulf %1236, %1209 : vector<4x2xf32>
    %1240 = arith.mulf %1235, %1237 : vector<4x2xf32>
    %1241 = arith.addf %1239, %1240 : vector<4x2xf32>
    %1242 = vector.extract_strided_slice %1238 {offsets = [0, 0], sizes = [4, 1], strides = [1, 1]} : vector<4x2xf32> to vector<4x1xf32>
    %1243 = vector.broadcast %1242 : vector<4x1xf32> to vector<4x8xf32>
    %1244 = arith.mulf %1243, %30 : vector<4x8xf32>
    %1245 = vector.extract_strided_slice %1238 {offsets = [0, 1], sizes = [4, 1], strides = [1, 1]} : vector<4x2xf32> to vector<4x1xf32>
    %1246 = vector.broadcast %1245 : vector<4x1xf32> to vector<4x8xf32>
    %1247 = arith.mulf %1246, %33 : vector<4x8xf32>
    %1248 = math.tanh %1241 : vector<4x2xf32>
    %1249 = vector.extract_strided_slice %999 {offsets = [0, 8], sizes = [4, 1], strides = [1, 1]} : vector<4x10xf32> to vector<4x1xf32>
    %1250 = vector.broadcast %1249 : vector<4x1xf32> to vector<4x8xf32>
    %1251 = arith.mulf %1250, %24 : vector<4x8xf32>
    %1252 = arith.addf %1251, %27 : vector<4x8xf32>
    %1253 = vector.extract_strided_slice %1248 {offsets = [0, 0], sizes = [4, 1], strides = [1, 1]} : vector<4x2xf32> to vector<4x1xf32>
    %1254 = vector.broadcast %1253 : vector<4x1xf32> to vector<4x8xf32>
    %1255 = arith.mulf %1254, %1244 : vector<4x8xf32>
    %1256 = arith.addf %1252, %1255 : vector<4x8xf32>
    %1257 = vector.extract_strided_slice %1248 {offsets = [0, 1], sizes = [4, 1], strides = [1, 1]} : vector<4x2xf32> to vector<4x1xf32>
    %1258 = vector.broadcast %1257 : vector<4x1xf32> to vector<4x8xf32>
    %1259 = arith.mulf %1258, %1247 : vector<4x8xf32>
    %1260 = arith.addf %1256, %1259 : vector<4x8xf32>
    %1261 = arith.negf %1260 : vector<4x8xf32>
    %1262 = math.exp %1261 : vector<4x8xf32>
    %cst_42 = arith.constant 1.000000e+00 : f32
    %1263 = vector.broadcast %cst_42 : f32 to vector<4x8xf32>
    %1264 = arith.addf %1263, %1262 : vector<4x8xf32>
    %1265 = arith.divf %1263, %1264 : vector<4x8xf32>
    %1266 = math.tanh %1260 : vector<4x8xf32>
    %1267 = vector.extract_strided_slice %1265 {offsets = [0, 0], sizes = [4, 2], strides = [1, 1]} : vector<4x8xf32> to vector<4x2xf32>
    %1268 = vector.extract_strided_slice %1265 {offsets = [0, 2], sizes = [4, 2], strides = [1, 1]} : vector<4x8xf32> to vector<4x2xf32>
    %1269 = vector.extract_strided_slice %1266 {offsets = [0, 4], sizes = [4, 2], strides = [1, 1]} : vector<4x8xf32> to vector<4x2xf32>
    %1270 = vector.extract_strided_slice %1265 {offsets = [0, 6], sizes = [4, 2], strides = [1, 1]} : vector<4x8xf32> to vector<4x2xf32>
    %1271 = arith.mulf %1268, %1241 : vector<4x2xf32>
    %1272 = arith.mulf %1267, %1269 : vector<4x2xf32>
    %1273 = arith.addf %1271, %1272 : vector<4x2xf32>
    %1274 = vector.extract_strided_slice %1270 {offsets = [0, 0], sizes = [4, 1], strides = [1, 1]} : vector<4x2xf32> to vector<4x1xf32>
    %1275 = vector.broadcast %1274 : vector<4x1xf32> to vector<4x8xf32>
    %1276 = arith.mulf %1275, %30 : vector<4x8xf32>
    %1277 = vector.extract_strided_slice %1270 {offsets = [0, 1], sizes = [4, 1], strides = [1, 1]} : vector<4x2xf32> to vector<4x1xf32>
    %1278 = vector.broadcast %1277 : vector<4x1xf32> to vector<4x8xf32>
    %1279 = arith.mulf %1278, %33 : vector<4x8xf32>
    %1280 = math.tanh %1273 : vector<4x2xf32>
    %1281 = vector.extract_strided_slice %999 {offsets = [0, 9], sizes = [4, 1], strides = [1, 1]} : vector<4x10xf32> to vector<4x1xf32>
    %1282 = vector.broadcast %1281 : vector<4x1xf32> to vector<4x8xf32>
    %1283 = arith.mulf %1282, %24 : vector<4x8xf32>
    %1284 = arith.addf %1283, %27 : vector<4x8xf32>
    %1285 = vector.extract_strided_slice %1280 {offsets = [0, 0], sizes = [4, 1], strides = [1, 1]} : vector<4x2xf32> to vector<4x1xf32>
    %1286 = vector.broadcast %1285 : vector<4x1xf32> to vector<4x8xf32>
    %1287 = arith.mulf %1286, %1276 : vector<4x8xf32>
    %1288 = arith.addf %1284, %1287 : vector<4x8xf32>
    %1289 = vector.extract_strided_slice %1280 {offsets = [0, 1], sizes = [4, 1], strides = [1, 1]} : vector<4x2xf32> to vector<4x1xf32>
    %1290 = vector.broadcast %1289 : vector<4x1xf32> to vector<4x8xf32>
    %1291 = arith.mulf %1290, %1279 : vector<4x8xf32>
    %1292 = arith.addf %1288, %1291 : vector<4x8xf32>
    %1293 = arith.negf %1292 : vector<4x8xf32>
    %1294 = math.exp %1293 : vector<4x8xf32>
    %cst_43 = arith.constant 1.000000e+00 : f32
    %1295 = vector.broadcast %cst_43 : f32 to vector<4x8xf32>
    %1296 = arith.addf %1295, %1294 : vector<4x8xf32>
    %1297 = arith.divf %1295, %1296 : vector<4x8xf32>
    %1298 = math.tanh %1292 : vector<4x8xf32>
    %1299 = vector.extract_strided_slice %1297 {offsets = [0, 0], sizes = [4, 2], strides = [1, 1]} : vector<4x8xf32> to vector<4x2xf32>
    %1300 = vector.extract_strided_slice %1297 {offsets = [0, 2], sizes = [4, 2], strides = [1, 1]} : vector<4x8xf32> to vector<4x2xf32>
    %1301 = vector.extract_strided_slice %1298 {offsets = [0, 4], sizes = [4, 2], strides = [1, 1]} : vector<4x8xf32> to vector<4x2xf32>
    %1302 = vector.extract_strided_slice %1297 {offsets = [0, 6], sizes = [4, 2], strides = [1, 1]} : vector<4x8xf32> to vector<4x2xf32>
    %1303 = arith.mulf %1300, %1273 : vector<4x2xf32>
    %1304 = arith.mulf %1299, %1301 : vector<4x2xf32>
    %1305 = arith.addf %1303, %1304 : vector<4x2xf32>
    %1306 = math.tanh %1305 : vector<4x2xf32>
    %1307 = arith.mulf %1302, %1306 : vector<4x2xf32>
    %1308 = vector.extract_strided_slice %1307 {offsets = [0, 0], sizes = [4, 1], strides = [1, 1]} : vector<4x2xf32> to vector<4x1xf32>
    %1309 = arith.mulf %1308, %36 : vector<4x1xf32>
    %1310 = arith.addf %42, %1309 : vector<4x1xf32>
    %1311 = vector.extract_strided_slice %1307 {offsets = [0, 1], sizes = [4, 1], strides = [1, 1]} : vector<4x2xf32> to vector<4x1xf32>
    %1312 = arith.mulf %1311, %39 : vector<4x1xf32>
    %1313 = arith.addf %1310, %1312 : vector<4x1xf32>
    %c0_44 = arith.constant 0 : index
    %c0_45 = arith.constant 0 : index
    %1314 = vector.load %arg3[%c0_44, %c0_45] : memref<4x1xf32, #tpu.memory_space<vmem>>, vector<4x1xf32>
    tpu.vector_store %arg3[%c0_44, %c0_45], %1313 {strides = array<i32>} : memref<4x1xf32, #tpu.memory_space<vmem>>, vector<4x1xf32>,
    return
  }
  func.func @transform_0(%arg0: i32) -> (i32, i32) {
    %c0_i32 = arith.constant 0 : i32
    %c0_i32_0 = arith.constant 0 : i32
    return %arg0, %c0_i32 : i32, i32
  }
  func.func @transform_1(%arg0: i32) -> (i32, i32) {
    %c0_i32 = arith.constant 0 : i32
    %c0_i32_0 = arith.constant 0 : i32
    %c0_i32_1 = arith.constant 0 : i32
    return %c0_i32, %c0_i32_0 : i32, i32
  }
  func.func @transform_2(%arg0: i32) -> (i32, i32) {
    %c0_i32 = arith.constant 0 : i32
    %c0_i32_0 = arith.constant 0 : i32
    return %arg0, %c0_i32 : i32, i32
  }
}

</mosaic_0001>

<llo_original>
// kernel: lstm_forward.1
$region0: #{lstm_forward.1}
  #allocation0 [shape = 'u32[]', space=smem, size = 0x4, offset = 0x4, fixed_abs, tag = 'smem constant byte address 0x4 - core index']
  #allocation1 [shape = 'u32[72,128]{1,0:T(1,128)}', space=vmem, size = 0x9000, scoped, tag = 'internal scratch']
  %s0 = inlined_call_operand.hbm [shape: f32[4,30], index: 0, kind: input, shape index: {}]
  %s1 = inlined_call_operand.hbm [shape: f32[16,16], index: 1, kind: input, shape index: {}]
  %s2 = inlined_call_operand.vmem [shape: f32[4,1], index: 2, kind: output, shape index: {}]
  %s3 = sld [smem:[#allocation0]]
  $region26: #{lstm_forward.1} parent=0
    _
  %s5 = ssub.s32 1, %s3
  %s6 = scalar_select 0, %s5, %s3
  $region1: #{lstm_forward.1} parent=0
    #allocation2 [shape = 'u8[2048]{0}', space=vmem, size = 0x800, scoped, tag = 'input window, operand 0, single buffered']
    #allocation3 [shape = 's32[1]{0}', space=sflag, size = 0x4, scoped, tag = 'scoped memory for lstm_forward.1']
    #allocation4 [shape = 'u8[8192]{0}', space=vmem, size = 0x2000, scoped, tag = 'input window, operand 1, single buffered']
    #allocation5 [shape = 's32[1]{0}', space=sflag, size = 0x4, scoped, tag = 'scoped memory for lstm_forward.1']
    %7 = vsyncpa [#allocation3], 0
    %8 = vsyncpa [#allocation5], 0
    // Predicated region
    $region2: #{lstm_forward.1} parent=1 // pred_check
      _
    $region3: #{lstm_forward.1} parent=1 // pred_check_branch
      %10 = sbr.rel (0) target = $region5
    $region4: #{lstm_forward.1} parent=1 // pred_region
      %12 = vsyncadd [#allocation3], 0
      %s14 = sshll.u32 %s0, 4
      %s15 = int_to_ptr.hbm [resolvable:$true] %s14
      %s16 = sshll.u32 [#allocation2], 4
      %s17 = int_to_ptr.vmem [resolvable:$true] %s16
      %19 = dma.hbm_to_vmem [thread:$0]  %s15, 64, %s17, [#allocation3]
    $region5: #{lstm_forward.1} parent=1 // pred_fallthru
      _
    // Predicated region
    $region6: #{lstm_forward.1} parent=1 // pred_check
      _
    $region7: #{lstm_forward.1} parent=1 // pred_check_branch
      %21 = sbr.rel (0) target = $region9
    $region8: #{lstm_forward.1} parent=1 // pred_region
      %23 = vsyncadd [#allocation5], 0
      %s24 = sshll.u32 %s1, 4
      %s25 = int_to_ptr.hbm [resolvable:$true] %s24
      %s26 = sshll.u32 [#allocation4], 4
      %s27 = int_to_ptr.vmem [resolvable:$true] %s26
      %32 = dma.hbm_to_vmem [thread:$0]  %s25, 256, %s27, [#allocation5], 128, 128, 8
    $region9: #{lstm_forward.1} parent=1 // pred_fallthru
      _
    // Predicated region
    $region10: #{lstm_forward.1} parent=1 // pred_check
      _
    $region11: #{lstm_forward.1} parent=1 // pred_check_branch
      %34 = sbr.rel (0) target = $region13
    $region12: #{lstm_forward.1} parent=1 // pred_region
      %36 = dma.done [#allocation3], 64
    $region13: #{lstm_forward.1} parent=1 // pred_fallthru
      _
    // Predicated region
    $region14: #{lstm_forward.1} parent=1 // pred_check
      _
    $region15: #{lstm_forward.1} parent=1 // pred_check_branch
      %38 = sbr.rel (0) target = $region17
    $region16: #{lstm_forward.1} parent=1 // pred_region
      %40 = dma.done [#allocation5], 256
    $region17: #{lstm_forward.1} parent=1 // pred_fallthru
      _
    %v41 = vld [vmem:[#allocation4] sm:$0xff]
    %v42 = vld [vmem:[#allocation4 + $0x8] sm:$0xff]
    %v43 = vperm.slane %v41, 0
    %v44 = vperm.slane %v41, 3
    %v45 = vperm.slane %v41, 1
    %v46 = vperm.slane %v41, 2
    %v47 = vperm.slane %v41, 4
    %v48 = vperm.slane %v41, 5
    %v49 = vperm.slane %v41, 6
    %v50 = vperm.slane %v41, 7
    %v51 = vperm.slane %v42, 2
    %v52 = vperm.slane %v42, 0
    %v53 = vperm.slane %v42, 1
    %v54 = vperm.slane %v42, 3
    %v55 = vperm.slane %v42, 4
    %v56 = vperm.slane %v42, 5
    %v57 = vld [vmem:[#allocation2] sm:$0xf]
    %59 = vset.pattern.permute.xlu0 0
    %60 = vperm.xlu0 %59, %v57
    %v61 = vpop.permute.xlu0 %60
    %v63 = vmul.f32 %v61, %v43
    %v64 = vadd.f32 %v63, %v44
    %v65 = vxor.u32 %v64, 2147483648
    %v66 = vmul.f32 %v65, 1.442695
    %v67 = vpow.pop %v66
    %v68 = vadd.f32 %v67, 1.0
    %v69 = vrcp.pop %v68
    %v70 = vmul.f32 %v68, %v69
    %v71 = vsub.f32 1.0, %v70
    %v72 = vmul.f32 %v69, %v71
    %v73 = vadd.f32 %v69, %v72
    %vm74 = vweird.f32 %v68
    %vm75 = vweird.f32 %v69
    %vm76 = vmor %vm74, %vm75
    %v77 = vsel %vm76, %v69, %v73
    %v78 = vand.u32 2147483647, %v68
    %vm79 = vcmp.eq.f32.partialorder %v78, 8.507059e+37
    %v80 = vand.u32 %v68, 2147483648
    %v81 = vor.u32 1.1754944e-38, %v80
    %v82 = vsel %vm79, %v81, %v77
    %v83 = vmul.f32 1.0, %v82
    %v84 = vtanh.pop %v64
    %v85 = vmul.f32 %v83, 0.0
    %87 = vrot.lane.b32.xlu0 %v84, 124
    %v88 = vpop.permute.xlu0 %87
    %v90 = vmul.f32 %v83, %v88
    %92 = vrot.lane.b32.xlu0 %v90, 2
    %v93 = vpop.permute.xlu0 %92
    %v95 = vadd.f32 %v85, %v93
    %97 = vset.pattern.permute.xlu0 6
    %98 = vperm.xlu0 %97, %v83
    %v99 = vpop.permute.xlu0 %98
    %v101 = vmul.f32 %v99, %v45
    %102 = vset.pattern.permute.xlu0 7
    %103 = vperm.xlu0 %102, %v83
    %v104 = vpop.permute.xlu0 %103
    %v106 = vmul.f32 %v104, %v46
    %v107 = vtanh.pop %v95
    %108 = vset.pattern.permute.xlu0 1
    %109 = vperm.xlu0 %108, %v57
    %v110 = vpop.permute.xlu0 %109
    %v112 = vmul.f32 %v110, %v43
    %v113 = vadd.f32 %v112, %v44
    %115 = vset.pattern.permute.xlu0 2
    %116 = vperm.xlu0 %115, %v107
    %v117 = vpop.permute.xlu0 %116
    %v119 = vmul.f32 %v117, %v101
    %v120 = vadd.f32 %v113, %v119
    %121 = vset.pattern.permute.xlu0 3
    %122 = vperm.xlu0 %121, %v107
    %v123 = vpop.permute.xlu0 %122
    %v125 = vmul.f32 %v123, %v106
    %v126 = vadd.f32 %v120, %v125
    %v127 = vxor.u32 %v126, 2147483648
    %v128 = vmul.f32 %v127, 1.442695
    %v129 = vpow.pop %v128
    %v130 = vadd.f32 %v129, 1.0
    %v131 = vrcp.pop %v130
    %v132 = vmul.f32 %v130, %v131
    %v133 = vsub.f32 1.0, %v132
    %v134 = vmul.f32 %v131, %v133
    %v135 = vadd.f32 %v131, %v134
    %vm136 = vweird.f32 %v130
    %vm137 = vweird.f32 %v131
    %vm138 = vmor %vm136, %vm137
    %v139 = vsel %vm138, %v131, %v135
    %v140 = vand.u32 2147483647, %v130
    %vm141 = vcmp.eq.f32.partialorder %v140, 8.507059e+37
    %v142 = vand.u32 %v130, 2147483648
    %v143 = vor.u32 1.1754944e-38, %v142
    %v144 = vsel %vm141, %v143, %v139
    %v145 = vmul.f32 1.0, %v144
    %v146 = vtanh.pop %v126
    %v147 = vmul.f32 %v145, %v95
    %149 = vrot.lane.b32.xlu0 %v146, 124
    %v150 = vpop.permute.xlu0 %149
    %v152 = vmul.f32 %v145, %v150
    %154 = vrot.lane.b32.xlu0 %v152, 2
    %v155 = vpop.permute.xlu0 %154
    %v157 = vadd.f32 %v147, %v155
    %159 = vset.pattern.permute.xlu0 6
    %160 = vperm.xlu0 %159, %v145
    %v161 = vpop.permute.xlu0 %160
    %v163 = vmul.f32 %v161, %v45
    %164 = vset.pattern.permute.xlu0 7
    %165 = vperm.xlu0 %164, %v145
    %v166 = vpop.permute.xlu0 %165
    %v168 = vmul.f32 %v166, %v46
    %v169 = vtanh.pop %v157
    %170 = vset.pattern.permute.xlu0 2
    %171 = vperm.xlu0 %170, %v57
    %v172 = vpop.permute.xlu0 %171
    %v174 = vmul.f32 %v172, %v43
    %v175 = vadd.f32 %v174, %v44
    %177 = vset.pattern.permute.xlu0 2
    %178 = vperm.xlu0 %177, %v169
    %v179 = vpop.permute.xlu0 %178
    %v181 = vmul.f32 %v179, %v163
    %v182 = vadd.f32 %v175, %v181
    %183 = vset.pattern.permute.xlu0 3
    %184 = vperm.xlu0 %183, %v169
    %v185 = vpop.permute.xlu0 %184
    %v187 = vmul.f32 %v185, %v168
    %v188 = vadd.f32 %v182, %v187
    %v189 = vxor.u32 %v188, 2147483648
    %v190 = vmul.f32 %v189, 1.442695
    %v191 = vpow.pop %v190
    %v192 = vadd.f32 %v191, 1.0
    %v193 = vrcp.pop %v192
    %v194 = vmul.f32 %v192, %v193
    %v195 = vsub.f32 1.0, %v194
    %v196 = vmul.f32 %v193, %v195
    %v197 = vadd.f32 %v193, %v196
    %vm198 = vweird.f32 %v192
    %vm199 = vweird.f32 %v193
    %vm200 = vmor %vm198, %vm199
    %v201 = vsel %vm200, %v193, %v197
    %v202 = vand.u32 2147483647, %v192
    %vm203 = vcmp.eq.f32.partialorder %v202, 8.507059e+37
    %v204 = vand.u32 %v192, 2147483648
    %v205 = vor.u32 1.1754944e-38, %v204
    %v206 = vsel %vm203, %v205, %v201
    %v207 = vmul.f32 1.0, %v206
    %v208 = vtanh.pop %v188
    %v209 = vmul.f32 %v207, %v157
    %211 = vrot.lane.b32.xlu0 %v208, 124
    %v212 = vpop.permute.xlu0 %211
    %v214 = vmul.f32 %v207, %v212
    %216 = vrot.lane.b32.xlu0 %v214, 2
    %v217 = vpop.permute.xlu0 %216
    %v219 = vadd.f32 %v209, %v217
    %221 = vset.pattern.permute.xlu0 6
    %222 = vperm.xlu0 %221, %v207
    %v223 = vpop.permute.xlu0 %222
    %v225 = vmul.f32 %v223, %v45
    %226 = vset.pattern.permute.xlu0 7
    %227 = vperm.xlu0 %226, %v207
    %v228 = vpop.permute.xlu0 %227
    %v230 = vmul.f32 %v228, %v46
    %v231 = vtanh.pop %v219
    %232 = vset.pattern.permute.xlu0 3
    %233 = vperm.xlu0 %232, %v57
    %v234 = vpop.permute.xlu0 %233
    %v236 = vmul.f32 %v234, %v43
    %v237 = vadd.f32 %v236, %v44
    %239 = vset.pattern.permute.xlu0 2
    %240 = vperm.xlu0 %239, %v231
    %v241 = vpop.permute.xlu0 %240
    %v243 = vmul.f32 %v241, %v225
    %v244 = vadd.f32 %v237, %v243
    %245 = vset.pattern.permute.xlu0 3
    %246 = vperm.xlu0 %245, %v231
    %v247 = vpop.permute.xlu0 %246
    %v249 = vmul.f32 %v247, %v230
    %v250 = vadd.f32 %v244, %v249
    %v251 = vxor.u32 %v250, 2147483648
    %v252 = vmul.f32 %v251, 1.442695
    %v253 = vpow.pop %v252
    %v254 = vadd.f32 %v253, 1.0
    %v255 = vrcp.pop %v254
    %v256 = vmul.f32 %v254, %v255
    %v257 = vsub.f32 1.0, %v256
    %v258 = vmul.f32 %v255, %v257
    %v259 = vadd.f32 %v255, %v258
    %vm260 = vweird.f32 %v254
    %vm261 = vweird.f32 %v255
    %vm262 = vmor %vm260, %vm261
    %v263 = vsel %vm262, %v255, %v259
    %v264 = vand.u32 2147483647, %v254
    %vm265 = vcmp.eq.f32.partialorder %v264, 8.507059e+37
    %v266 = vand.u32 %v254, 2147483648
    %v267 = vor.u32 1.1754944e-38, %v266
    %v268 = vsel %vm265, %v267, %v263
    %v269 = vmul.f32 1.0, %v268
    %v270 = vtanh.pop %v250
    %v271 = vmul.f32 %v269, %v219
    %273 = vrot.lane.b32.xlu0 %v270, 124
    %v274 = vpop.permute.xlu0 %273
    %v276 = vmul.f32 %v269, %v274
    %278 = vrot.lane.b32.xlu0 %v276, 2
    %v279 = vpop.permute.xlu0 %278
    %v281 = vadd.f32 %v271, %v279
    %283 = vset.pattern.permute.xlu0 6
    %284 = vperm.xlu0 %283, %v269
    %v285 = vpop.permute.xlu0 %284
    %v287 = vmul.f32 %v285, %v45
    %288 = vset.pattern.permute.xlu0 7
    %289 = vperm.xlu0 %288, %v269
    %v290 = vpop.permute.xlu0 %289
    %v292 = vmul.f32 %v290, %v46
    %v293 = vtanh.pop %v281
    %294 = vset.pattern.permute.xlu0 4
    %295 = vperm.xlu0 %294, %v57
    %v296 = vpop.permute.xlu0 %295
    %v298 = vmul.f32 %v296, %v43
    %v299 = vadd.f32 %v298, %v44
    %301 = vset.pattern.permute.xlu0 2
    %302 = vperm.xlu0 %301, %v293
    %v303 = vpop.permute.xlu0 %302
    %v305 = vmul.f32 %v303, %v287
    %v306 = vadd.f32 %v299, %v305
    %307 = vset.pattern.permute.xlu0 3
    %308 = vperm.xlu0 %307, %v293
    %v309 = vpop.permute.xlu0 %308
    %v311 = vmul.f32 %v309, %v292
    %v312 = vadd.f32 %v306, %v311
    %v313 = vxor.u32 %v312, 2147483648
    %v314 = vmul.f32 %v313, 1.442695
    %v315 = vpow.pop %v314
    %v316 = vadd.f32 %v315, 1.0
    %v317 = vrcp.pop %v316
    %v318 = vmul.f32 %v316, %v317
    %v319 = vsub.f32 1.0, %v318
    %v320 = vmul.f32 %v317, %v319
    %v321 = vadd.f32 %v317, %v320
    %vm322 = vweird.f32 %v316
    %vm323 = vweird.f32 %v317
    %vm324 = vmor %vm322, %vm323
    %v325 = vsel %vm324, %v317, %v321
    %v326 = vand.u32 2147483647, %v316
    %vm327 = vcmp.eq.f32.partialorder %v326, 8.507059e+37
    %v328 = vand.u32 %v316, 2147483648
    %v329 = vor.u32 1.1754944e-38, %v328
    %v330 = vsel %vm327, %v329, %v325
    %v331 = vmul.f32 1.0, %v330
    %v332 = vtanh.pop %v312
    %v333 = vmul.f32 %v331, %v281
    %335 = vrot.lane.b32.xlu0 %v332, 124
    %v336 = vpop.permute.xlu0 %335
    %v338 = vmul.f32 %v331, %v336
    %340 = vrot.lane.b32.xlu0 %v338, 2
    %v341 = vpop.permute.xlu0 %340
    %v343 = vadd.f32 %v333, %v341
    %345 = vset.pattern.permute.xlu0 6
    %346 = vperm.xlu0 %345, %v331
    %v347 = vpop.permute.xlu0 %346
    %v349 = vmul.f32 %v347, %v45
    %350 = vset.pattern.permute.xlu0 7
    %351 = vperm.xlu0 %350, %v331
    %v352 = vpop.permute.xlu0 %351
    %v354 = vmul.f32 %v352, %v46
    %v355 = vtanh.pop %v343
    %356 = vset.pattern.permute.xlu0 5
    %357 = vperm.xlu0 %356, %v57
    %v358 = vpop.permute.xlu0 %357
    %v360 = vmul.f32 %v358, %v43
    %v361 = vadd.f32 %v360, %v44
    %363 = vset.pattern.permute.xlu0 2
    %364 = vperm.xlu0 %363, %v355
    %v365 = vpop.permute.xlu0 %364
    %v367 = vmul.f32 %v365, %v349
    %v368 = vadd.f32 %v361, %v367
    %369 = vset.pattern.permute.xlu0 3
    %370 = vperm.xlu0 %369, %v355
    %v371 = vpop.permute.xlu0 %370
    %v373 = vmul.f32 %v371, %v354
    %v374 = vadd.f32 %v368, %v373
    %v375 = vxor.u32 %v374, 2147483648
    %v376 = vmul.f32 %v375, 1.442695
    %v377 = vpow.pop %v376
    %v378 = vadd.f32 %v377, 1.0
    %v379 = vrcp.pop %v378
    %v380 = vmul.f32 %v378, %v379
    %v381 = vsub.f32 1.0, %v380
    %v382 = vmul.f32 %v379, %v381
    %v383 = vadd.f32 %v379, %v382
    %vm384 = vweird.f32 %v378
    %vm385 = vweird.f32 %v379
    %vm386 = vmor %vm384, %vm385
    %v387 = vsel %vm386, %v379, %v383
    %v388 = vand.u32 2147483647, %v378
    %vm389 = vcmp.eq.f32.partialorder %v388, 8.507059e+37
    %v390 = vand.u32 %v378, 2147483648
    %v391 = vor.u32 1.1754944e-38, %v390
    %v392 = vsel %vm389, %v391, %v387
    %v393 = vmul.f32 1.0, %v392
    %v394 = vtanh.pop %v374
    %v395 = vmul.f32 %v393, %v343
    %397 = vrot.lane.b32.xlu0 %v394, 124
    %v398 = vpop.permute.xlu0 %397
    %v400 = vmul.f32 %v393, %v398
    %402 = vrot.lane.b32.xlu0 %v400, 2
    %v403 = vpop.permute.xlu0 %402
    %v405 = vadd.f32 %v395, %v403
    %407 = vset.pattern.permute.xlu0 6
    %408 = vperm.xlu0 %407, %v393
    %v409 = vpop.permute.xlu0 %408
    %v411 = vmul.f32 %v409, %v45
    %412 = vset.pattern.permute.xlu0 7
    %413 = vperm.xlu0 %412, %v393
    %v414 = vpop.permute.xlu0 %413
    %v416 = vmul.f32 %v414, %v46
    %v417 = vtanh.pop %v405
    %418 = vset.pattern.permute.xlu0 6
    %419 = vperm.xlu0 %418, %v57
    %v420 = vpop.permute.xlu0 %419
    %v422 = vmul.f32 %v420, %v43
    %v423 = vadd.f32 %v422, %v44
    %425 = vset.pattern.permute.xlu0 2
    %426 = vperm.xlu0 %425, %v417
    %v427 = vpop.permute.xlu0 %426
    %v429 = vmul.f32 %v427, %v411
    %v430 = vadd.f32 %v423, %v429
    %431 = vset.pattern.permute.xlu0 3
    %432 = vperm.xlu0 %431, %v417
    %v433 = vpop.permute.xlu0 %432
    %v435 = vmul.f32 %v433, %v416
    %v436 = vadd.f32 %v430, %v435
    %v437 = vxor.u32 %v436, 2147483648
    %v438 = vmul.f32 %v437, 1.442695
    %v439 = vpow.pop %v438
    %v440 = vadd.f32 %v439, 1.0
    %v441 = vrcp.pop %v440
    %v442 = vmul.f32 %v440, %v441
    %v443 = vsub.f32 1.0, %v442
    %v444 = vmul.f32 %v441, %v443
    %v445 = vadd.f32 %v441, %v444
    %vm446 = vweird.f32 %v440
    %vm447 = vweird.f32 %v441
    %vm448 = vmor %vm446, %vm447
    %v449 = vsel %vm448, %v441, %v445
    %v450 = vand.u32 2147483647, %v440
    %vm451 = vcmp.eq.f32.partialorder %v450, 8.507059e+37
    %v452 = vand.u32 %v440, 2147483648
    %v453 = vor.u32 1.1754944e-38, %v452
    %v454 = vsel %vm451, %v453, %v449
    %v455 = vmul.f32 1.0, %v454
    %v456 = vtanh.pop %v436
    %v457 = vmul.f32 %v455, %v405
    %459 = vrot.lane.b32.xlu0 %v456, 124
    %v460 = vpop.permute.xlu0 %459
    %v462 = vmul.f32 %v455, %v460
    %464 = vrot.lane.b32.xlu0 %v462, 2
    %v465 = vpop.permute.xlu0 %464
    %v467 = vadd.f32 %v457, %v465
    %469 = vset.pattern.permute.xlu0 6
    %470 = vperm.xlu0 %469, %v455
    %v471 = vpop.permute.xlu0 %470
    %v473 = vmul.f32 %v471, %v45
    %474 = vset.pattern.permute.xlu0 7
    %475 = vperm.xlu0 %474, %v455
    %v476 = vpop.permute.xlu0 %475
    %v478 = vmul.f32 %v476, %v46
    %v479 = vtanh.pop %v467
    %480 = vset.pattern.permute.xlu0 7
    %481 = vperm.xlu0 %480, %v57
    %v482 = vpop.permute.xlu0 %481
    %v484 = vmul.f32 %v482, %v43
    %v485 = vadd.f32 %v484, %v44
    %487 = vset.pattern.permute.xlu0 2
    %488 = vperm.xlu0 %487, %v479
    %v489 = vpop.permute.xlu0 %488
    %v491 = vmul.f32 %v489, %v473
    %v492 = vadd.f32 %v485, %v491
    %493 = vset.pattern.permute.xlu0 3
    %494 = vperm.xlu0 %493, %v479
    %v495 = vpop.permute.xlu0 %494
    %v497 = vmul.f32 %v495, %v478
    %v498 = vadd.f32 %v492, %v497
    %v499 = vxor.u32 %v498, 2147483648
    %v500 = vmul.f32 %v499, 1.442695
    %v501 = vpow.pop %v500
    %v502 = vadd.f32 %v501, 1.0
    %v503 = vrcp.pop %v502
    %v504 = vmul.f32 %v502, %v503
    %v505 = vsub.f32 1.0, %v504
    %v506 = vmul.f32 %v503, %v505
    %v507 = vadd.f32 %v503, %v506
    %vm508 = vweird.f32 %v502
    %vm509 = vweird.f32 %v503
    %vm510 = vmor %vm508, %vm509
    %v511 = vsel %vm510, %v503, %v507
    %v512 = vand.u32 2147483647, %v502
    %vm513 = vcmp.eq.f32.partialorder %v512, 8.507059e+37
    %v514 = vand.u32 %v502, 2147483648
    %v515 = vor.u32 1.1754944e-38, %v514
    %v516 = vsel %vm513, %v515, %v511
    %v517 = vmul.f32 1.0, %v516
    %v518 = vtanh.pop %v498
    %v519 = vmul.f32 %v517, %v467
    %521 = vrot.lane.b32.xlu0 %v518, 124
    %v522 = vpop.permute.xlu0 %521
    %v524 = vmul.f32 %v517, %v522
    %526 = vrot.lane.b32.xlu0 %v524, 2
    %v527 = vpop.permute.xlu0 %526
    %v529 = vadd.f32 %v519, %v527
    %531 = vset.pattern.permute.xlu0 6
    %532 = vperm.xlu0 %531, %v517
    %v533 = vpop.permute.xlu0 %532
    %v535 = vmul.f32 %v533, %v45
    %536 = vset.pattern.permute.xlu0 7
    %537 = vperm.xlu0 %536, %v517
    %v538 = vpop.permute.xlu0 %537
    %v540 = vmul.f32 %v538, %v46
    %v541 = vtanh.pop %v529
    %542 = vset.pattern.permute.xlu0 8
    %543 = vperm.xlu0 %542, %v57
    %v544 = vpop.permute.xlu0 %543
    %v546 = vmul.f32 %v544, %v43
    %v547 = vadd.f32 %v546, %v44
    %549 = vset.pattern.permute.xlu0 2
    %550 = vperm.xlu0 %549, %v541
    %v551 = vpop.permute.xlu0 %550
    %v553 = vmul.f32 %v551, %v535
    %v554 = vadd.f32 %v547, %v553
    %555 = vset.pattern.permute.xlu0 3
    %556 = vperm.xlu0 %555, %v541
    %v557 = vpop.permute.xlu0 %556
    %v559 = vmul.f32 %v557, %v540
    %v560 = vadd.f32 %v554, %v559
    %v561 = vxor.u32 %v560, 2147483648
    %v562 = vmul.f32 %v561, 1.442695
    %v563 = vpow.pop %v562
    %v564 = vadd.f32 %v563, 1.0
    %v565 = vrcp.pop %v564
    %v566 = vmul.f32 %v564, %v565
    %v567 = vsub.f32 1.0, %v566
    %v568 = vmul.f32 %v565, %v567
    %v569 = vadd.f32 %v565, %v568
    %vm570 = vweird.f32 %v564
    %vm571 = vweird.f32 %v565
    %vm572 = vmor %vm570, %vm571
    %v573 = vsel %vm572, %v565, %v569
    %v574 = vand.u32 2147483647, %v564
    %vm575 = vcmp.eq.f32.partialorder %v574, 8.507059e+37
    %v576 = vand.u32 %v564, 2147483648
    %v577 = vor.u32 1.1754944e-38, %v576
    %v578 = vsel %vm575, %v577, %v573
    %v579 = vmul.f32 1.0, %v578
    %v580 = vtanh.pop %v560
    %v581 = vmul.f32 %v579, %v529
    %583 = vrot.lane.b32.xlu0 %v580, 124
    %v584 = vpop.permute.xlu0 %583
    %v586 = vmul.f32 %v579, %v584
    %588 = vrot.lane.b32.xlu0 %v586, 2
    %v589 = vpop.permute.xlu0 %588
    %v591 = vadd.f32 %v581, %v589
    %593 = vset.pattern.permute.xlu0 6
    %594 = vperm.xlu0 %593, %v579
    %v595 = vpop.permute.xlu0 %594
    %v597 = vmul.f32 %v595, %v45
    %598 = vset.pattern.permute.xlu0 7
    %599 = vperm.xlu0 %598, %v579
    %v600 = vpop.permute.xlu0 %599
    %v602 = vmul.f32 %v600, %v46
    %v603 = vtanh.pop %v591
    %604 = vset.pattern.permute.xlu0 9
    %605 = vperm.xlu0 %604, %v57
    %v606 = vpop.permute.xlu0 %605
    %v608 = vmul.f32 %v606, %v43
    %v609 = vadd.f32 %v608, %v44
    %611 = vset.pattern.permute.xlu0 2
    %612 = vperm.xlu0 %611, %v603
    %v613 = vpop.permute.xlu0 %612
    %v615 = vmul.f32 %v613, %v597
    %v616 = vadd.f32 %v609, %v615
    %617 = vset.pattern.permute.xlu0 3
    %618 = vperm.xlu0 %617, %v603
    %v619 = vpop.permute.xlu0 %618
    %v621 = vmul.f32 %v619, %v602
    %v622 = vadd.f32 %v616, %v621
    %v623 = vxor.u32 %v622, 2147483648
    %v624 = vmul.f32 %v623, 1.442695
    %v625 = vpow.pop %v624
    %v626 = vadd.f32 %v625, 1.0
    %v627 = vrcp.pop %v626
    %v628 = vmul.f32 %v626, %v627
    %v629 = vsub.f32 1.0, %v628
    %v630 = vmul.f32 %v627, %v629
    %v631 = vadd.f32 %v627, %v630
    %vm632 = vweird.f32 %v626
    %vm633 = vweird.f32 %v627
    %vm634 = vmor %vm632, %vm633
    %v635 = vsel %vm634, %v627, %v631
    %v636 = vand.u32 2147483647, %v626
    %vm637 = vcmp.eq.f32.partialorder %v636, 8.507059e+37
    %v638 = vand.u32 %v626, 2147483648
    %v639 = vor.u32 1.1754944e-38, %v638
    %v640 = vsel %vm637, %v639, %v635
    %v641 = vmul.f32 1.0, %v640
    %v642 = vtanh.pop %v622
    %v643 = vmul.f32 %v641, %v591
    %645 = vrot.lane.b32.xlu0 %v642, 124
    %v646 = vpop.permute.xlu0 %645
    %v648 = vmul.f32 %v641, %v646
    %650 = vrot.lane.b32.xlu0 %v648, 2
    %v651 = vpop.permute.xlu0 %650
    %v653 = vadd.f32 %v643, %v651
    %655 = vset.pattern.permute.xlu0 6
    %656 = vperm.xlu0 %655, %v641
    %v657 = vpop.permute.xlu0 %656
    %v659 = vmul.f32 %v657, %v45
    %660 = vset.pattern.permute.xlu0 7
    %661 = vperm.xlu0 %660, %v641
    %v662 = vpop.permute.xlu0 %661
    %v664 = vmul.f32 %v662, %v46
    %v665 = vtanh.pop %v653
    %666 = vset.pattern.permute.xlu0 10
    %667 = vperm.xlu0 %666, %v57
    %v668 = vpop.permute.xlu0 %667
    %v670 = vmul.f32 %v668, %v43
    %v671 = vadd.f32 %v670, %v44
    %673 = vset.pattern.permute.xlu0 2
    %674 = vperm.xlu0 %673, %v665
    %v675 = vpop.permute.xlu0 %674
    %v677 = vmul.f32 %v675, %v659
    %v678 = vadd.f32 %v671, %v677
    %679 = vset.pattern.permute.xlu0 3
    %680 = vperm.xlu0 %679, %v665
    %v681 = vpop.permute.xlu0 %680
    %v683 = vmul.f32 %v681, %v664
    %v684 = vadd.f32 %v678, %v683
    %v685 = vxor.u32 %v684, 2147483648
    %v686 = vmul.f32 %v685, 1.442695
    %v687 = vpow.pop %v686
    %v688 = vadd.f32 %v687, 1.0
    %v689 = vrcp.pop %v688
    %v690 = vmul.f32 %v688, %v689
    %v691 = vsub.f32 1.0, %v690
    %v692 = vmul.f32 %v689, %v691
    %v693 = vadd.f32 %v689, %v692
    %vm694 = vweird.f32 %v688
    %vm695 = vweird.f32 %v689
    %vm696 = vmor %vm694, %vm695
    %v697 = vsel %vm696, %v689, %v693
    %v698 = vand.u32 2147483647, %v688
    %vm699 = vcmp.eq.f32.partialorder %v698, 8.507059e+37
    %v700 = vand.u32 %v688, 2147483648
    %v701 = vor.u32 1.1754944e-38, %v700
    %v702 = vsel %vm699, %v701, %v697
    %v703 = vmul.f32 1.0, %v702
    %v704 = vtanh.pop %v684
    %v705 = vmul.f32 %v703, %v653
    %707 = vrot.lane.b32.xlu0 %v704, 124
    %v708 = vpop.permute.xlu0 %707
    %v710 = vmul.f32 %v703, %v708
    %712 = vrot.lane.b32.xlu0 %v710, 2
    %v713 = vpop.permute.xlu0 %712
    %v715 = vadd.f32 %v705, %v713
    %717 = vset.pattern.permute.xlu0 6
    %718 = vperm.xlu0 %717, %v703
    %v719 = vpop.permute.xlu0 %718
    %v721 = vmul.f32 %v719, %v45
    %722 = vset.pattern.permute.xlu0 7
    %723 = vperm.xlu0 %722, %v703
    %v724 = vpop.permute.xlu0 %723
    %v726 = vmul.f32 %v724, %v46
    %v727 = vtanh.pop %v715
    %728 = vset.pattern.permute.xlu0 11
    %729 = vperm.xlu0 %728, %v57
    %v730 = vpop.permute.xlu0 %729
    %v732 = vmul.f32 %v730, %v43
    %v733 = vadd.f32 %v732, %v44
    %735 = vset.pattern.permute.xlu0 2
    %736 = vperm.xlu0 %735, %v727
    %v737 = vpop.permute.xlu0 %736
    %v739 = vmul.f32 %v737, %v721
    %v740 = vadd.f32 %v733, %v739
    %741 = vset.pattern.permute.xlu0 3
    %742 = vperm.xlu0 %741, %v727
    %v743 = vpop.permute.xlu0 %742
    %v745 = vmul.f32 %v743, %v726
    %v746 = vadd.f32 %v740, %v745
    %v747 = vxor.u32 %v746, 2147483648
    %v748 = vmul.f32 %v747, 1.442695
    %v749 = vpow.pop %v748
    %v750 = vadd.f32 %v749, 1.0
    %v751 = vrcp.pop %v750
    %v752 = vmul.f32 %v750, %v751
    %v753 = vsub.f32 1.0, %v752
    %v754 = vmul.f32 %v751, %v753
    %v755 = vadd.f32 %v751, %v754
    %vm756 = vweird.f32 %v750
    %vm757 = vweird.f32 %v751
    %vm758 = vmor %vm756, %vm757
    %v759 = vsel %vm758, %v751, %v755
    %v760 = vand.u32 2147483647, %v750
    %vm761 = vcmp.eq.f32.partialorder %v760, 8.507059e+37
    %v762 = vand.u32 %v750, 2147483648
    %v763 = vor.u32 1.1754944e-38, %v762
    %v764 = vsel %vm761, %v763, %v759
    %v765 = vmul.f32 1.0, %v764
    %v766 = vtanh.pop %v746
    %v767 = vmul.f32 %v765, %v715
    %769 = vrot.lane.b32.xlu0 %v766, 124
    %v770 = vpop.permute.xlu0 %769
    %v772 = vmul.f32 %v765, %v770
    %774 = vrot.lane.b32.xlu0 %v772, 2
    %v775 = vpop.permute.xlu0 %774
    %v777 = vadd.f32 %v767, %v775
    %779 = vset.pattern.permute.xlu0 6
    %780 = vperm.xlu0 %779, %v765
    %v781 = vpop.permute.xlu0 %780
    %v783 = vmul.f32 %v781, %v45
    %784 = vset.pattern.permute.xlu0 7
    %785 = vperm.xlu0 %784, %v765
    %v786 = vpop.permute.xlu0 %785
    %v788 = vmul.f32 %v786, %v46
    %v789 = vtanh.pop %v777
    %790 = vset.pattern.permute.xlu0 12
    %791 = vperm.xlu0 %790, %v57
    %v792 = vpop.permute.xlu0 %791
    %v794 = vmul.f32 %v792, %v43
    %v795 = vadd.f32 %v794, %v44
    %797 = vset.pattern.permute.xlu0 2
    %798 = vperm.xlu0 %797, %v789
    %v799 = vpop.permute.xlu0 %798
    %v801 = vmul.f32 %v799, %v783
    %v802 = vadd.f32 %v795, %v801
    %803 = vset.pattern.permute.xlu0 3
    %804 = vperm.xlu0 %803, %v789
    %v805 = vpop.permute.xlu0 %804
    %v807 = vmul.f32 %v805, %v788
    %v808 = vadd.f32 %v802, %v807
    %v809 = vxor.u32 %v808, 2147483648
    %v810 = vmul.f32 %v809, 1.442695
    %v811 = vpow.pop %v810
    %v812 = vadd.f32 %v811, 1.0
    %v813 = vrcp.pop %v812
    %v814 = vmul.f32 %v812, %v813
    %v815 = vsub.f32 1.0, %v814
    %v816 = vmul.f32 %v813, %v815
    %v817 = vadd.f32 %v813, %v816
    %vm818 = vweird.f32 %v812
    %vm819 = vweird.f32 %v813
    %vm820 = vmor %vm818, %vm819
    %v821 = vsel %vm820, %v813, %v817
    %v822 = vand.u32 2147483647, %v812
    %vm823 = vcmp.eq.f32.partialorder %v822, 8.507059e+37
    %v824 = vand.u32 %v812, 2147483648
    %v825 = vor.u32 1.1754944e-38, %v824
    %v826 = vsel %vm823, %v825, %v821
    %v827 = vmul.f32 1.0, %v826
    %v828 = vtanh.pop %v808
    %v829 = vmul.f32 %v827, %v777
    %831 = vrot.lane.b32.xlu0 %v828, 124
    %v832 = vpop.permute.xlu0 %831
    %v834 = vmul.f32 %v827, %v832
    %836 = vrot.lane.b32.xlu0 %v834, 2
    %v837 = vpop.permute.xlu0 %836
    %v839 = vadd.f32 %v829, %v837
    %841 = vset.pattern.permute.xlu0 6
    %842 = vperm.xlu0 %841, %v827
    %v843 = vpop.permute.xlu0 %842
    %v845 = vmul.f32 %v843, %v45
    %846 = vset.pattern.permute.xlu0 7
    %847 = vperm.xlu0 %846, %v827
    %v848 = vpop.permute.xlu0 %847
    %v850 = vmul.f32 %v848, %v46
    %v851 = vtanh.pop %v839
    %852 = vset.pattern.permute.xlu0 13
    %853 = vperm.xlu0 %852, %v57
    %v854 = vpop.permute.xlu0 %853
    %v856 = vmul.f32 %v854, %v43
    %v857 = vadd.f32 %v856, %v44
    %859 = vset.pattern.permute.xlu0 2
    %860 = vperm.xlu0 %859, %v851
    %v861 = vpop.permute.xlu0 %860
    %v863 = vmul.f32 %v861, %v845
    %v864 = vadd.f32 %v857, %v863
    %865 = vset.pattern.permute.xlu0 3
    %866 = vperm.xlu0 %865, %v851
    %v867 = vpop.permute.xlu0 %866
    %v869 = vmul.f32 %v867, %v850
    %v870 = vadd.f32 %v864, %v869
    %v871 = vxor.u32 %v870, 2147483648
    %v872 = vmul.f32 %v871, 1.442695
    %v873 = vpow.pop %v872
    %v874 = vadd.f32 %v873, 1.0
    %v875 = vrcp.pop %v874
    %v876 = vmul.f32 %v874, %v875
    %v877 = vsub.f32 1.0, %v876
    %v878 = vmul.f32 %v875, %v877
    %v879 = vadd.f32 %v875, %v878
    %vm880 = vweird.f32 %v874
    %vm881 = vweird.f32 %v875
    %vm882 = vmor %vm880, %vm881
    %v883 = vsel %vm882, %v875, %v879
    %v884 = vand.u32 2147483647, %v874
    %vm885 = vcmp.eq.f32.partialorder %v884, 8.507059e+37
    %v886 = vand.u32 %v874, 2147483648
    %v887 = vor.u32 1.1754944e-38, %v886
    %v888 = vsel %vm885, %v887, %v883
    %v889 = vmul.f32 1.0, %v888
    %v890 = vtanh.pop %v870
    %v891 = vmul.f32 %v889, %v839
    %893 = vrot.lane.b32.xlu0 %v890, 124
    %v894 = vpop.permute.xlu0 %893
    %v896 = vmul.f32 %v889, %v894
    %898 = vrot.lane.b32.xlu0 %v896, 2
    %v899 = vpop.permute.xlu0 %898
    %v901 = vadd.f32 %v891, %v899
    %903 = vset.pattern.permute.xlu0 6
    %904 = vperm.xlu0 %903, %v889
    %v905 = vpop.permute.xlu0 %904
    %v907 = vmul.f32 %v905, %v45
    %908 = vset.pattern.permute.xlu0 7
    %909 = vperm.xlu0 %908, %v889
    %v910 = vpop.permute.xlu0 %909
    %v912 = vmul.f32 %v910, %v46
    %v913 = vtanh.pop %v901
    %914 = vset.pattern.permute.xlu0 14
    %915 = vperm.xlu0 %914, %v57
    %v916 = vpop.permute.xlu0 %915
    %v918 = vmul.f32 %v916, %v43
    %v919 = vadd.f32 %v918, %v44
    %921 = vset.pattern.permute.xlu0 2
    %922 = vperm.xlu0 %921, %v913
    %v923 = vpop.permute.xlu0 %922
    %v925 = vmul.f32 %v923, %v907
    %v926 = vadd.f32 %v919, %v925
    %927 = vset.pattern.permute.xlu0 3
    %928 = vperm.xlu0 %927, %v913
    %v929 = vpop.permute.xlu0 %928
    %v931 = vmul.f32 %v929, %v912
    %v932 = vadd.f32 %v926, %v931
    %v933 = vxor.u32 %v932, 2147483648
    %v934 = vmul.f32 %v933, 1.442695
    %v935 = vpow.pop %v934
    %v936 = vadd.f32 %v935, 1.0
    %v937 = vrcp.pop %v936
    %v938 = vmul.f32 %v936, %v937
    %v939 = vsub.f32 1.0, %v938
    %v940 = vmul.f32 %v937, %v939
    %v941 = vadd.f32 %v937, %v940
    %vm942 = vweird.f32 %v936
    %vm943 = vweird.f32 %v937
    %vm944 = vmor %vm942, %vm943
    %v945 = vsel %vm944, %v937, %v941
    %v946 = vand.u32 2147483647, %v936
    %vm947 = vcmp.eq.f32.partialorder %v946, 8.507059e+37
    %v948 = vand.u32 %v936, 2147483648
    %v949 = vor.u32 1.1754944e-38, %v948
    %v950 = vsel %vm947, %v949, %v945
    %v951 = vmul.f32 1.0, %v950
    %v952 = vtanh.pop %v932
    %v953 = vmul.f32 %v951, %v901
    %955 = vrot.lane.b32.xlu0 %v952, 124
    %v956 = vpop.permute.xlu0 %955
    %v958 = vmul.f32 %v951, %v956
    %960 = vrot.lane.b32.xlu0 %v958, 2
    %v961 = vpop.permute.xlu0 %960
    %v963 = vadd.f32 %v953, %v961
    %965 = vset.pattern.permute.xlu0 6
    %966 = vperm.xlu0 %965, %v951
    %v967 = vpop.permute.xlu0 %966
    %v969 = vmul.f32 %v967, %v45
    %970 = vset.pattern.permute.xlu0 7
    %971 = vperm.xlu0 %970, %v951
    %v972 = vpop.permute.xlu0 %971
    %v974 = vmul.f32 %v972, %v46
    %v975 = vtanh.pop %v963
    %976 = vset.pattern.permute.xlu0 15
    %977 = vperm.xlu0 %976, %v57
    %v978 = vpop.permute.xlu0 %977
    %v980 = vmul.f32 %v978, %v43
    %v981 = vadd.f32 %v980, %v44
    %983 = vset.pattern.permute.xlu0 2
    %984 = vperm.xlu0 %983, %v975
    %v985 = vpop.permute.xlu0 %984
    %v987 = vmul.f32 %v985, %v969
    %v988 = vadd.f32 %v981, %v987
    %989 = vset.pattern.permute.xlu0 3
    %990 = vperm.xlu0 %989, %v975
    %v991 = vpop.permute.xlu0 %990
    %v993 = vmul.f32 %v991, %v974
    %v994 = vadd.f32 %v988, %v993
    %v995 = vxor.u32 %v994, 2147483648
    %v996 = vmul.f32 %v995, 1.442695
    %v997 = vpow.pop %v996
    %v998 = vadd.f32 %v997, 1.0
    %v999 = vrcp.pop %v998
    %v1000 = vmul.f32 %v998, %v999
    %v1001 = vsub.f32 1.0, %v1000
    %v1002 = vmul.f32 %v999, %v1001
    %v1003 = vadd.f32 %v999, %v1002
    %vm1004 = vweird.f32 %v998
    %vm1005 = vweird.f32 %v999
    %vm1006 = vmor %vm1004, %vm1005
    %v1007 = vsel %vm1006, %v999, %v1003
    %v1008 = vand.u32 2147483647, %v998
    %vm1009 = vcmp.eq.f32.partialorder %v1008, 8.507059e+37
    %v1010 = vand.u32 %v998, 2147483648
    %v1011 = vor.u32 1.1754944e-38, %v1010
    %v1012 = vsel %vm1009, %v1011, %v1007
    %v1013 = vmul.f32 1.0, %v1012
    %v1014 = vtanh.pop %v994
    %v1015 = vmul.f32 %v1013, %v963
    %1017 = vrot.lane.b32.xlu0 %v1014, 124
    %v1018 = vpop.permute.xlu0 %1017
    %v1020 = vmul.f32 %v1013, %v1018
    %1022 = vrot.lane.b32.xlu0 %v1020, 2
    %v1023 = vpop.permute.xlu0 %1022
    %v1025 = vadd.f32 %v1015, %v1023
    %1027 = vset.pattern.permute.xlu0 6
    %1028 = vperm.xlu0 %1027, %v1013
    %v1029 = vpop.permute.xlu0 %1028
    %v1031 = vmul.f32 %v1029, %v45
    %1032 = vset.pattern.permute.xlu0 7
    %1033 = vperm.xlu0 %1032, %v1013
    %v1034 = vpop.permute.xlu0 %1033
    %v1036 = vmul.f32 %v1034, %v46
    %v1037 = vtanh.pop %v1025
    %1038 = vset.pattern.permute.xlu0 16
    %1039 = vperm.xlu0 %1038, %v57
    %v1040 = vpop.permute.xlu0 %1039
    %v1042 = vmul.f32 %v1040, %v43
    %v1043 = vadd.f32 %v1042, %v44
    %1045 = vset.pattern.permute.xlu0 2
    %1046 = vperm.xlu0 %1045, %v1037
    %v1047 = vpop.permute.xlu0 %1046
    %v1049 = vmul.f32 %v1047, %v1031
    %v1050 = vadd.f32 %v1043, %v1049
    %1051 = vset.pattern.permute.xlu0 3
    %1052 = vperm.xlu0 %1051, %v1037
    %v1053 = vpop.permute.xlu0 %1052
    %v1055 = vmul.f32 %v1053, %v1036
    %v1056 = vadd.f32 %v1050, %v1055
    %v1057 = vxor.u32 %v1056, 2147483648
    %v1058 = vmul.f32 %v1057, 1.442695
    %v1059 = vpow.pop %v1058
    %v1060 = vadd.f32 %v1059, 1.0
    %v1061 = vrcp.pop %v1060
    %v1062 = vmul.f32 %v1060, %v1061
    %v1063 = vsub.f32 1.0, %v1062
    %v1064 = vmul.f32 %v1061, %v1063
    %v1065 = vadd.f32 %v1061, %v1064
    %vm1066 = vweird.f32 %v1060
    %vm1067 = vweird.f32 %v1061
    %vm1068 = vmor %vm1066, %vm1067
    %v1069 = vsel %vm1068, %v1061, %v1065
    %v1070 = vand.u32 2147483647, %v1060
    %vm1071 = vcmp.eq.f32.partialorder %v1070, 8.507059e+37
    %v1072 = vand.u32 %v1060, 2147483648
    %v1073 = vor.u32 1.1754944e-38, %v1072
    %v1074 = vsel %vm1071, %v1073, %v1069
    %v1075 = vmul.f32 1.0, %v1074
    %v1076 = vtanh.pop %v1056
    %v1077 = vmul.f32 %v1075, %v1025
    %1079 = vrot.lane.b32.xlu0 %v1076, 124
    %v1080 = vpop.permute.xlu0 %1079
    %v1082 = vmul.f32 %v1075, %v1080
    %1084 = vrot.lane.b32.xlu0 %v1082, 2
    %v1085 = vpop.permute.xlu0 %1084
    %v1087 = vadd.f32 %v1077, %v1085
    %1089 = vset.pattern.permute.xlu0 6
    %1090 = vperm.xlu0 %1089, %v1075
    %v1091 = vpop.permute.xlu0 %1090
    %v1093 = vmul.f32 %v1091, %v45
    %1094 = vset.pattern.permute.xlu0 7
    %1095 = vperm.xlu0 %1094, %v1075
    %v1096 = vpop.permute.xlu0 %1095
    %v1098 = vmul.f32 %v1096, %v46
    %v1099 = vtanh.pop %v1087
    %1100 = vset.pattern.permute.xlu0 17
    %1101 = vperm.xlu0 %1100, %v57
    %v1102 = vpop.permute.xlu0 %1101
    %v1104 = vmul.f32 %v1102, %v43
    %v1105 = vadd.f32 %v1104, %v44
    %1107 = vset.pattern.permute.xlu0 2
    %1108 = vperm.xlu0 %1107, %v1099
    %v1109 = vpop.permute.xlu0 %1108
    %v1111 = vmul.f32 %v1109, %v1093
    %v1112 = vadd.f32 %v1105, %v1111
    %1113 = vset.pattern.permute.xlu0 3
    %1114 = vperm.xlu0 %1113, %v1099
    %v1115 = vpop.permute.xlu0 %1114
    %v1117 = vmul.f32 %v1115, %v1098
    %v1118 = vadd.f32 %v1112, %v1117
    %v1119 = vxor.u32 %v1118, 2147483648
    %v1120 = vmul.f32 %v1119, 1.442695
    %v1121 = vpow.pop %v1120
    %v1122 = vadd.f32 %v1121, 1.0
    %v1123 = vrcp.pop %v1122
    %v1124 = vmul.f32 %v1122, %v1123
    %v1125 = vsub.f32 1.0, %v1124
    %v1126 = vmul.f32 %v1123, %v1125
    %v1127 = vadd.f32 %v1123, %v1126
    %vm1128 = vweird.f32 %v1122
    %vm1129 = vweird.f32 %v1123
    %vm1130 = vmor %vm1128, %vm1129
    %v1131 = vsel %vm1130, %v1123, %v1127
    %v1132 = vand.u32 2147483647, %v1122
    %vm1133 = vcmp.eq.f32.partialorder %v1132, 8.507059e+37
    %v1134 = vand.u32 %v1122, 2147483648
    %v1135 = vor.u32 1.1754944e-38, %v1134
    %v1136 = vsel %vm1133, %v1135, %v1131
    %v1137 = vmul.f32 1.0, %v1136
    %v1138 = vtanh.pop %v1118
    %v1139 = vmul.f32 %v1137, %v1087
    %1141 = vrot.lane.b32.xlu0 %v1138, 124
    %v1142 = vpop.permute.xlu0 %1141
    %v1144 = vmul.f32 %v1137, %v1142
    %1146 = vrot.lane.b32.xlu0 %v1144, 2
    %v1147 = vpop.permute.xlu0 %1146
    %v1149 = vadd.f32 %v1139, %v1147
    %1151 = vset.pattern.permute.xlu0 6
    %1152 = vperm.xlu0 %1151, %v1137
    %v1153 = vpop.permute.xlu0 %1152
    %v1155 = vmul.f32 %v1153, %v45
    %1156 = vset.pattern.permute.xlu0 7
    %1157 = vperm.xlu0 %1156, %v1137
    %v1158 = vpop.permute.xlu0 %1157
    %v1160 = vmul.f32 %v1158, %v46
    %v1161 = vtanh.pop %v1149
    %1162 = vset.pattern.permute.xlu0 18
    %1163 = vperm.xlu0 %1162, %v57
    %v1164 = vpop.permute.xlu0 %1163
    %v1166 = vmul.f32 %v1164, %v43
    %v1167 = vadd.f32 %v1166, %v44
    %1169 = vset.pattern.permute.xlu0 2
    %1170 = vperm.xlu0 %1169, %v1161
    %v1171 = vpop.permute.xlu0 %1170
    %v1173 = vmul.f32 %v1171, %v1155
    %v1174 = vadd.f32 %v1167, %v1173
    %1175 = vset.pattern.permute.xlu0 3
    %1176 = vperm.xlu0 %1175, %v1161
    %v1177 = vpop.permute.xlu0 %1176
    %v1179 = vmul.f32 %v1177, %v1160
    %v1180 = vadd.f32 %v1174, %v1179
    %v1181 = vxor.u32 %v1180, 2147483648
    %v1182 = vmul.f32 %v1181, 1.442695
    %v1183 = vpow.pop %v1182
    %v1184 = vadd.f32 %v1183, 1.0
    %v1185 = vrcp.pop %v1184
    %v1186 = vmul.f32 %v1184, %v1185
    %v1187 = vsub.f32 1.0, %v1186
    %v1188 = vmul.f32 %v1185, %v1187
    %v1189 = vadd.f32 %v1185, %v1188
    %vm1190 = vweird.f32 %v1184
    %vm1191 = vweird.f32 %v1185
    %vm1192 = vmor %vm1190, %vm1191
    %v1193 = vsel %vm1192, %v1185, %v1189
    %v1194 = vand.u32 2147483647, %v1184
    %vm1195 = vcmp.eq.f32.partialorder %v1194, 8.507059e+37
    %v1196 = vand.u32 %v1184, 2147483648
    %v1197 = vor.u32 1.1754944e-38, %v1196
    %v1198 = vsel %vm1195, %v1197, %v1193
    %v1199 = vmul.f32 1.0, %v1198
    %v1200 = vtanh.pop %v1180
    %v1201 = vmul.f32 %v1199, %v1149
    %1203 = vrot.lane.b32.xlu0 %v1200, 124
    %v1204 = vpop.permute.xlu0 %1203
    %v1206 = vmul.f32 %v1199, %v1204
    %1208 = vrot.lane.b32.xlu0 %v1206, 2
    %v1209 = vpop.permute.xlu0 %1208
    %v1211 = vadd.f32 %v1201, %v1209
    %1213 = vset.pattern.permute.xlu0 6
    %1214 = vperm.xlu0 %1213, %v1199
    %v1215 = vpop.permute.xlu0 %1214
    %v1217 = vmul.f32 %v1215, %v45
    %1218 = vset.pattern.permute.xlu0 7
    %1219 = vperm.xlu0 %1218, %v1199
    %v1220 = vpop.permute.xlu0 %1219
    %v1222 = vmul.f32 %v1220, %v46
    %v1223 = vtanh.pop %v1211
    %1224 = vset.pattern.permute.xlu0 19
    %1225 = vperm.xlu0 %1224, %v57
    %v1226 = vpop.permute.xlu0 %1225
    %v1228 = vmul.f32 %v1226, %v43
    %v1229 = vadd.f32 %v1228, %v44
    %1231 = vset.pattern.permute.xlu0 2
    %1232 = vperm.xlu0 %1231, %v1223
    %v1233 = vpop.permute.xlu0 %1232
    %v1235 = vmul.f32 %v1233, %v1217
    %v1236 = vadd.f32 %v1229, %v1235
    %1237 = vset.pattern.permute.xlu0 3
    %1238 = vperm.xlu0 %1237, %v1223
    %v1239 = vpop.permute.xlu0 %1238
    %v1241 = vmul.f32 %v1239, %v1222
    %v1242 = vadd.f32 %v1236, %v1241
    %v1243 = vxor.u32 %v1242, 2147483648
    %v1244 = vmul.f32 %v1243, 1.442695
    %v1245 = vpow.pop %v1244
    %v1246 = vadd.f32 %v1245, 1.0
    %v1247 = vrcp.pop %v1246
    %v1248 = vmul.f32 %v1246, %v1247
    %v1249 = vsub.f32 1.0, %v1248
    %v1250 = vmul.f32 %v1247, %v1249
    %v1251 = vadd.f32 %v1247, %v1250
    %vm1252 = vweird.f32 %v1246
    %vm1253 = vweird.f32 %v1247
    %vm1254 = vmor %vm1252, %vm1253
    %v1255 = vsel %vm1254, %v1247, %v1251
    %v1256 = vand.u32 2147483647, %v1246
    %vm1257 = vcmp.eq.f32.partialorder %v1256, 8.507059e+37
    %v1258 = vand.u32 %v1246, 2147483648
    %v1259 = vor.u32 1.1754944e-38, %v1258
    %v1260 = vsel %vm1257, %v1259, %v1255
    %v1261 = vmul.f32 1.0, %v1260
    %v1262 = vtanh.pop %v1242
    %v1263 = vmul.f32 %v1261, %v1211
    %1265 = vrot.lane.b32.xlu0 %v1262, 124
    %v1266 = vpop.permute.xlu0 %1265
    %v1268 = vmul.f32 %v1261, %v1266
    %1270 = vrot.lane.b32.xlu0 %v1268, 2
    %v1271 = vpop.permute.xlu0 %1270
    %v1273 = vadd.f32 %v1263, %v1271
    %1275 = vset.pattern.permute.xlu0 6
    %1276 = vperm.xlu0 %1275, %v1261
    %v1277 = vpop.permute.xlu0 %1276
    %v1279 = vmul.f32 %v1277, %v45
    %1280 = vset.pattern.permute.xlu0 7
    %1281 = vperm.xlu0 %1280, %v1261
    %v1282 = vpop.permute.xlu0 %1281
    %v1284 = vmul.f32 %v1282, %v46
    %v1285 = vtanh.pop %v1273
    %1286 = vset.pattern.permute.xlu0 20
    %1287 = vperm.xlu0 %1286, %v57
    %v1288 = vpop.permute.xlu0 %1287
    %v1290 = vmul.f32 %v1288, %v43
    %v1291 = vadd.f32 %v1290, %v44
    %1293 = vset.pattern.permute.xlu0 2
    %1294 = vperm.xlu0 %1293, %v1285
    %v1295 = vpop.permute.xlu0 %1294
    %v1297 = vmul.f32 %v1295, %v1279
    %v1298 = vadd.f32 %v1291, %v1297
    %1299 = vset.pattern.permute.xlu0 3
    %1300 = vperm.xlu0 %1299, %v1285
    %v1301 = vpop.permute.xlu0 %1300
    %v1303 = vmul.f32 %v1301, %v1284
    %v1304 = vadd.f32 %v1298, %v1303
    %v1305 = vxor.u32 %v1304, 2147483648
    %v1306 = vmul.f32 %v1305, 1.442695
    %v1307 = vpow.pop %v1306
    %v1308 = vadd.f32 %v1307, 1.0
    %v1309 = vrcp.pop %v1308
    %v1310 = vmul.f32 %v1308, %v1309
    %v1311 = vsub.f32 1.0, %v1310
    %v1312 = vmul.f32 %v1309, %v1311
    %v1313 = vadd.f32 %v1309, %v1312
    %vm1314 = vweird.f32 %v1308
    %vm1315 = vweird.f32 %v1309
    %vm1316 = vmor %vm1314, %vm1315
    %v1317 = vsel %vm1316, %v1309, %v1313
    %v1318 = vand.u32 2147483647, %v1308
    %vm1319 = vcmp.eq.f32.partialorder %v1318, 8.507059e+37
    %v1320 = vand.u32 %v1308, 2147483648
    %v1321 = vor.u32 1.1754944e-38, %v1320
    %v1322 = vsel %vm1319, %v1321, %v1317
    %v1323 = vmul.f32 1.0, %v1322
    %v1324 = vtanh.pop %v1304
    %v1325 = vmul.f32 %v1323, %v1273
    %1327 = vrot.lane.b32.xlu0 %v1324, 124
    %v1328 = vpop.permute.xlu0 %1327
    %v1330 = vmul.f32 %v1323, %v1328
    %1332 = vrot.lane.b32.xlu0 %v1330, 2
    %v1333 = vpop.permute.xlu0 %1332
    %v1335 = vadd.f32 %v1325, %v1333
    %1337 = vset.pattern.permute.xlu0 6
    %1338 = vperm.xlu0 %1337, %v1323
    %v1339 = vpop.permute.xlu0 %1338
    %v1341 = vmul.f32 %v1339, %v45
    %1342 = vset.pattern.permute.xlu0 7
    %1343 = vperm.xlu0 %1342, %v1323
    %v1344 = vpop.permute.xlu0 %1343
    %v1346 = vmul.f32 %v1344, %v46
    %v1347 = vtanh.pop %v1335
    %1348 = vset.pattern.permute.xlu0 21
    %1349 = vperm.xlu0 %1348, %v57
    %v1350 = vpop.permute.xlu0 %1349
    %v1352 = vmul.f32 %v1350, %v43
    %v1353 = vadd.f32 %v1352, %v44
    %1355 = vset.pattern.permute.xlu0 2
    %1356 = vperm.xlu0 %1355, %v1347
    %v1357 = vpop.permute.xlu0 %1356
    %v1359 = vmul.f32 %v1357, %v1341
    %v1360 = vadd.f32 %v1353, %v1359
    %1361 = vset.pattern.permute.xlu0 3
    %1362 = vperm.xlu0 %1361, %v1347
    %v1363 = vpop.permute.xlu0 %1362
    %v1365 = vmul.f32 %v1363, %v1346
    %v1366 = vadd.f32 %v1360, %v1365
    %v1367 = vxor.u32 %v1366, 2147483648
    %v1368 = vmul.f32 %v1367, 1.442695
    %v1369 = vpow.pop %v1368
    %v1370 = vadd.f32 %v1369, 1.0
    %v1371 = vrcp.pop %v1370
    %v1372 = vmul.f32 %v1370, %v1371
    %v1373 = vsub.f32 1.0, %v1372
    %v1374 = vmul.f32 %v1371, %v1373
    %v1375 = vadd.f32 %v1371, %v1374
    %vm1376 = vweird.f32 %v1370
    %vm1377 = vweird.f32 %v1371
    %vm1378 = vmor %vm1376, %vm1377
    %v1379 = vsel %vm1378, %v1371, %v1375
    %v1380 = vand.u32 2147483647, %v1370
    %vm1381 = vcmp.eq.f32.partialorder %v1380, 8.507059e+37
    %v1382 = vand.u32 %v1370, 2147483648
    %v1383 = vor.u32 1.1754944e-38, %v1382
    %v1384 = vsel %vm1381, %v1383, %v1379
    %v1385 = vmul.f32 1.0, %v1384
    %v1386 = vtanh.pop %v1366
    %v1387 = vmul.f32 %v1385, %v1335
    %1389 = vrot.lane.b32.xlu0 %v1386, 124
    %v1390 = vpop.permute.xlu0 %1389
    %v1392 = vmul.f32 %v1385, %v1390
    %1394 = vrot.lane.b32.xlu0 %v1392, 2
    %v1395 = vpop.permute.xlu0 %1394
    %v1397 = vadd.f32 %v1387, %v1395
    %1399 = vset.pattern.permute.xlu0 6
    %1400 = vperm.xlu0 %1399, %v1385
    %v1401 = vpop.permute.xlu0 %1400
    %v1403 = vmul.f32 %v1401, %v45
    %1404 = vset.pattern.permute.xlu0 7
    %1405 = vperm.xlu0 %1404, %v1385
    %v1406 = vpop.permute.xlu0 %1405
    %v1408 = vmul.f32 %v1406, %v46
    %v1409 = vtanh.pop %v1397
    %1410 = vset.pattern.permute.xlu0 22
    %1411 = vperm.xlu0 %1410, %v57
    %v1412 = vpop.permute.xlu0 %1411
    %v1414 = vmul.f32 %v1412, %v43
    %v1415 = vadd.f32 %v1414, %v44
    %1417 = vset.pattern.permute.xlu0 2
    %1418 = vperm.xlu0 %1417, %v1409
    %v1419 = vpop.permute.xlu0 %1418
    %v1421 = vmul.f32 %v1419, %v1403
    %v1422 = vadd.f32 %v1415, %v1421
    %1423 = vset.pattern.permute.xlu0 3
    %1424 = vperm.xlu0 %1423, %v1409
    %v1425 = vpop.permute.xlu0 %1424
    %v1427 = vmul.f32 %v1425, %v1408
    %v1428 = vadd.f32 %v1422, %v1427
    %v1429 = vxor.u32 %v1428, 2147483648
    %v1430 = vmul.f32 %v1429, 1.442695
    %v1431 = vpow.pop %v1430
    %v1432 = vadd.f32 %v1431, 1.0
    %v1433 = vrcp.pop %v1432
    %v1434 = vmul.f32 %v1432, %v1433
    %v1435 = vsub.f32 1.0, %v1434
    %v1436 = vmul.f32 %v1433, %v1435
    %v1437 = vadd.f32 %v1433, %v1436
    %vm1438 = vweird.f32 %v1432
    %vm1439 = vweird.f32 %v1433
    %vm1440 = vmor %vm1438, %vm1439
    %v1441 = vsel %vm1440, %v1433, %v1437
    %v1442 = vand.u32 2147483647, %v1432
    %vm1443 = vcmp.eq.f32.partialorder %v1442, 8.507059e+37
    %v1444 = vand.u32 %v1432, 2147483648
    %v1445 = vor.u32 1.1754944e-38, %v1444
    %v1446 = vsel %vm1443, %v1445, %v1441
    %v1447 = vmul.f32 1.0, %v1446
    %v1448 = vtanh.pop %v1428
    %v1449 = vmul.f32 %v1447, %v1397
    %1451 = vrot.lane.b32.xlu0 %v1448, 124
    %v1452 = vpop.permute.xlu0 %1451
    %v1454 = vmul.f32 %v1447, %v1452
    %1456 = vrot.lane.b32.xlu0 %v1454, 2
    %v1457 = vpop.permute.xlu0 %1456
    %v1459 = vadd.f32 %v1449, %v1457
    %1461 = vset.pattern.permute.xlu0 6
    %1462 = vperm.xlu0 %1461, %v1447
    %v1463 = vpop.permute.xlu0 %1462
    %v1465 = vmul.f32 %v1463, %v45
    %1466 = vset.pattern.permute.xlu0 7
    %1467 = vperm.xlu0 %1466, %v1447
    %v1468 = vpop.permute.xlu0 %1467
    %v1470 = vmul.f32 %v1468, %v46
    %v1471 = vtanh.pop %v1459
    %1472 = vset.pattern.permute.xlu0 23
    %1473 = vperm.xlu0 %1472, %v57
    %v1474 = vpop.permute.xlu0 %1473
    %v1476 = vmul.f32 %v1474, %v43
    %v1477 = vadd.f32 %v1476, %v44
    %1479 = vset.pattern.permute.xlu0 2
    %1480 = vperm.xlu0 %1479, %v1471
    %v1481 = vpop.permute.xlu0 %1480
    %v1483 = vmul.f32 %v1481, %v1465
    %v1484 = vadd.f32 %v1477, %v1483
    %1485 = vset.pattern.permute.xlu0 3
    %1486 = vperm.xlu0 %1485, %v1471
    %v1487 = vpop.permute.xlu0 %1486
    %v1489 = vmul.f32 %v1487, %v1470
    %v1490 = vadd.f32 %v1484, %v1489
    %v1491 = vxor.u32 %v1490, 2147483648
    %v1492 = vmul.f32 %v1491, 1.442695
    %v1493 = vpow.pop %v1492
    %v1494 = vadd.f32 %v1493, 1.0
    %v1495 = vrcp.pop %v1494
    %v1496 = vmul.f32 %v1494, %v1495
    %v1497 = vsub.f32 1.0, %v1496
    %v1498 = vmul.f32 %v1495, %v1497
    %v1499 = vadd.f32 %v1495, %v1498
    %vm1500 = vweird.f32 %v1494
    %vm1501 = vweird.f32 %v1495
    %vm1502 = vmor %vm1500, %vm1501
    %v1503 = vsel %vm1502, %v1495, %v1499
    %v1504 = vand.u32 2147483647, %v1494
    %vm1505 = vcmp.eq.f32.partialorder %v1504, 8.507059e+37
    %v1506 = vand.u32 %v1494, 2147483648
    %v1507 = vor.u32 1.1754944e-38, %v1506
    %v1508 = vsel %vm1505, %v1507, %v1503
    %v1509 = vmul.f32 1.0, %v1508
    %v1510 = vtanh.pop %v1490
    %v1511 = vmul.f32 %v1509, %v1459
    %1513 = vrot.lane.b32.xlu0 %v1510, 124
    %v1514 = vpop.permute.xlu0 %1513
    %v1516 = vmul.f32 %v1509, %v1514
    %1518 = vrot.lane.b32.xlu0 %v1516, 2
    %v1519 = vpop.permute.xlu0 %1518
    %v1521 = vadd.f32 %v1511, %v1519
    %1523 = vset.pattern.permute.xlu0 6
    %1524 = vperm.xlu0 %1523, %v1509
    %v1525 = vpop.permute.xlu0 %1524
    %v1527 = vmul.f32 %v1525, %v45
    %1528 = vset.pattern.permute.xlu0 7
    %1529 = vperm.xlu0 %1528, %v1509
    %v1530 = vpop.permute.xlu0 %1529
    %v1532 = vmul.f32 %v1530, %v46
    %v1533 = vtanh.pop %v1521
    %1534 = vset.pattern.permute.xlu0 24
    %1535 = vperm.xlu0 %1534, %v57
    %v1536 = vpop.permute.xlu0 %1535
    %v1538 = vmul.f32 %v1536, %v43
    %v1539 = vadd.f32 %v1538, %v44
    %1541 = vset.pattern.permute.xlu0 2
    %1542 = vperm.xlu0 %1541, %v1533
    %v1543 = vpop.permute.xlu0 %1542
    %v1545 = vmul.f32 %v1543, %v1527
    %v1546 = vadd.f32 %v1539, %v1545
    %1547 = vset.pattern.permute.xlu0 3
    %1548 = vperm.xlu0 %1547, %v1533
    %v1549 = vpop.permute.xlu0 %1548
    %v1551 = vmul.f32 %v1549, %v1532
    %v1552 = vadd.f32 %v1546, %v1551
    %v1553 = vxor.u32 %v1552, 2147483648
    %v1554 = vmul.f32 %v1553, 1.442695
    %v1555 = vpow.pop %v1554
    %v1556 = vadd.f32 %v1555, 1.0
    %v1557 = vrcp.pop %v1556
    %v1558 = vmul.f32 %v1556, %v1557
    %v1559 = vsub.f32 1.0, %v1558
    %v1560 = vmul.f32 %v1557, %v1559
    %v1561 = vadd.f32 %v1557, %v1560
    %vm1562 = vweird.f32 %v1556
    %vm1563 = vweird.f32 %v1557
    %vm1564 = vmor %vm1562, %vm1563
    %v1565 = vsel %vm1564, %v1557, %v1561
    %v1566 = vand.u32 2147483647, %v1556
    %vm1567 = vcmp.eq.f32.partialorder %v1566, 8.507059e+37
    %v1568 = vand.u32 %v1556, 2147483648
    %v1569 = vor.u32 1.1754944e-38, %v1568
    %v1570 = vsel %vm1567, %v1569, %v1565
    %v1571 = vmul.f32 1.0, %v1570
    %v1572 = vtanh.pop %v1552
    %v1573 = vmul.f32 %v1571, %v1521
    %1575 = vrot.lane.b32.xlu0 %v1572, 124
    %v1576 = vpop.permute.xlu0 %1575
    %v1578 = vmul.f32 %v1571, %v1576
    %1580 = vrot.lane.b32.xlu0 %v1578, 2
    %v1581 = vpop.permute.xlu0 %1580
    %v1583 = vadd.f32 %v1573, %v1581
    %1585 = vset.pattern.permute.xlu0 6
    %1586 = vperm.xlu0 %1585, %v1571
    %v1587 = vpop.permute.xlu0 %1586
    %v1589 = vmul.f32 %v1587, %v45
    %1590 = vset.pattern.permute.xlu0 7
    %1591 = vperm.xlu0 %1590, %v1571
    %v1592 = vpop.permute.xlu0 %1591
    %v1594 = vmul.f32 %v1592, %v46
    %v1595 = vtanh.pop %v1583
    %1596 = vset.pattern.permute.xlu0 25
    %1597 = vperm.xlu0 %1596, %v57
    %v1598 = vpop.permute.xlu0 %1597
    %v1600 = vmul.f32 %v1598, %v43
    %v1601 = vadd.f32 %v1600, %v44
    %1603 = vset.pattern.permute.xlu0 2
    %1604 = vperm.xlu0 %1603, %v1595
    %v1605 = vpop.permute.xlu0 %1604
    %v1607 = vmul.f32 %v1605, %v1589
    %v1608 = vadd.f32 %v1601, %v1607
    %1609 = vset.pattern.permute.xlu0 3
    %1610 = vperm.xlu0 %1609, %v1595
    %v1611 = vpop.permute.xlu0 %1610
    %v1613 = vmul.f32 %v1611, %v1594
    %v1614 = vadd.f32 %v1608, %v1613
    %v1615 = vxor.u32 %v1614, 2147483648
    %v1616 = vmul.f32 %v1615, 1.442695
    %v1617 = vpow.pop %v1616
    %v1618 = vadd.f32 %v1617, 1.0
    %v1619 = vrcp.pop %v1618
    %v1620 = vmul.f32 %v1618, %v1619
    %v1621 = vsub.f32 1.0, %v1620
    %v1622 = vmul.f32 %v1619, %v1621
    %v1623 = vadd.f32 %v1619, %v1622
    %vm1624 = vweird.f32 %v1618
    %vm1625 = vweird.f32 %v1619
    %vm1626 = vmor %vm1624, %vm1625
    %v1627 = vsel %vm1626, %v1619, %v1623
    %v1628 = vand.u32 2147483647, %v1618
    %vm1629 = vcmp.eq.f32.partialorder %v1628, 8.507059e+37
    %v1630 = vand.u32 %v1618, 2147483648
    %v1631 = vor.u32 1.1754944e-38, %v1630
    %v1632 = vsel %vm1629, %v1631, %v1627
    %v1633 = vmul.f32 1.0, %v1632
    %v1634 = vtanh.pop %v1614
    %v1635 = vmul.f32 %v1633, %v1583
    %1637 = vrot.lane.b32.xlu0 %v1634, 124
    %v1638 = vpop.permute.xlu0 %1637
    %v1640 = vmul.f32 %v1633, %v1638
    %1642 = vrot.lane.b32.xlu0 %v1640, 2
    %v1643 = vpop.permute.xlu0 %1642
    %v1645 = vadd.f32 %v1635, %v1643
    %1647 = vset.pattern.permute.xlu0 6
    %1648 = vperm.xlu0 %1647, %v1633
    %v1649 = vpop.permute.xlu0 %1648
    %v1651 = vmul.f32 %v1649, %v45
    %1652 = vset.pattern.permute.xlu0 7
    %1653 = vperm.xlu0 %1652, %v1633
    %v1654 = vpop.permute.xlu0 %1653
    %v1656 = vmul.f32 %v1654, %v46
    %v1657 = vtanh.pop %v1645
    %1658 = vset.pattern.permute.xlu0 26
    %1659 = vperm.xlu0 %1658, %v57
    %v1660 = vpop.permute.xlu0 %1659
    %v1662 = vmul.f32 %v1660, %v43
    %v1663 = vadd.f32 %v1662, %v44
    %1665 = vset.pattern.permute.xlu0 2
    %1666 = vperm.xlu0 %1665, %v1657
    %v1667 = vpop.permute.xlu0 %1666
    %v1669 = vmul.f32 %v1667, %v1651
    %v1670 = vadd.f32 %v1663, %v1669
    %1671 = vset.pattern.permute.xlu0 3
    %1672 = vperm.xlu0 %1671, %v1657
    %v1673 = vpop.permute.xlu0 %1672
    %v1675 = vmul.f32 %v1673, %v1656
    %v1676 = vadd.f32 %v1670, %v1675
    %v1677 = vxor.u32 %v1676, 2147483648
    %v1678 = vmul.f32 %v1677, 1.442695
    %v1679 = vpow.pop %v1678
    %v1680 = vadd.f32 %v1679, 1.0
    %v1681 = vrcp.pop %v1680
    %v1682 = vmul.f32 %v1680, %v1681
    %v1683 = vsub.f32 1.0, %v1682
    %v1684 = vmul.f32 %v1681, %v1683
    %v1685 = vadd.f32 %v1681, %v1684
    %vm1686 = vweird.f32 %v1680
    %vm1687 = vweird.f32 %v1681
    %vm1688 = vmor %vm1686, %vm1687
    %v1689 = vsel %vm1688, %v1681, %v1685
    %v1690 = vand.u32 2147483647, %v1680
    %vm1691 = vcmp.eq.f32.partialorder %v1690, 8.507059e+37
    %v1692 = vand.u32 %v1680, 2147483648
    %v1693 = vor.u32 1.1754944e-38, %v1692
    %v1694 = vsel %vm1691, %v1693, %v1689
    %v1695 = vmul.f32 1.0, %v1694
    %v1696 = vtanh.pop %v1676
    %v1697 = vmul.f32 %v1695, %v1645
    %1699 = vrot.lane.b32.xlu0 %v1696, 124
    %v1700 = vpop.permute.xlu0 %1699
    %v1702 = vmul.f32 %v1695, %v1700
    %1704 = vrot.lane.b32.xlu0 %v1702, 2
    %v1705 = vpop.permute.xlu0 %1704
    %v1707 = vadd.f32 %v1697, %v1705
    %1709 = vset.pattern.permute.xlu0 6
    %1710 = vperm.xlu0 %1709, %v1695
    %v1711 = vpop.permute.xlu0 %1710
    %v1713 = vmul.f32 %v1711, %v45
    %1714 = vset.pattern.permute.xlu0 7
    %1715 = vperm.xlu0 %1714, %v1695
    %v1716 = vpop.permute.xlu0 %1715
    %v1718 = vmul.f32 %v1716, %v46
    %v1719 = vtanh.pop %v1707
    %1720 = vset.pattern.permute.xlu0 27
    %1721 = vperm.xlu0 %1720, %v57
    %v1722 = vpop.permute.xlu0 %1721
    %v1724 = vmul.f32 %v1722, %v43
    %v1725 = vadd.f32 %v1724, %v44
    %1727 = vset.pattern.permute.xlu0 2
    %1728 = vperm.xlu0 %1727, %v1719
    %v1729 = vpop.permute.xlu0 %1728
    %v1731 = vmul.f32 %v1729, %v1713
    %v1732 = vadd.f32 %v1725, %v1731
    %1733 = vset.pattern.permute.xlu0 3
    %1734 = vperm.xlu0 %1733, %v1719
    %v1735 = vpop.permute.xlu0 %1734
    %v1737 = vmul.f32 %v1735, %v1718
    %v1738 = vadd.f32 %v1732, %v1737
    %v1739 = vxor.u32 %v1738, 2147483648
    %v1740 = vmul.f32 %v1739, 1.442695
    %v1741 = vpow.pop %v1740
    %v1742 = vadd.f32 %v1741, 1.0
    %v1743 = vrcp.pop %v1742
    %v1744 = vmul.f32 %v1742, %v1743
    %v1745 = vsub.f32 1.0, %v1744
    %v1746 = vmul.f32 %v1743, %v1745
    %v1747 = vadd.f32 %v1743, %v1746
    %vm1748 = vweird.f32 %v1742
    %vm1749 = vweird.f32 %v1743
    %vm1750 = vmor %vm1748, %vm1749
    %v1751 = vsel %vm1750, %v1743, %v1747
    %v1752 = vand.u32 2147483647, %v1742
    %vm1753 = vcmp.eq.f32.partialorder %v1752, 8.507059e+37
    %v1754 = vand.u32 %v1742, 2147483648
    %v1755 = vor.u32 1.1754944e-38, %v1754
    %v1756 = vsel %vm1753, %v1755, %v1751
    %v1757 = vmul.f32 1.0, %v1756
    %v1758 = vtanh.pop %v1738
    %v1759 = vmul.f32 %v1757, %v1707
    %1761 = vrot.lane.b32.xlu0 %v1758, 124
    %v1762 = vpop.permute.xlu0 %1761
    %v1764 = vmul.f32 %v1757, %v1762
    %1766 = vrot.lane.b32.xlu0 %v1764, 2
    %v1767 = vpop.permute.xlu0 %1766
    %v1769 = vadd.f32 %v1759, %v1767
    %1771 = vset.pattern.permute.xlu0 6
    %1772 = vperm.xlu0 %1771, %v1757
    %v1773 = vpop.permute.xlu0 %1772
    %v1775 = vmul.f32 %v1773, %v45
    %1776 = vset.pattern.permute.xlu0 7
    %1777 = vperm.xlu0 %1776, %v1757
    %v1778 = vpop.permute.xlu0 %1777
    %v1780 = vmul.f32 %v1778, %v46
    %v1781 = vtanh.pop %v1769
    %1782 = vset.pattern.permute.xlu0 28
    %1783 = vperm.xlu0 %1782, %v57
    %v1784 = vpop.permute.xlu0 %1783
    %v1786 = vmul.f32 %v1784, %v43
    %v1787 = vadd.f32 %v1786, %v44
    %1789 = vset.pattern.permute.xlu0 2
    %1790 = vperm.xlu0 %1789, %v1781
    %v1791 = vpop.permute.xlu0 %1790
    %v1793 = vmul.f32 %v1791, %v1775
    %v1794 = vadd.f32 %v1787, %v1793
    %1795 = vset.pattern.permute.xlu0 3
    %1796 = vperm.xlu0 %1795, %v1781
    %v1797 = vpop.permute.xlu0 %1796
    %v1799 = vmul.f32 %v1797, %v1780
    %v1800 = vadd.f32 %v1794, %v1799
    %v1801 = vxor.u32 %v1800, 2147483648
    %v1802 = vmul.f32 %v1801, 1.442695
    %v1803 = vpow.pop %v1802
    %v1804 = vadd.f32 %v1803, 1.0
    %v1805 = vrcp.pop %v1804
    %v1806 = vmul.f32 %v1804, %v1805
    %v1807 = vsub.f32 1.0, %v1806
    %v1808 = vmul.f32 %v1805, %v1807
    %v1809 = vadd.f32 %v1805, %v1808
    %vm1810 = vweird.f32 %v1804
    %vm1811 = vweird.f32 %v1805
    %vm1812 = vmor %vm1810, %vm1811
    %v1813 = vsel %vm1812, %v1805, %v1809
    %v1814 = vand.u32 2147483647, %v1804
    %vm1815 = vcmp.eq.f32.partialorder %v1814, 8.507059e+37
    %v1816 = vand.u32 %v1804, 2147483648
    %v1817 = vor.u32 1.1754944e-38, %v1816
    %v1818 = vsel %vm1815, %v1817, %v1813
    %v1819 = vmul.f32 1.0, %v1818
    %v1820 = vtanh.pop %v1800
    %v1821 = vmul.f32 %v1819, %v1769
    %1823 = vrot.lane.b32.xlu0 %v1820, 124
    %v1824 = vpop.permute.xlu0 %1823
    %v1826 = vmul.f32 %v1819, %v1824
    %1828 = vrot.lane.b32.xlu0 %v1826, 2
    %v1829 = vpop.permute.xlu0 %1828
    %v1831 = vadd.f32 %v1821, %v1829
    %1833 = vset.pattern.permute.xlu0 6
    %1834 = vperm.xlu0 %1833, %v1819
    %v1835 = vpop.permute.xlu0 %1834
    %v1837 = vmul.f32 %v1835, %v45
    %1838 = vset.pattern.permute.xlu0 7
    %1839 = vperm.xlu0 %1838, %v1819
    %v1840 = vpop.permute.xlu0 %1839
    %v1842 = vmul.f32 %v1840, %v46
    %v1843 = vtanh.pop %v1831
    %1844 = vset.pattern.permute.xlu0 29
    %1845 = vperm.xlu0 %1844, %v57
    %v1846 = vpop.permute.xlu0 %1845
    %v1848 = vmul.f32 %v1846, %v43
    %v1849 = vadd.f32 %v1848, %v44
    %1851 = vset.pattern.permute.xlu0 2
    %1852 = vperm.xlu0 %1851, %v1843
    %v1853 = vpop.permute.xlu0 %1852
    %v1855 = vmul.f32 %v1853, %v1837
    %v1856 = vadd.f32 %v1849, %v1855
    %1857 = vset.pattern.permute.xlu0 3
    %1858 = vperm.xlu0 %1857, %v1843
    %v1859 = vpop.permute.xlu0 %1858
    %v1861 = vmul.f32 %v1859, %v1842
    %v1862 = vadd.f32 %v1856, %v1861
    %v1863 = vxor.u32 %v1862, 2147483648
    %v1864 = vmul.f32 %v1863, 1.442695
    %v1865 = vpow.pop %v1864
    %v1866 = vadd.f32 %v1865, 1.0
    %v1867 = vrcp.pop %v1866
    %v1868 = vmul.f32 %v1866, %v1867
    %v1869 = vsub.f32 1.0, %v1868
    %v1870 = vmul.f32 %v1867, %v1869
    %v1871 = vadd.f32 %v1867, %v1870
    %vm1872 = vweird.f32 %v1866
    %vm1873 = vweird.f32 %v1867
    %vm1874 = vmor %vm1872, %vm1873
    %v1875 = vsel %vm1874, %v1867, %v1871
    %v1876 = vand.u32 2147483647, %v1866
    %vm1877 = vcmp.eq.f32.partialorder %v1876, 8.507059e+37
    %v1878 = vand.u32 %v1866, 2147483648
    %v1879 = vor.u32 1.1754944e-38, %v1878
    %v1880 = vsel %vm1877, %v1879, %v1875
    %v1881 = vmul.f32 1.0, %v1880
    %v1882 = vtanh.pop %v1862
    %v1883 = vmul.f32 %v1881, %v1831
    %1885 = vrot.lane.b32.xlu0 %v1882, 124
    %v1886 = vpop.permute.xlu0 %1885
    %v1888 = vmul.f32 %v1881, %v1886
    %1890 = vrot.lane.b32.xlu0 %v1888, 2
    %v1891 = vpop.permute.xlu0 %1890
    %v1893 = vadd.f32 %v1883, %v1891
    %v1894 = vtanh.pop %v1893
    %1896 = vrot.lane.b32.xlu0 %v1894, 4
    %v1897 = vpop.permute.xlu0 %1896
    %v1899 = vmul.f32 %v1881, %v1897
    %1901 = vset.pattern.permute.xlu0 6
    %1902 = vperm.xlu0 %1901, %v1899
    %v1903 = vpop.permute.xlu0 %1902
    %v1905 = vmul.f32 %v1903, %v47
    %v1906 = vadd.f32 %v49, %v1905
    %1907 = vset.pattern.permute.xlu0 7
    %1908 = vperm.xlu0 %1907, %v1899
    %v1909 = vpop.permute.xlu0 %1908
    %v1911 = vmul.f32 %v1909, %v48
    %v1912 = vadd.f32 %v1906, %v1911
    %1914 = vset.pattern.permute.xlu0 0
    %1915 = vperm.xlu0 %1914, %v1912
    %v1916 = vpop.permute.xlu0 %1915
    %v1918 = vmul.f32 %v1916, %v50
    %v1919 = vadd.f32 %v1918, %v51
    %v1920 = vxor.u32 %v1919, 2147483648
    %v1921 = vmul.f32 %v1920, 1.442695
    %v1922 = vpow.pop %v1921
    %v1923 = vadd.f32 %v1922, 1.0
    %v1924 = vrcp.pop %v1923
    %v1925 = vmul.f32 %v1923, %v1924
    %v1926 = vsub.f32 1.0, %v1925
    %v1927 = vmul.f32 %v1924, %v1926
    %v1928 = vadd.f32 %v1924, %v1927
    %vm1929 = vweird.f32 %v1923
    %vm1930 = vweird.f32 %v1924
    %vm1931 = vmor %vm1929, %vm1930
    %v1932 = vsel %vm1931, %v1924, %v1928
    %v1933 = vand.u32 2147483647, %v1923
    %vm1934 = vcmp.eq.f32.partialorder %v1933, 8.507059e+37
    %v1935 = vand.u32 %v1923, 2147483648
    %v1936 = vor.u32 1.1754944e-38, %v1935
    %v1937 = vsel %vm1934, %v1936, %v1932
    %v1938 = vmul.f32 1.0, %v1937
    %v1939 = vtanh.pop %v1919
    %v1940 = vmul.f32 %v1938, 0.0
    %1942 = vrot.lane.b32.xlu0 %v1939, 124
    %v1943 = vpop.permute.xlu0 %1942
    %v1945 = vmul.f32 %v1938, %v1943
    %1947 = vrot.lane.b32.xlu0 %v1945, 2
    %v1948 = vpop.permute.xlu0 %1947
    %v1950 = vadd.f32 %v1940, %v1948
    %1952 = vset.pattern.permute.xlu0 6
    %1953 = vperm.xlu0 %1952, %v1938
    %v1954 = vpop.permute.xlu0 %1953
    %v1956 = vmul.f32 %v1954, %v52
    %1957 = vset.pattern.permute.xlu0 7
    %1958 = vperm.xlu0 %1957, %v1938
    %v1959 = vpop.permute.xlu0 %1958
    %v1961 = vmul.f32 %v1959, %v53
    %v1962 = vtanh.pop %v1950
    %1963 = vset.pattern.permute.xlu0 1
    %1964 = vperm.xlu0 %1963, %v1912
    %v1965 = vpop.permute.xlu0 %1964
    %v1967 = vmul.f32 %v1965, %v50
    %v1968 = vadd.f32 %v1967, %v51
    %1970 = vset.pattern.permute.xlu0 2
    %1971 = vperm.xlu0 %1970, %v1962
    %v1972 = vpop.permute.xlu0 %1971
    %v1974 = vmul.f32 %v1972, %v1956
    %v1975 = vadd.f32 %v1968, %v1974
    %1976 = vset.pattern.permute.xlu0 3
    %1977 = vperm.xlu0 %1976, %v1962
    %v1978 = vpop.permute.xlu0 %1977
    %v1980 = vmul.f32 %v1978, %v1961
    %v1981 = vadd.f32 %v1975, %v1980
    %v1982 = vxor.u32 %v1981, 2147483648
    %v1983 = vmul.f32 %v1982, 1.442695
    %v1984 = vpow.pop %v1983
    %v1985 = vadd.f32 %v1984, 1.0
    %v1986 = vrcp.pop %v1985
    %v1987 = vmul.f32 %v1985, %v1986
    %v1988 = vsub.f32 1.0, %v1987
    %v1989 = vmul.f32 %v1986, %v1988
    %v1990 = vadd.f32 %v1986, %v1989
    %vm1991 = vweird.f32 %v1985
    %vm1992 = vweird.f32 %v1986
    %vm1993 = vmor %vm1991, %vm1992
    %v1994 = vsel %vm1993, %v1986, %v1990
    %v1995 = vand.u32 2147483647, %v1985
    %vm1996 = vcmp.eq.f32.partialorder %v1995, 8.507059e+37
    %v1997 = vand.u32 %v1985, 2147483648
    %v1998 = vor.u32 1.1754944e-38, %v1997
    %v1999 = vsel %vm1996, %v1998, %v1994
    %v2000 = vmul.f32 1.0, %v1999
    %v2001 = vtanh.pop %v1981
    %v2002 = vmul.f32 %v2000, %v1950
    %2004 = vrot.lane.b32.xlu0 %v2001, 124
    %v2005 = vpop.permute.xlu0 %2004
    %v2007 = vmul.f32 %v2000, %v2005
    %2009 = vrot.lane.b32.xlu0 %v2007, 2
    %v2010 = vpop.permute.xlu0 %2009
    %v2012 = vadd.f32 %v2002, %v2010
    %2014 = vset.pattern.permute.xlu0 6
    %2015 = vperm.xlu0 %2014, %v2000
    %v2016 = vpop.permute.xlu0 %2015
    %v2018 = vmul.f32 %v2016, %v52
    %2019 = vset.pattern.permute.xlu0 7
    %2020 = vperm.xlu0 %2019, %v2000
    %v2021 = vpop.permute.xlu0 %2020
    %v2023 = vmul.f32 %v2021, %v53
    %v2024 = vtanh.pop %v2012
    %2025 = vset.pattern.permute.xlu0 2
    %2026 = vperm.xlu0 %2025, %v1912
    %v2027 = vpop.permute.xlu0 %2026
    %v2029 = vmul.f32 %v2027, %v50
    %v2030 = vadd.f32 %v2029, %v51
    %2032 = vset.pattern.permute.xlu0 2
    %2033 = vperm.xlu0 %2032, %v2024
    %v2034 = vpop.permute.xlu0 %2033
    %v2036 = vmul.f32 %v2034, %v2018
    %v2037 = vadd.f32 %v2030, %v2036
    %2038 = vset.pattern.permute.xlu0 3
    %2039 = vperm.xlu0 %2038, %v2024
    %v2040 = vpop.permute.xlu0 %2039
    %v2042 = vmul.f32 %v2040, %v2023
    %v2043 = vadd.f32 %v2037, %v2042
    %v2044 = vxor.u32 %v2043, 2147483648
    %v2045 = vmul.f32 %v2044, 1.442695
    %v2046 = vpow.pop %v2045
    %v2047 = vadd.f32 %v2046, 1.0
    %v2048 = vrcp.pop %v2047
    %v2049 = vmul.f32 %v2047, %v2048
    %v2050 = vsub.f32 1.0, %v2049
    %v2051 = vmul.f32 %v2048, %v2050
    %v2052 = vadd.f32 %v2048, %v2051
    %vm2053 = vweird.f32 %v2047
    %vm2054 = vweird.f32 %v2048
    %vm2055 = vmor %vm2053, %vm2054
    %v2056 = vsel %vm2055, %v2048, %v2052
    %v2057 = vand.u32 2147483647, %v2047
    %vm2058 = vcmp.eq.f32.partialorder %v2057, 8.507059e+37
    %v2059 = vand.u32 %v2047, 2147483648
    %v2060 = vor.u32 1.1754944e-38, %v2059
    %v2061 = vsel %vm2058, %v2060, %v2056
    %v2062 = vmul.f32 1.0, %v2061
    %v2063 = vtanh.pop %v2043
    %v2064 = vmul.f32 %v2062, %v2012
    %2066 = vrot.lane.b32.xlu0 %v2063, 124
    %v2067 = vpop.permute.xlu0 %2066
    %v2069 = vmul.f32 %v2062, %v2067
    %2071 = vrot.lane.b32.xlu0 %v2069, 2
    %v2072 = vpop.permute.xlu0 %2071
    %v2074 = vadd.f32 %v2064, %v2072
    %2076 = vset.pattern.permute.xlu0 6
    %2077 = vperm.xlu0 %2076, %v2062
    %v2078 = vpop.permute.xlu0 %2077
    %v2080 = vmul.f32 %v2078, %v52
    %2081 = vset.pattern.permute.xlu0 7
    %2082 = vperm.xlu0 %2081, %v2062
    %v2083 = vpop.permute.xlu0 %2082
    %v2085 = vmul.f32 %v2083, %v53
    %v2086 = vtanh.pop %v2074
    %2087 = vset.pattern.permute.xlu0 3
    %2088 = vperm.xlu0 %2087, %v1912
    %v2089 = vpop.permute.xlu0 %2088
    %v2091 = vmul.f32 %v2089, %v50
    %v2092 = vadd.f32 %v2091, %v51
    %2094 = vset.pattern.permute.xlu0 2
    %2095 = vperm.xlu0 %2094, %v2086
    %v2096 = vpop.permute.xlu0 %2095
    %v2098 = vmul.f32 %v2096, %v2080
    %v2099 = vadd.f32 %v2092, %v2098
    %2100 = vset.pattern.permute.xlu0 3
    %2101 = vperm.xlu0 %2100, %v2086
    %v2102 = vpop.permute.xlu0 %2101
    %v2104 = vmul.f32 %v2102, %v2085
    %v2105 = vadd.f32 %v2099, %v2104
    %v2106 = vxor.u32 %v2105, 2147483648
    %v2107 = vmul.f32 %v2106, 1.442695
    %v2108 = vpow.pop %v2107
    %v2109 = vadd.f32 %v2108, 1.0
    %v2110 = vrcp.pop %v2109
    %v2111 = vmul.f32 %v2109, %v2110
    %v2112 = vsub.f32 1.0, %v2111
    %v2113 = vmul.f32 %v2110, %v2112
    %v2114 = vadd.f32 %v2110, %v2113
    %vm2115 = vweird.f32 %v2109
    %vm2116 = vweird.f32 %v2110
    %vm2117 = vmor %vm2115, %vm2116
    %v2118 = vsel %vm2117, %v2110, %v2114
    %v2119 = vand.u32 2147483647, %v2109
    %vm2120 = vcmp.eq.f32.partialorder %v2119, 8.507059e+37
    %v2121 = vand.u32 %v2109, 2147483648
    %v2122 = vor.u32 1.1754944e-38, %v2121
    %v2123 = vsel %vm2120, %v2122, %v2118
    %v2124 = vmul.f32 1.0, %v2123
    %v2125 = vtanh.pop %v2105
    %v2126 = vmul.f32 %v2124, %v2074
    %2128 = vrot.lane.b32.xlu0 %v2125, 124
    %v2129 = vpop.permute.xlu0 %2128
    %v2131 = vmul.f32 %v2124, %v2129
    %2133 = vrot.lane.b32.xlu0 %v2131, 2
    %v2134 = vpop.permute.xlu0 %2133
    %v2136 = vadd.f32 %v2126, %v2134
    %2138 = vset.pattern.permute.xlu0 6
    %2139 = vperm.xlu0 %2138, %v2124
    %v2140 = vpop.permute.xlu0 %2139
    %v2142 = vmul.f32 %v2140, %v52
    %2143 = vset.pattern.permute.xlu0 7
    %2144 = vperm.xlu0 %2143, %v2124
    %v2145 = vpop.permute.xlu0 %2144
    %v2147 = vmul.f32 %v2145, %v53
    %v2148 = vtanh.pop %v2136
    %2149 = vset.pattern.permute.xlu0 4
    %2150 = vperm.xlu0 %2149, %v1912
    %v2151 = vpop.permute.xlu0 %2150
    %v2153 = vmul.f32 %v2151, %v50
    %v2154 = vadd.f32 %v2153, %v51
    %2156 = vset.pattern.permute.xlu0 2
    %2157 = vperm.xlu0 %2156, %v2148
    %v2158 = vpop.permute.xlu0 %2157
    %v2160 = vmul.f32 %v2158, %v2142
    %v2161 = vadd.f32 %v2154, %v2160
    %2162 = vset.pattern.permute.xlu0 3
    %2163 = vperm.xlu0 %2162, %v2148
    %v2164 = vpop.permute.xlu0 %2163
    %v2166 = vmul.f32 %v2164, %v2147
    %v2167 = vadd.f32 %v2161, %v2166
    %v2168 = vxor.u32 %v2167, 2147483648
    %v2169 = vmul.f32 %v2168, 1.442695
    %v2170 = vpow.pop %v2169
    %v2171 = vadd.f32 %v2170, 1.0
    %v2172 = vrcp.pop %v2171
    %v2173 = vmul.f32 %v2171, %v2172
    %v2174 = vsub.f32 1.0, %v2173
    %v2175 = vmul.f32 %v2172, %v2174
    %v2176 = vadd.f32 %v2172, %v2175
    %vm2177 = vweird.f32 %v2171
    %vm2178 = vweird.f32 %v2172
    %vm2179 = vmor %vm2177, %vm2178
    %v2180 = vsel %vm2179, %v2172, %v2176
    %v2181 = vand.u32 2147483647, %v2171
    %vm2182 = vcmp.eq.f32.partialorder %v2181, 8.507059e+37
    %v2183 = vand.u32 %v2171, 2147483648
    %v2184 = vor.u32 1.1754944e-38, %v2183
    %v2185 = vsel %vm2182, %v2184, %v2180
    %v2186 = vmul.f32 1.0, %v2185
    %v2187 = vtanh.pop %v2167
    %v2188 = vmul.f32 %v2186, %v2136
    %2190 = vrot.lane.b32.xlu0 %v2187, 124
    %v2191 = vpop.permute.xlu0 %2190
    %v2193 = vmul.f32 %v2186, %v2191
    %2195 = vrot.lane.b32.xlu0 %v2193, 2
    %v2196 = vpop.permute.xlu0 %2195
    %v2198 = vadd.f32 %v2188, %v2196
    %2200 = vset.pattern.permute.xlu0 6
    %2201 = vperm.xlu0 %2200, %v2186
    %v2202 = vpop.permute.xlu0 %2201
    %v2204 = vmul.f32 %v2202, %v52
    %2205 = vset.pattern.permute.xlu0 7
    %2206 = vperm.xlu0 %2205, %v2186
    %v2207 = vpop.permute.xlu0 %2206
    %v2209 = vmul.f32 %v2207, %v53
    %v2210 = vtanh.pop %v2198
    %2211 = vset.pattern.permute.xlu0 5
    %2212 = vperm.xlu0 %2211, %v1912
    %v2213 = vpop.permute.xlu0 %2212
    %v2215 = vmul.f32 %v2213, %v50
    %v2216 = vadd.f32 %v2215, %v51
    %2218 = vset.pattern.permute.xlu0 2
    %2219 = vperm.xlu0 %2218, %v2210
    %v2220 = vpop.permute.xlu0 %2219
    %v2222 = vmul.f32 %v2220, %v2204
    %v2223 = vadd.f32 %v2216, %v2222
    %2224 = vset.pattern.permute.xlu0 3
    %2225 = vperm.xlu0 %2224, %v2210
    %v2226 = vpop.permute.xlu0 %2225
    %v2228 = vmul.f32 %v2226, %v2209
    %v2229 = vadd.f32 %v2223, %v2228
    %v2230 = vxor.u32 %v2229, 2147483648
    %v2231 = vmul.f32 %v2230, 1.442695
    %v2232 = vpow.pop %v2231
    %v2233 = vadd.f32 %v2232, 1.0
    %v2234 = vrcp.pop %v2233
    %v2235 = vmul.f32 %v2233, %v2234
    %v2236 = vsub.f32 1.0, %v2235
    %v2237 = vmul.f32 %v2234, %v2236
    %v2238 = vadd.f32 %v2234, %v2237
    %vm2239 = vweird.f32 %v2233
    %vm2240 = vweird.f32 %v2234
    %vm2241 = vmor %vm2239, %vm2240
    %v2242 = vsel %vm2241, %v2234, %v2238
    %v2243 = vand.u32 2147483647, %v2233
    %vm2244 = vcmp.eq.f32.partialorder %v2243, 8.507059e+37
    %v2245 = vand.u32 %v2233, 2147483648
    %v2246 = vor.u32 1.1754944e-38, %v2245
    %v2247 = vsel %vm2244, %v2246, %v2242
    %v2248 = vmul.f32 1.0, %v2247
    %v2249 = vtanh.pop %v2229
    %v2250 = vmul.f32 %v2248, %v2198
    %2252 = vrot.lane.b32.xlu0 %v2249, 124
    %v2253 = vpop.permute.xlu0 %2252
    %v2255 = vmul.f32 %v2248, %v2253
    %2257 = vrot.lane.b32.xlu0 %v2255, 2
    %v2258 = vpop.permute.xlu0 %2257
    %v2260 = vadd.f32 %v2250, %v2258
    %2262 = vset.pattern.permute.xlu0 6
    %2263 = vperm.xlu0 %2262, %v2248
    %v2264 = vpop.permute.xlu0 %2263
    %v2266 = vmul.f32 %v2264, %v52
    %2267 = vset.pattern.permute.xlu0 7
    %2268 = vperm.xlu0 %2267, %v2248
    %v2269 = vpop.permute.xlu0 %2268
    %v2271 = vmul.f32 %v2269, %v53
    %v2272 = vtanh.pop %v2260
    %2273 = vset.pattern.permute.xlu0 6
    %2274 = vperm.xlu0 %2273, %v1912
    %v2275 = vpop.permute.xlu0 %2274
    %v2277 = vmul.f32 %v2275, %v50
    %v2278 = vadd.f32 %v2277, %v51
    %2280 = vset.pattern.permute.xlu0 2
    %2281 = vperm.xlu0 %2280, %v2272
    %v2282 = vpop.permute.xlu0 %2281
    %v2284 = vmul.f32 %v2282, %v2266
    %v2285 = vadd.f32 %v2278, %v2284
    %2286 = vset.pattern.permute.xlu0 3
    %2287 = vperm.xlu0 %2286, %v2272
    %v2288 = vpop.permute.xlu0 %2287
    %v2290 = vmul.f32 %v2288, %v2271
    %v2291 = vadd.f32 %v2285, %v2290
    %v2292 = vxor.u32 %v2291, 2147483648
    %v2293 = vmul.f32 %v2292, 1.442695
    %v2294 = vpow.pop %v2293
    %v2295 = vadd.f32 %v2294, 1.0
    %v2296 = vrcp.pop %v2295
    %v2297 = vmul.f32 %v2295, %v2296
    %v2298 = vsub.f32 1.0, %v2297
    %v2299 = vmul.f32 %v2296, %v2298
    %v2300 = vadd.f32 %v2296, %v2299
    %vm2301 = vweird.f32 %v2295
    %vm2302 = vweird.f32 %v2296
    %vm2303 = vmor %vm2301, %vm2302
    %v2304 = vsel %vm2303, %v2296, %v2300
    %v2305 = vand.u32 2147483647, %v2295
    %vm2306 = vcmp.eq.f32.partialorder %v2305, 8.507059e+37
    %v2307 = vand.u32 %v2295, 2147483648
    %v2308 = vor.u32 1.1754944e-38, %v2307
    %v2309 = vsel %vm2306, %v2308, %v2304
    %v2310 = vmul.f32 1.0, %v2309
    %v2311 = vtanh.pop %v2291
    %v2312 = vmul.f32 %v2310, %v2260
    %2314 = vrot.lane.b32.xlu0 %v2311, 124
    %v2315 = vpop.permute.xlu0 %2314
    %v2317 = vmul.f32 %v2310, %v2315
    %2319 = vrot.lane.b32.xlu0 %v2317, 2
    %v2320 = vpop.permute.xlu0 %2319
    %v2322 = vadd.f32 %v2312, %v2320
    %2324 = vset.pattern.permute.xlu0 6
    %2325 = vperm.xlu0 %2324, %v2310
    %v2326 = vpop.permute.xlu0 %2325
    %v2328 = vmul.f32 %v2326, %v52
    %2329 = vset.pattern.permute.xlu0 7
    %2330 = vperm.xlu0 %2329, %v2310
    %v2331 = vpop.permute.xlu0 %2330
    %v2333 = vmul.f32 %v2331, %v53
    %v2334 = vtanh.pop %v2322
    %2335 = vset.pattern.permute.xlu0 7
    %2336 = vperm.xlu0 %2335, %v1912
    %v2337 = vpop.permute.xlu0 %2336
    %v2339 = vmul.f32 %v2337, %v50
    %v2340 = vadd.f32 %v2339, %v51
    %2342 = vset.pattern.permute.xlu0 2
    %2343 = vperm.xlu0 %2342, %v2334
    %v2344 = vpop.permute.xlu0 %2343
    %v2346 = vmul.f32 %v2344, %v2328
    %v2347 = vadd.f32 %v2340, %v2346
    %2348 = vset.pattern.permute.xlu0 3
    %2349 = vperm.xlu0 %2348, %v2334
    %v2350 = vpop.permute.xlu0 %2349
    %v2352 = vmul.f32 %v2350, %v2333
    %v2353 = vadd.f32 %v2347, %v2352
    %v2354 = vxor.u32 %v2353, 2147483648
    %v2355 = vmul.f32 %v2354, 1.442695
    %v2356 = vpow.pop %v2355
    %v2357 = vadd.f32 %v2356, 1.0
    %v2358 = vrcp.pop %v2357
    %v2359 = vmul.f32 %v2357, %v2358
    %v2360 = vsub.f32 1.0, %v2359
    %v2361 = vmul.f32 %v2358, %v2360
    %v2362 = vadd.f32 %v2358, %v2361
    %vm2363 = vweird.f32 %v2357
    %vm2364 = vweird.f32 %v2358
    %vm2365 = vmor %vm2363, %vm2364
    %v2366 = vsel %vm2365, %v2358, %v2362
    %v2367 = vand.u32 2147483647, %v2357
    %vm2368 = vcmp.eq.f32.partialorder %v2367, 8.507059e+37
    %v2369 = vand.u32 %v2357, 2147483648
    %v2370 = vor.u32 1.1754944e-38, %v2369
    %v2371 = vsel %vm2368, %v2370, %v2366
    %v2372 = vmul.f32 1.0, %v2371
    %v2373 = vtanh.pop %v2353
    %v2374 = vmul.f32 %v2372, %v2322
    %2376 = vrot.lane.b32.xlu0 %v2373, 124
    %v2377 = vpop.permute.xlu0 %2376
    %v2379 = vmul.f32 %v2372, %v2377
    %2381 = vrot.lane.b32.xlu0 %v2379, 2
    %v2382 = vpop.permute.xlu0 %2381
    %v2384 = vadd.f32 %v2374, %v2382
    %2386 = vset.pattern.permute.xlu0 6
    %2387 = vperm.xlu0 %2386, %v2372
    %v2388 = vpop.permute.xlu0 %2387
    %v2390 = vmul.f32 %v2388, %v52
    %2391 = vset.pattern.permute.xlu0 7
    %2392 = vperm.xlu0 %2391, %v2372
    %v2393 = vpop.permute.xlu0 %2392
    %v2395 = vmul.f32 %v2393, %v53
    %v2396 = vtanh.pop %v2384
    %2397 = vset.pattern.permute.xlu0 8
    %2398 = vperm.xlu0 %2397, %v1912
    %v2399 = vpop.permute.xlu0 %2398
    %v2401 = vmul.f32 %v2399, %v50
    %v2402 = vadd.f32 %v2401, %v51
    %2404 = vset.pattern.permute.xlu0 2
    %2405 = vperm.xlu0 %2404, %v2396
    %v2406 = vpop.permute.xlu0 %2405
    %v2408 = vmul.f32 %v2406, %v2390
    %v2409 = vadd.f32 %v2402, %v2408
    %2410 = vset.pattern.permute.xlu0 3
    %2411 = vperm.xlu0 %2410, %v2396
    %v2412 = vpop.permute.xlu0 %2411
    %v2414 = vmul.f32 %v2412, %v2395
    %v2415 = vadd.f32 %v2409, %v2414
    %v2416 = vxor.u32 %v2415, 2147483648
    %v2417 = vmul.f32 %v2416, 1.442695
    %v2418 = vpow.pop %v2417
    %v2419 = vadd.f32 %v2418, 1.0
    %v2420 = vrcp.pop %v2419
    %v2421 = vmul.f32 %v2419, %v2420
    %v2422 = vsub.f32 1.0, %v2421
    %v2423 = vmul.f32 %v2420, %v2422
    %v2424 = vadd.f32 %v2420, %v2423
    %vm2425 = vweird.f32 %v2419
    %vm2426 = vweird.f32 %v2420
    %vm2427 = vmor %vm2425, %vm2426
    %v2428 = vsel %vm2427, %v2420, %v2424
    %v2429 = vand.u32 2147483647, %v2419
    %vm2430 = vcmp.eq.f32.partialorder %v2429, 8.507059e+37
    %v2431 = vand.u32 %v2419, 2147483648
    %v2432 = vor.u32 1.1754944e-38, %v2431
    %v2433 = vsel %vm2430, %v2432, %v2428
    %v2434 = vmul.f32 1.0, %v2433
    %v2435 = vtanh.pop %v2415
    %v2436 = vmul.f32 %v2434, %v2384
    %2438 = vrot.lane.b32.xlu0 %v2435, 124
    %v2439 = vpop.permute.xlu0 %2438
    %v2441 = vmul.f32 %v2434, %v2439
    %2443 = vrot.lane.b32.xlu0 %v2441, 2
    %v2444 = vpop.permute.xlu0 %2443
    %v2446 = vadd.f32 %v2436, %v2444
    %2448 = vset.pattern.permute.xlu0 6
    %2449 = vperm.xlu0 %2448, %v2434
    %v2450 = vpop.permute.xlu0 %2449
    %v2452 = vmul.f32 %v2450, %v52
    %2453 = vset.pattern.permute.xlu0 7
    %2454 = vperm.xlu0 %2453, %v2434
    %v2455 = vpop.permute.xlu0 %2454
    %v2457 = vmul.f32 %v2455, %v53
    %v2458 = vtanh.pop %v2446
    %2459 = vset.pattern.permute.xlu0 9
    %2460 = vperm.xlu0 %2459, %v1912
    %v2461 = vpop.permute.xlu0 %2460
    %v2463 = vmul.f32 %v2461, %v50
    %v2464 = vadd.f32 %v2463, %v51
    %2466 = vset.pattern.permute.xlu0 2
    %2467 = vperm.xlu0 %2466, %v2458
    %v2468 = vpop.permute.xlu0 %2467
    %v2470 = vmul.f32 %v2468, %v2452
    %v2471 = vadd.f32 %v2464, %v2470
    %2472 = vset.pattern.permute.xlu0 3
    %2473 = vperm.xlu0 %2472, %v2458
    %v2474 = vpop.permute.xlu0 %2473
    %v2476 = vmul.f32 %v2474, %v2457
    %v2477 = vadd.f32 %v2471, %v2476
    %v2478 = vxor.u32 %v2477, 2147483648
    %v2479 = vmul.f32 %v2478, 1.442695
    %v2480 = vpow.pop %v2479
    %v2481 = vadd.f32 %v2480, 1.0
    %v2482 = vrcp.pop %v2481
    %v2483 = vmul.f32 %v2481, %v2482
    %v2484 = vsub.f32 1.0, %v2483
    %v2485 = vmul.f32 %v2482, %v2484
    %v2486 = vadd.f32 %v2482, %v2485
    %vm2487 = vweird.f32 %v2481
    %vm2488 = vweird.f32 %v2482
    %vm2489 = vmor %vm2487, %vm2488
    %v2490 = vsel %vm2489, %v2482, %v2486
    %v2491 = vand.u32 2147483647, %v2481
    %vm2492 = vcmp.eq.f32.partialorder %v2491, 8.507059e+37
    %v2493 = vand.u32 %v2481, 2147483648
    %v2494 = vor.u32 1.1754944e-38, %v2493
    %v2495 = vsel %vm2492, %v2494, %v2490
    %v2496 = vmul.f32 1.0, %v2495
    %v2497 = vtanh.pop %v2477
    %v2498 = vmul.f32 %v2496, %v2446
    %2500 = vrot.lane.b32.xlu0 %v2497, 124
    %v2501 = vpop.permute.xlu0 %2500
    %v2503 = vmul.f32 %v2496, %v2501
    %2505 = vrot.lane.b32.xlu0 %v2503, 2
    %v2506 = vpop.permute.xlu0 %2505
    %v2508 = vadd.f32 %v2498, %v2506
    %v2509 = vtanh.pop %v2508
    %2511 = vrot.lane.b32.xlu0 %v2509, 4
    %v2512 = vpop.permute.xlu0 %2511
    %v2514 = vmul.f32 %v2496, %v2512
    %2516 = vrot.lane.b32.xlu0 %v54, 6
    %v2517 = vpop.permute.xlu0 %2516
    %v2519 = vmul.f32 %v2514, %v2517
    %2521 = vrot.lane.b32.xlu0 %v2519, 122
    %v2522 = vpop.permute.xlu0 %2521
    %v2524 = vadd.f32 %v56, %v2522
    %2526 = vrot.lane.b32.xlu0 %v55, 7
    %v2527 = vpop.permute.xlu0 %2526
    %v2529 = vmul.f32 %v2514, %v2527
    %2531 = vrot.lane.b32.xlu0 %v2529, 121
    %v2532 = vpop.permute.xlu0 %2531
    %v2534 = vadd.f32 %v2524, %v2532
    %vm2535 = vcmask 3072
    %2536 = vst.msk [vmem:[%s2] sm:$0xf] %vm2535, %v2534
    // Predicated region
    $region18: #{lstm_forward.1} parent=1 // pred_check
      _
    $region19: #{lstm_forward.1} parent=1 // pred_check_branch
      %2538 = sbr.rel (0) target = $region21
    $region20: #{lstm_forward.1} parent=1 // pred_region
      _
    $region21: #{lstm_forward.1} parent=1 // pred_fallthru
      _
    // Predicated region
    $region22: #{lstm_forward.1} parent=1 // pred_check
      _
    $region23: #{lstm_forward.1} parent=1 // pred_check_branch
      %2540 = sbr.rel (0) target = $region25
    $region24: #{lstm_forward.1} parent=1 // pred_region
      _
    $region25: #{lstm_forward.1} parent=1 // pred_fallthru
      _
    %2541 = vsyncpa [#allocation3], 1
    %2542 = vsyncpa [#allocation5], 1

</llo_original>
